<compile_context>
chip_gen: v5e
topology: v5e:2x2
jax: 0.10.0
libtpu: 0.0.40
codegen_flags: <defaults>
</compile_context>

<pallas_src>
from functools import partial

import jax
import jax.numpy as jnp
from jax.experimental import pallas as pl
from jax.experimental.pallas import tpu as pltpu

# ---- model hyperparameters (small, consistent with the module) ----
N_EMBD = 128          # n_embd (original: 384)
N_HEAD = 4            # n_head
HEAD_SIZE = N_EMBD // N_HEAD
HIDDEN = 4 * N_EMBD   # FFN hidden
B = 2                 # batch
T = 16                # sequence length (<= MAX_CONTEXT_LEN)
LN_EPS = 1e-5
NEG_INF = -1e30       # finite "minus infinity": plain selects, no inf-inf hazards

# rows of the packed (8, C) vector bundle
_G1, _BE1, _G2, _BE2, _BP, _BF2 = 0, 1, 2, 3, 4, 5


def _layernorm(h, gamma, beta):
    mu = jnp.mean(h, axis=-1, keepdims=True)
    var = jnp.mean((h - mu) ** 2, axis=-1, keepdims=True)
    return (h - mu) * jax.lax.rsqrt(var + LN_EPS) * gamma + beta


def block_kernel(batch, seq, x_ref, wqkv_ref, wp_ref, w1_ref, w2_ref,
                 vec_ref, bf1_ref, o_ref):
    x = x_ref[...]                                  # (B*T, C) f32
    bt, c = x.shape
    hs = c // N_HEAD

    g1 = vec_ref[_G1]
    be1 = vec_ref[_BE1]
    g2 = vec_ref[_G2]
    be2 = vec_ref[_BE2]
    bp = vec_ref[_BP]
    bf2 = vec_ref[_BF2]

    # ---- LN1 ----
    h1 = _layernorm(x, g1, be1)

    # ---- fused QKV: one (B*T,C) x (C,3C) bf16 matmul, f32 accumulation ----
    # (1/sqrt(hs) score scale is already folded into the Wq slice of wqkv.)
    qkv = jnp.dot(h1.astype(jnp.bfloat16), wqkv_ref[...],
                  preferred_element_type=jnp.float32)          # (B*T, 3C)
    q = qkv[:, :c]                 # lane-aligned static slices (multiples of 128)
    k = qkv[:, c:2 * c]
    v = qkv[:, 2 * c:]

    # causal mask, shared by all sequences / heads
    row = jax.lax.broadcasted_iota(jnp.int32, (seq, seq), 0)
    col = jax.lax.broadcasted_iota(jnp.int32, (seq, seq), 1)
    causal = (col <= row)[None, :, :]                          # (1, T, T)

    # ---- head-batched causal self-attention, per sequence (static unroll) ----
    cat_rows = []
    for b in range(batch):
        r0 = b * seq
        qb = jnp.transpose(
            q[r0:r0 + seq].reshape(seq, N_HEAD, hs).astype(jnp.bfloat16), (1, 0, 2))
        kb = jnp.transpose(
            k[r0:r0 + seq].reshape(seq, N_HEAD, hs).astype(jnp.bfloat16), (1, 0, 2))
        vb = jnp.transpose(
            v[r0:r0 + seq].reshape(seq, N_HEAD, hs).astype(jnp.bfloat16), (1, 0, 2))

        s = jnp.einsum('hqd,hkd->hqk', qb, kb,
                       preferred_element_type=jnp.float32)     # (H, T, T)
        s = jnp.where(causal, s, NEG_INF)
        s = s - jnp.max(s, axis=-1, keepdims=True)
        p = jnp.exp(s)
        p = p * pl.reciprocal(jnp.sum(p, axis=-1, keepdims=True), approx=True)
        # TODO(synk): attention dropout (p=0.2) is eval-mode identity here.

        ab = jnp.einsum('hqk,hkd->hqd', p.astype(jnp.bfloat16), vb,
                        preferred_element_type=jnp.float32)    # (H, T, hs)
        cat_rows.append(jnp.transpose(ab, (1, 0, 2)).reshape(seq, c))

    cat = jnp.concatenate(cat_rows, axis=0)                    # (B*T, C)

    sa = jnp.dot(cat.astype(jnp.bfloat16), wp_ref[...],
                 preferred_element_type=jnp.float32) + bp
    x2 = x + sa                                                # first residual

    # ---- LN2 + FeedForward ----
    h2 = _layernorm(x2, g2, be2)
    ff = jnp.dot(h2.astype(jnp.bfloat16), w1_ref[...],
                 preferred_element_type=jnp.float32) + bf1_ref[0]
    ff = jnp.maximum(ff, 0.0)
    ff = jnp.dot(ff.astype(jnp.bfloat16), w2_ref[...],
                 preferred_element_type=jnp.float32) + bf2

    o_ref[...] = x2 + ff                                       # second residual


def pack_params(params):
    """One-time parameter packing (hoisted out of the per-call hot path).

    Fuses Wq|Wk|Wv into a single (C, 3C) weight with the 1/sqrt(head_size) score
    scale folded into Wq, casts matmul weights to bf16 (MXU-native), and bundles
    the six small C-sized vectors into one (8, C) f32 array.
    """
    c = params["wq"].shape[0]
    wqkv = jnp.concatenate(
        [params["wq"] * (HEAD_SIZE ** -0.5), params["wk"], params["wv"]],
        axis=1).astype(jnp.bfloat16)
    vecs = jnp.zeros((8, c), jnp.float32)
    vecs = vecs.at[_G1].set(params["g1"][0]).at[_BE1].set(params["be1"][0])
    vecs = vecs.at[_G2].set(params["g2"][0]).at[_BE2].set(params["be2"][0])
    vecs = vecs.at[_BP].set(params["bp"][0]).at[_BF2].set(params["bf2"][0])
    return {
        "wqkv": wqkv,
        "wp": params["wp"].astype(jnp.bfloat16),
        "w1": params["w1"].astype(jnp.bfloat16),
        "w2": params["w2"].astype(jnp.bfloat16),
        "vecs": vecs,
        "bf1": params["bf1"],
    }


@jax.jit
def block_forward(x, packed):
    """x: (B, T, C) float32, packed: output of pack_params -> (B, T, C) float32."""
    b, t, c = x.shape
    bt = b * t
    x2d = x.reshape(bt, c)          # free reshape (leading-dim merge)

    # Single grid step: everything (weights ~0.2 MB bf16 + activations) fits VMEM
    # with huge margin on v5e/v6e/v7x; no tiling / vmem_limit tuning needed.
    full2d = lambda shape: pl.BlockSpec(shape, lambda i: (0, 0))
    in_specs = [
        full2d((bt, c)),            # x (f32)
        full2d((c, 3 * c)),         # Wqkv (bf16, scale folded)
        full2d((c, c)),             # Wproj (bf16)
        full2d((c, HIDDEN)),        # W1 (bf16)
        full2d((HIDDEN, c)),        # W2 (bf16)
        full2d((8, c)),             # packed LN/bias vectors (f32)
        full2d((1, HIDDEN)),        # b1 (f32)
    ]
    out_spec = full2d((bt, c))

    weight_bytes = 2 * (c * 3 * c + c * c + c * HIDDEN + HIDDEN * c) \
        + 4 * (8 * c + HIDDEN)
    cost = pl.CostEstimate(
        flops=2 * bt * c * (3 * c + c + 2 * HIDDEN)
        + 4 * b * N_HEAD * t * t * (c // N_HEAD),
        transcendentals=b * N_HEAD * t * t,
        bytes_accessed=weight_bytes + 2 * bt * c * 4,
    )

    out2d = pl.pallas_call(
        partial(block_kernel, b, t),
        out_shape=jax.ShapeDtypeStruct((bt, c), jnp.float32),
        grid_spec=pltpu.PrefetchScalarGridSpec(
            num_scalar_prefetch=0,
            grid=(1,),
            in_specs=in_specs,
            out_specs=out_spec,
        ),
        compiler_params=pltpu.CompilerParams(
            dimension_semantics=("arbitrary",)),
        cost_estimate=cost,
    )(x2d, packed["wqkv"], packed["wp"], packed["w1"], packed["w2"],
      packed["vecs"], packed["bf1"])

    return out2d.reshape(b, t, c)


def block_reference(x, p):
    """Pure-JAX f32 reference (eval-mode dropout), mirrors the PyTorch module."""
    h1 = _layernorm(x, p["g1"][0], p["be1"][0])
    q = h1 @ p["wq"]; k = h1 @ p["wk"]; v = h1 @ p["wv"]
    outs = []
    t = x.shape[1]
    mask = jnp.tril(jnp.ones((t, t), dtype=bool))
    for h in range(N_HEAD):
        sl = slice(h * HEAD_SIZE, (h + 1) * HEAD_SIZE)
        s = q[..., sl] @ jnp.swapaxes(k[..., sl], -1, -2) * (HEAD_SIZE ** -0.5)
        s = jnp.where(mask, s, -jnp.inf)
        a = jax.nn.softmax(s, axis=-1)
        outs.append(a @ v[..., sl])
    cat = jnp.concatenate(outs, axis=-1)
    x2 = x + cat @ p["wp"] + p["bp"][0]
    h2 = _layernorm(x2, p["g2"][0], p["be2"][0])
    ff = jax.nn.relu(h2 @ p["w1"] + p["bf1"][0]) @ p["w2"] + p["bf2"][0]
    return x2 + ff


def init_params(key):
    ks = jax.random.split(key, 8)
    s = 0.02
    return {
        "wq": s * jax.random.normal(ks[0], (N_EMBD, N_EMBD), jnp.float32),
        "wk": s * jax.random.normal(ks[1], (N_EMBD, N_EMBD), jnp.float32),
        "wv": s * jax.random.normal(ks[2], (N_EMBD, N_EMBD), jnp.float32),
        "wp": s * jax.random.normal(ks[3], (N_EMBD, N_EMBD), jnp.float32),
        "bp": jnp.zeros((1, N_EMBD), jnp.float32),
        "g1": jnp.ones((1, N_EMBD), jnp.float32),
        "be1": jnp.zeros((1, N_EMBD), jnp.float32),
        "g2": jnp.ones((1, N_EMBD), jnp.float32),
        "be2": jnp.zeros((1, N_EMBD), jnp.float32),
        "w1": s * jax.random.normal(ks[4], (N_EMBD, HIDDEN), jnp.float32),
        "bf1": 0.01 * jnp.ones((1, HIDDEN), jnp.float32),
        "w2": s * jax.random.normal(ks[5], (HIDDEN, N_EMBD), jnp.float32),
        "bf2": 0.01 * jnp.ones((1, N_EMBD), jnp.float32),
    }


if __name__ == "__main__":
    key = jax.random.PRNGKey(0)
    kx, kp = jax.random.split(key)
    x = jax.random.normal(kx, (B, T, N_EMBD), jnp.float32)
    params = init_params(kp)
    packed = pack_params(params)        # one-time packing, off the hot path

    out = block_forward(x, packed)
    out = jax.block_until_ready(out)

    ref = block_reference(x, params)
    assert out.shape == (B, T, N_EMBD)
    # bf16 weights + approx reciprocal => slightly looser tolerance than pure-f32.
    assert jnp.allclose(out, ref, atol=2e-2, rtol=2e-2), (
        "mismatch vs reference, max abs diff = %e" % float(jnp.max(jnp.abs(out - ref))))
    print("KERNEL_OK")
</pallas_src>

<mosaic_0001>
module attributes {stable_mosaic.version = 11 : i64} {
  func.func @block_kernel(%arg0: i32, %arg1: memref<32x128xf32, #tpu.memory_space<vmem>>, %arg2: memref<128x384xbf16, #tpu.memory_space<vmem>>, %arg3: memref<128x128xbf16, #tpu.memory_space<vmem>>, %arg4: memref<128x512xbf16, #tpu.memory_space<vmem>>, %arg5: memref<512x128xbf16, #tpu.memory_space<vmem>>, %arg6: memref<8x128xf32, #tpu.memory_space<vmem>>, %arg7: memref<1x512xf32, #tpu.memory_space<vmem>>, %arg8: memref<32x128xf32, #tpu.memory_space<vmem>>) attributes {dimension_semantics = [#tpu.dimension_semantics<arbitrary>], iteration_bounds = array<i64: 1>, scalar_prefetch = 0 : i64, scratch_operands = 0 : i64, tpu.core_type = #tpu.core_type<tc>, window_params = [{pipeline_mode = #tpu.pipeline_mode<synchronous>, transform_indices = @transform_0, window_bounds = array<i64: 32, 128>}, {pipeline_mode = #tpu.pipeline_mode<synchronous>, transform_indices = @transform_1, window_bounds = array<i64: 128, 384>}, {pipeline_mode = #tpu.pipeline_mode<synchronous>, transform_indices = @transform_2, window_bounds = array<i64: 128, 128>}, {pipeline_mode = #tpu.pipeline_mode<synchronous>, transform_indices = @transform_3, window_bounds = array<i64: 128, 512>}, {pipeline_mode = #tpu.pipeline_mode<synchronous>, transform_indices = @transform_4, window_bounds = array<i64: 512, 128>}, {pipeline_mode = #tpu.pipeline_mode<synchronous>, transform_indices = @transform_5, window_bounds = array<i64: 8, 128>}, {pipeline_mode = #tpu.pipeline_mode<synchronous>, transform_indices = @transform_6, window_bounds = array<i64: 1, 512>}, {pipeline_mode = #tpu.pipeline_mode<synchronous>, transform_indices = @transform_7, window_bounds = array<i64: 32, 128>}]} {
    %c0 = arith.constant 0 : index
    %c0_0 = arith.constant 0 : index
    %0 = vector.load %arg1[%c0, %c0_0] : memref<32x128xf32, #tpu.memory_space<vmem>>, vector<32x128xf32>
    %c0_1 = arith.constant 0 : index
    %c0_2 = arith.constant 0 : index
    %1 = vector.load %arg6[%c0_1, %c0_2] : memref<8x128xf32, #tpu.memory_space<vmem>>, vector<1x128xf32>
    %2 = vector.shape_cast %1 : vector<1x128xf32> to vector<128xf32>
    %c1 = arith.constant 1 : index
    %c0_3 = arith.constant 0 : index
    %3 = vector.load %arg6[%c1, %c0_3] : memref<8x128xf32, #tpu.memory_space<vmem>>, vector<1x128xf32>
    %4 = vector.shape_cast %3 : vector<1x128xf32> to vector<128xf32>
    %c2 = arith.constant 2 : index
    %c0_4 = arith.constant 0 : index
    %5 = vector.load %arg6[%c2, %c0_4] : memref<8x128xf32, #tpu.memory_space<vmem>>, vector<1x128xf32>
    %6 = vector.shape_cast %5 : vector<1x128xf32> to vector<128xf32>
    %c3 = arith.constant 3 : index
    %c0_5 = arith.constant 0 : index
    %7 = vector.load %arg6[%c3, %c0_5] : memref<8x128xf32, #tpu.memory_space<vmem>>, vector<1x128xf32>
    %8 = vector.shape_cast %7 : vector<1x128xf32> to vector<128xf32>
    %c4 = arith.constant 4 : index
    %c0_6 = arith.constant 0 : index
    %9 = vector.load %arg6[%c4, %c0_6] : memref<8x128xf32, #tpu.memory_space<vmem>>, vector<1x128xf32>
    %10 = vector.shape_cast %9 : vector<1x128xf32> to vector<128xf32>
    %c5 = arith.constant 5 : index
    %c0_7 = arith.constant 0 : index
    %11 = vector.load %arg6[%c5, %c0_7] : memref<8x128xf32, #tpu.memory_space<vmem>>, vector<1x128xf32>
    %12 = vector.shape_cast %11 : vector<1x128xf32> to vector<128xf32>
    %cst = arith.constant dense<0.000000e+00> : vector<32xf32>
    %13 = vector.multi_reduction <add>, %0, %cst [1] : vector<32x128xf32> to vector<32xf32>
    %14 = vector.shape_cast %13 : vector<32xf32> to vector<32x1xf32>
    %cst_8 = arith.constant 1.280000e+02 : f32
    %15 = vector.broadcast %cst_8 : f32 to vector<32x1xf32>
    %16 = arith.divf %14, %15 : vector<32x1xf32>
    %17 = vector.broadcast %16 : vector<32x1xf32> to vector<32x128xf32>
    %18 = arith.subf %0, %17 : vector<32x128xf32>
    %19 = arith.mulf %18, %18 : vector<32x128xf32>
    %cst_9 = arith.constant dense<0.000000e+00> : vector<32xf32>
    %20 = vector.multi_reduction <add>, %19, %cst_9 [1] : vector<32x128xf32> to vector<32xf32>
    %21 = vector.shape_cast %20 : vector<32xf32> to vector<32x1xf32>
    %cst_10 = arith.constant 1.280000e+02 : f32
    %22 = vector.broadcast %cst_10 : f32 to vector<32x1xf32>
    %23 = arith.divf %21, %22 : vector<32x1xf32>
    %24 = vector.broadcast %16 : vector<32x1xf32> to vector<32x128xf32>
    %25 = arith.subf %0, %24 : vector<32x128xf32>
    %cst_11 = arith.constant 9.99999974E-6 : f32
    %26 = vector.broadcast %cst_11 : f32 to vector<32x1xf32>
    %27 = arith.addf %23, %26 : vector<32x1xf32>
    %28 = math.rsqrt %27 : vector<32x1xf32>
    %29 = vector.broadcast %28 : vector<32x1xf32> to vector<32x128xf32>
    %30 = arith.mulf %25, %29 : vector<32x128xf32>
    %31 = vector.shape_cast %2 : vector<128xf32> to vector<1x128xf32>
    %32 = vector.broadcast %31 : vector<1x128xf32> to vector<32x128xf32>
    %33 = arith.mulf %30, %32 : vector<32x128xf32>
    %34 = vector.shape_cast %4 : vector<128xf32> to vector<1x128xf32>
    %35 = vector.broadcast %34 : vector<1x128xf32> to vector<32x128xf32>
    %36 = arith.addf %33, %35 : vector<32x128xf32>
    %37 = arith.truncf %36 : vector<32x128xf32> to vector<32x128xbf16>
    %c0_12 = arith.constant 0 : index
    %c0_13 = arith.constant 0 : index
    %38 = vector.load %arg2[%c0_12, %c0_13] : memref<128x384xbf16, #tpu.memory_space<vmem>>, vector<128x384xbf16>
    %cst_14 = arith.constant dense<0.000000e+00> : vector<32x384xf32>
    %39 = tpu.matmul %37, %38, %cst_14 {dimension_numbers = #tpu.dot_dimension_numbers<[1], [0], [0], [1], [0, 0, 1, 1], [], []>} : vector<32x128xbf16>, vector<128x384xbf16>, vector<32x384xf32> -> vector<32x384xf32>
    %40 = vector.extract_strided_slice %39 {offsets = [0, 0], sizes = [32, 128], strides = [1, 1]} : vector<32x384xf32> to vector<32x128xf32>
    %41 = vector.extract_strided_slice %39 {offsets = [0, 128], sizes = [32, 128], strides = [1, 1]} : vector<32x384xf32> to vector<32x128xf32>
    %42 = vector.extract_strided_slice %39 {offsets = [0, 256], sizes = [32, 128], strides = [1, 1]} : vector<32x384xf32> to vector<32x128xf32>
    %43 = tpu.iota {dimensions = array<i32: 0>} : vector<16x16xi32>
    %44 = tpu.iota {dimensions = array<i32: 1>} : vector<16x16xi32>
    %45 = arith.cmpi sle, %44, %43 : vector<16x16xi32>
    %46 = vector.shape_cast %45 : vector<16x16xi1> to vector<1x16x16xi1>
    %47 = vector.extract_strided_slice %40 {offsets = [0, 0], sizes = [16, 128], strides = [1, 1]} : vector<32x128xf32> to vector<16x128xf32>
    %48 = vector.shape_cast %47 : vector<16x128xf32> to vector<16x4x32xf32>
    %49 = arith.truncf %48 : vector<16x4x32xf32> to vector<16x4x32xbf16>
    %50 = tpu.transpose %49, [1, 0, 2] : vector<16x4x32xbf16> -> vector<4x16x32xbf16>
    %51 = vector.extract_strided_slice %41 {offsets = [0, 0], sizes = [16, 128], strides = [1, 1]} : vector<32x128xf32> to vector<16x128xf32>
    %52 = vector.shape_cast %51 : vector<16x128xf32> to vector<16x4x32xf32>
    %53 = arith.truncf %52 : vector<16x4x32xf32> to vector<16x4x32xbf16>
    %54 = tpu.transpose %53, [1, 0, 2] : vector<16x4x32xbf16> -> vector<4x16x32xbf16>
    %55 = vector.extract_strided_slice %42 {offsets = [0, 0], sizes = [16, 128], strides = [1, 1]} : vector<32x128xf32> to vector<16x128xf32>
    %56 = vector.shape_cast %55 : vector<16x128xf32> to vector<16x4x32xf32>
    %57 = arith.truncf %56 : vector<16x4x32xf32> to vector<16x4x32xbf16>
    %58 = tpu.transpose %57, [1, 0, 2] : vector<16x4x32xbf16> -> vector<4x16x32xbf16>
    "tpu.trace_start"() <{level = 10 : i32, message = "hqd,hkd->hqk"}> : () -> ()
    %cst_15 = arith.constant dense<0.000000e+00> : vector<4x16x16xf32>
    %59 = tpu.matmul %50, %54, %cst_15 {dimension_numbers = #tpu.dot_dimension_numbers<[2], [2], [1], [1], [0, 0, 0, 1, 1, 1], [0], [0]>} : vector<4x16x32xbf16>, vector<4x16x32xbf16>, vector<4x16x16xf32> -> vector<4x16x16xf32>
    %cst_16 = arith.constant -1.000000e+30 : f32
    "tpu.trace_stop"() : () -> ()
    %60 = vector.shape_cast %46 : vector<1x16x16xi1> to vector<1x16x16xi1>
    %61 = vector.broadcast %60 : vector<1x16x16xi1> to vector<4x16x16xi1>
    %62 = vector.broadcast %cst_16 : f32 to vector<4x16x16xf32>
    %63 = arith.select %61, %59, %62 : vector<4x16x16xi1>, vector<4x16x16xf32>
    %cst_17 = arith.constant dense<0xFF800000> : vector<4x16xf32>
    %64 = vector.multi_reduction <maximumf>, %63, %cst_17 [2] : vector<4x16x16xf32> to vector<4x16xf32>
    %65 = vector.shape_cast %64 : vector<4x16xf32> to vector<4x16x1xf32>
    %66 = vector.broadcast %65 : vector<4x16x1xf32> to vector<4x16x16xf32>
    %67 = arith.subf %63, %66 : vector<4x16x16xf32>
    %68 = math.exp %67 : vector<4x16x16xf32>
    %cst_18 = arith.constant dense<0.000000e+00> : vector<4x16xf32>
    %69 = vector.multi_reduction <add>, %68, %cst_18 [2] : vector<4x16x16xf32> to vector<4x16xf32>
    %70 = vector.shape_cast %69 : vector<4x16xf32> to vector<4x16x1xf32>
    %71 = tpu.reciprocal %70 {approx = true} : vector<4x16x1xf32> -> vector<4x16x1xf32>
    %72 = vector.broadcast %71 : vector<4x16x1xf32> to vector<4x16x16xf32>
    %73 = arith.mulf %68, %72 : vector<4x16x16xf32>
    %74 = arith.truncf %73 : vector<4x16x16xf32> to vector<4x16x16xbf16>
    "tpu.trace_start"() <{level = 10 : i32, message = "hqk,hkd->hqd"}> : () -> ()
    %cst_19 = arith.constant dense<0.000000e+00> : vector<4x16x32xf32>
    %75 = tpu.matmul %74, %58, %cst_19 {dimension_numbers = #tpu.dot_dimension_numbers<[2], [1], [1], [2], [0, 0, 0, 1, 1, 2], [0], [0]>} : vector<4x16x16xbf16>, vector<4x16x32xbf16>, vector<4x16x32xf32> -> vector<4x16x32xf32>
    "tpu.trace_stop"() : () -> ()
    %76 = tpu.transpose %75, [1, 0, 2] : vector<4x16x32xf32> -> vector<16x4x32xf32>
    %77 = vector.shape_cast %76 : vector<16x4x32xf32> to vector<16x128xf32>
    %78 = vector.extract_strided_slice %40 {offsets = [16, 0], sizes = [16, 128], strides = [1, 1]} : vector<32x128xf32> to vector<16x128xf32>
    %79 = vector.shape_cast %78 : vector<16x128xf32> to vector<16x4x32xf32>
    %80 = arith.truncf %79 : vector<16x4x32xf32> to vector<16x4x32xbf16>
    %81 = tpu.transpose %80, [1, 0, 2] : vector<16x4x32xbf16> -> vector<4x16x32xbf16>
    %82 = vector.extract_strided_slice %41 {offsets = [16, 0], sizes = [16, 128], strides = [1, 1]} : vector<32x128xf32> to vector<16x128xf32>
    %83 = vector.shape_cast %82 : vector<16x128xf32> to vector<16x4x32xf32>
    %84 = arith.truncf %83 : vector<16x4x32xf32> to vector<16x4x32xbf16>
    %85 = tpu.transpose %84, [1, 0, 2] : vector<16x4x32xbf16> -> vector<4x16x32xbf16>
    %86 = vector.extract_strided_slice %42 {offsets = [16, 0], sizes = [16, 128], strides = [1, 1]} : vector<32x128xf32> to vector<16x128xf32>
    %87 = vector.shape_cast %86 : vector<16x128xf32> to vector<16x4x32xf32>
    %88 = arith.truncf %87 : vector<16x4x32xf32> to vector<16x4x32xbf16>
    %89 = tpu.transpose %88, [1, 0, 2] : vector<16x4x32xbf16> -> vector<4x16x32xbf16>
    "tpu.trace_start"() <{level = 10 : i32, message = "hqd,hkd->hqk"}> : () -> ()
    %cst_20 = arith.constant dense<0.000000e+00> : vector<4x16x16xf32>
    %90 = tpu.matmul %81, %85, %cst_20 {dimension_numbers = #tpu.dot_dimension_numbers<[2], [2], [1], [1], [0, 0, 0, 1, 1, 1], [0], [0]>} : vector<4x16x32xbf16>, vector<4x16x32xbf16>, vector<4x16x16xf32> -> vector<4x16x16xf32>
    %cst_21 = arith.constant -1.000000e+30 : f32
    "tpu.trace_stop"() : () -> ()
    %91 = vector.shape_cast %46 : vector<1x16x16xi1> to vector<1x16x16xi1>
    %92 = vector.broadcast %91 : vector<1x16x16xi1> to vector<4x16x16xi1>
    %93 = vector.broadcast %cst_21 : f32 to vector<4x16x16xf32>
    %94 = arith.select %92, %90, %93 : vector<4x16x16xi1>, vector<4x16x16xf32>
    %cst_22 = arith.constant dense<0xFF800000> : vector<4x16xf32>
    %95 = vector.multi_reduction <maximumf>, %94, %cst_22 [2] : vector<4x16x16xf32> to vector<4x16xf32>
    %96 = vector.shape_cast %95 : vector<4x16xf32> to vector<4x16x1xf32>
    %97 = vector.broadcast %96 : vector<4x16x1xf32> to vector<4x16x16xf32>
    %98 = arith.subf %94, %97 : vector<4x16x16xf32>
    %99 = math.exp %98 : vector<4x16x16xf32>
    %cst_23 = arith.constant dense<0.000000e+00> : vector<4x16xf32>
    %100 = vector.multi_reduction <add>, %99, %cst_23 [2] : vector<4x16x16xf32> to vector<4x16xf32>
    %101 = vector.shape_cast %100 : vector<4x16xf32> to vector<4x16x1xf32>
    %102 = tpu.reciprocal %101 {approx = true} : vector<4x16x1xf32> -> vector<4x16x1xf32>
    %103 = vector.broadcast %102 : vector<4x16x1xf32> to vector<4x16x16xf32>
    %104 = arith.mulf %99, %103 : vector<4x16x16xf32>
    %105 = arith.truncf %104 : vector<4x16x16xf32> to vector<4x16x16xbf16>
    "tpu.trace_start"() <{level = 10 : i32, message = "hqk,hkd->hqd"}> : () -> ()
    %cst_24 = arith.constant dense<0.000000e+00> : vector<4x16x32xf32>
    %106 = tpu.matmul %105, %89, %cst_24 {dimension_numbers = #tpu.dot_dimension_numbers<[2], [1], [1], [2], [0, 0, 0, 1, 1, 2], [0], [0]>} : vector<4x16x16xbf16>, vector<4x16x32xbf16>, vector<4x16x32xf32> -> vector<4x16x32xf32>
    "tpu.trace_stop"() : () -> ()
    %107 = tpu.transpose %106, [1, 0, 2] : vector<4x16x32xf32> -> vector<16x4x32xf32>
    %108 = vector.shape_cast %107 : vector<16x4x32xf32> to vector<16x128xf32>
    %109 = tpu.concatenate %77, %108 in 0 : vector<16x128xf32>, vector<16x128xf32> -> vector<32x128xf32>
    %110 = arith.truncf %109 : vector<32x128xf32> to vector<32x128xbf16>
    %c0_25 = arith.constant 0 : index
    %c0_26 = arith.constant 0 : index
    %111 = vector.load %arg3[%c0_25, %c0_26] : memref<128x128xbf16, #tpu.memory_space<vmem>>, vector<128x128xbf16>
    %cst_27 = arith.constant dense<0.000000e+00> : vector<32x128xf32>
    %112 = tpu.matmul %110, %111, %cst_27 {dimension_numbers = #tpu.dot_dimension_numbers<[1], [0], [0], [1], [0, 0, 1, 1], [], []>} : vector<32x128xbf16>, vector<128x128xbf16>, vector<32x128xf32> -> vector<32x128xf32>
    %113 = vector.shape_cast %10 : vector<128xf32> to vector<1x128xf32>
    %114 = vector.broadcast %113 : vector<1x128xf32> to vector<32x128xf32>
    %115 = arith.addf %112, %114 : vector<32x128xf32>
    %116 = arith.addf %0, %115 : vector<32x128xf32>
    %cst_28 = arith.constant dense<0.000000e+00> : vector<32xf32>
    %117 = vector.multi_reduction <add>, %116, %cst_28 [1] : vector<32x128xf32> to vector<32xf32>
    %118 = vector.shape_cast %117 : vector<32xf32> to vector<32x1xf32>
    %cst_29 = arith.constant 1.280000e+02 : f32
    %119 = vector.broadcast %cst_29 : f32 to vector<32x1xf32>
    %120 = arith.divf %118, %119 : vector<32x1xf32>
    %121 = vector.broadcast %120 : vector<32x1xf32> to vector<32x128xf32>
    %122 = arith.subf %116, %121 : vector<32x128xf32>
    %123 = arith.mulf %122, %122 : vector<32x128xf32>
    %cst_30 = arith.constant dense<0.000000e+00> : vector<32xf32>
    %124 = vector.multi_reduction <add>, %123, %cst_30 [1] : vector<32x128xf32> to vector<32xf32>
    %125 = vector.shape_cast %124 : vector<32xf32> to vector<32x1xf32>
    %cst_31 = arith.constant 1.280000e+02 : f32
    %126 = vector.broadcast %cst_31 : f32 to vector<32x1xf32>
    %127 = arith.divf %125, %126 : vector<32x1xf32>
    %128 = vector.broadcast %120 : vector<32x1xf32> to vector<32x128xf32>
    %129 = arith.subf %116, %128 : vector<32x128xf32>
    %cst_32 = arith.constant 9.99999974E-6 : f32
    %130 = vector.broadcast %cst_32 : f32 to vector<32x1xf32>
    %131 = arith.addf %127, %130 : vector<32x1xf32>
    %132 = math.rsqrt %131 : vector<32x1xf32>
    %133 = vector.broadcast %132 : vector<32x1xf32> to vector<32x128xf32>
    %134 = arith.mulf %129, %133 : vector<32x128xf32>
    %135 = vector.shape_cast %6 : vector<128xf32> to vector<1x128xf32>
    %136 = vector.broadcast %135 : vector<1x128xf32> to vector<32x128xf32>
    %137 = arith.mulf %134, %136 : vector<32x128xf32>
    %138 = vector.shape_cast %8 : vector<128xf32> to vector<1x128xf32>
    %139 = vector.broadcast %138 : vector<1x128xf32> to vector<32x128xf32>
    %140 = arith.addf %137, %139 : vector<32x128xf32>
    %141 = arith.truncf %140 : vector<32x128xf32> to vector<32x128xbf16>
    %c0_33 = arith.constant 0 : index
    %c0_34 = arith.constant 0 : index
    %142 = vector.load %arg4[%c0_33, %c0_34] : memref<128x512xbf16, #tpu.memory_space<vmem>>, vector<128x512xbf16>
    %cst_35 = arith.constant dense<0.000000e+00> : vector<32x512xf32>
    %143 = tpu.matmul %141, %142, %cst_35 {dimension_numbers = #tpu.dot_dimension_numbers<[1], [0], [0], [1], [0, 0, 1, 1], [], []>} : vector<32x128xbf16>, vector<128x512xbf16>, vector<32x512xf32> -> vector<32x512xf32>
    %c0_36 = arith.constant 0 : index
    %c0_37 = arith.constant 0 : index
    %144 = vector.load %arg7[%c0_36, %c0_37] : memref<1x512xf32, #tpu.memory_space<vmem>>, vector<1x512xf32>
    %145 = vector.shape_cast %144 : vector<1x512xf32> to vector<512xf32>
    %146 = vector.shape_cast %145 : vector<512xf32> to vector<1x512xf32>
    %147 = vector.broadcast %146 : vector<1x512xf32> to vector<32x512xf32>
    %148 = arith.addf %143, %147 : vector<32x512xf32>
    %cst_38 = arith.constant 0.000000e+00 : f32
    %149 = vector.broadcast %cst_38 : f32 to vector<32x512xf32>
    %150 = arith.maximumf %148, %149 : vector<32x512xf32>
    %151 = arith.truncf %150 : vector<32x512xf32> to vector<32x512xbf16>
    %c0_39 = arith.constant 0 : index
    %c0_40 = arith.constant 0 : index
    %152 = vector.load %arg5[%c0_39, %c0_40] : memref<512x128xbf16, #tpu.memory_space<vmem>>, vector<512x128xbf16>
    %cst_41 = arith.constant dense<0.000000e+00> : vector<32x128xf32>
    %153 = tpu.matmul %151, %152, %cst_41 {dimension_numbers = #tpu.dot_dimension_numbers<[1], [0], [0], [1], [0, 0, 1, 1], [], []>} : vector<32x512xbf16>, vector<512x128xbf16>, vector<32x128xf32> -> vector<32x128xf32>
    %154 = vector.shape_cast %12 : vector<128xf32> to vector<1x128xf32>
    %155 = vector.broadcast %154 : vector<1x128xf32> to vector<32x128xf32>
    %156 = arith.addf %153, %155 : vector<32x128xf32>
    %157 = arith.addf %116, %156 : vector<32x128xf32>
    %c0_42 = arith.constant 0 : index
    %c0_43 = arith.constant 0 : index
    %158 = vector.load %arg8[%c0_42, %c0_43] : memref<32x128xf32, #tpu.memory_space<vmem>>, vector<32x128xf32>
    tpu.vector_store %arg8[%c0_42, %c0_43], %157 {strides = array<i32>} : memref<32x128xf32, #tpu.memory_space<vmem>>, vector<32x128xf32>,
    return
  }
  func.func @transform_0(%arg0: i32) -> (i32, i32) {
    %c0_i32 = arith.constant 0 : i32
    %c0_i32_0 = arith.constant 0 : i32
    %c0_i32_1 = arith.constant 0 : i32
    return %c0_i32, %c0_i32_0 : i32, i32
  }
  func.func @transform_1(%arg0: i32) -> (i32, i32) {
    %c0_i32 = arith.constant 0 : i32
    %c0_i32_0 = arith.constant 0 : i32
    %c0_i32_1 = arith.constant 0 : i32
    return %c0_i32, %c0_i32_0 : i32, i32
  }
  func.func @transform_2(%arg0: i32) -> (i32, i32) {
    %c0_i32 = arith.constant 0 : i32
    %c0_i32_0 = arith.constant 0 : i32
    %c0_i32_1 = arith.constant 0 : i32
    return %c0_i32, %c0_i32_0 : i32, i32
  }
  func.func @transform_3(%arg0: i32) -> (i32, i32) {
    %c0_i32 = arith.constant 0 : i32
    %c0_i32_0 = arith.constant 0 : i32
    %c0_i32_1 = arith.constant 0 : i32
    return %c0_i32, %c0_i32_0 : i32, i32
  }
  func.func @transform_4(%arg0: i32) -> (i32, i32) {
    %c0_i32 = arith.constant 0 : i32
    %c0_i32_0 = arith.constant 0 : i32
    %c0_i32_1 = arith.constant 0 : i32
    return %c0_i32, %c0_i32_0 : i32, i32
  }
  func.func @transform_5(%arg0: i32) -> (i32, i32) {
    %c0_i32 = arith.constant 0 : i32
    %c0_i32_0 = arith.constant 0 : i32
    %c0_i32_1 = arith.constant 0 : i32
    return %c0_i32, %c0_i32_0 : i32, i32
  }
  func.func @transform_6(%arg0: i32) -> (i32, i32) {
    %c0_i32 = arith.constant 0 : i32
    %c0_i32_0 = arith.constant 0 : i32
    %c0_i32_1 = arith.constant 0 : i32
    return %c0_i32, %c0_i32_0 : i32, i32
  }
  func.func @transform_7(%arg0: i32) -> (i32, i32) {
    %c0_i32 = arith.constant 0 : i32
    %c0_i32_0 = arith.constant 0 : i32
    %c0_i32_1 = arith.constant 0 : i32
    return %c0_i32, %c0_i32_0 : i32, i32
  }
}

</mosaic_0001>

<llo_original>
// kernel: block_forward.1
$region0: #{block_forward.1}
  #allocation0 [shape = 'u32[]', space=smem, size = 0x4, offset = 0x4, fixed_abs, tag = 'smem constant byte address 0x4 - core index']
  #allocation1 [shape = 'u32[72,128]{1,0:T(1,128)}', space=vmem, size = 0x9000, scoped, tag = 'internal scratch']
  %s0 = inlined_call_operand.hbm [shape: f32[32,128], index: 0, kind: input, shape index: {}]
  %s1 = inlined_call_operand.hbm [shape: bf16[128,384], index: 1, kind: input, shape index: {}]
  %s2 = inlined_call_operand.hbm [shape: bf16[128,128], index: 2, kind: input, shape index: {}]
  %s3 = inlined_call_operand.hbm [shape: bf16[128,512], index: 3, kind: input, shape index: {}]
  %s4 = inlined_call_operand.hbm [shape: bf16[512,128], index: 4, kind: input, shape index: {}]
  %s5 = inlined_call_operand.hbm [shape: f32[8,128], index: 5, kind: input, shape index: {}]
  %s6 = inlined_call_operand.hbm [shape: f32[1,512], index: 6, kind: input, shape index: {}]
  %s7 = inlined_call_operand.hbm [shape: f32[32,128], index: 7, kind: output, shape index: {}]
  %s8 = sld [smem:[#allocation0]]
  $region66: #{block_forward.1} parent=0
    _
  %s10 = ssub.s32 1, %s8
  %s11 = scalar_select 0, %s10, %s8
  $region1: #{block_forward.1} parent=0
    #allocation2 [shape = 'u8[16384]{0}', space=vmem, size = 0x4000, scoped, tag = 'input window, operand 0, single buffered']
    #allocation3 [shape = 's32[1]{0}', space=sflag, size = 0x4, scoped, tag = 'scoped memory for block_forward.1']
    #allocation4 [shape = 's32[1]{0}', space=sflag, size = 0x4, scoped, tag = 'scoped memory for block_forward.1']
    #allocation5 [shape = 'u8[98304]{0}', space=vmem, size = 0x18000, scoped, tag = 'input window, operand 1, single buffered']
    #allocation6 [shape = 's32[1]{0}', space=sflag, size = 0x4, scoped, tag = 'scoped memory for block_forward.1']
    #allocation7 [shape = 'u8[32768]{0}', space=vmem, size = 0x8000, scoped, tag = 'input window, operand 2, single buffered']
    #allocation8 [shape = 'u8[131072]{0}', space=vmem, size = 0x20000, scoped, tag = 'input window, operand 3, single buffered']
    #allocation9 [shape = 's32[1]{0}', space=sflag, size = 0x4, scoped, tag = 'scoped memory for block_forward.1']
    #allocation10 [shape = 'u8[131072]{0}', space=vmem, size = 0x20000, scoped, tag = 'input window, operand 4, single buffered']
    #allocation11 [shape = 'u8[4096]{0}', space=vmem, size = 0x1000, scoped, tag = 'input window, operand 5, single buffered']
    #allocation12 [shape = 's32[1]{0}', space=sflag, size = 0x4, scoped, tag = 'scoped memory for block_forward.1']
    #allocation13 [shape = 'u8[2048]{0}', space=vmem, size = 0x800, scoped, tag = 'input window, operand 6, single buffered']
    #allocation14 [shape = 'u8[16384]{0}', space=vmem, size = 0x4000, scoped, tag = 'output window, operand 0, single buffered']
    %12 = vsyncpa [#allocation3], 0
    %13 = vsyncpa [#allocation6], 0
    %14 = vsyncpa [#allocation9], 0
    %15 = vsyncpa [#allocation12], 0
    %16 = vsyncpa [#allocation4], 0
    // Predicated region
    $region2: #{block_forward.1} parent=1 // pred_check
      _
    $region3: #{block_forward.1} parent=1 // pred_check_branch
      %18 = sbr.rel (0) target = $region5
    $region4: #{block_forward.1} parent=1 // pred_region
      %20 = vsyncadd [#allocation3], 0
      %s21 = sshll.u32 %s0, 4
      %s22 = int_to_ptr.hbm [resolvable:$true] %s21
      %s23 = sshll.u32 [#allocation2], 4
      %s24 = int_to_ptr.vmem [resolvable:$true] %s23
      %29 = dma.hbm_to_vmem [thread:$0]  %s22, 512, %s24, [#allocation3], 128, 128, 8
    $region5: #{block_forward.1} parent=1 // pred_fallthru
      _
    // Predicated region
    $region6: #{block_forward.1} parent=1 // pred_check
      _
    $region7: #{block_forward.1} parent=1 // pred_check_branch
      %31 = sbr.rel (0) target = $region9
    $region8: #{block_forward.1} parent=1 // pred_region
      %33 = vsyncadd [#allocation6], 0
      %s34 = sshll.u32 %s1, 4
      %s35 = int_to_ptr.hbm [resolvable:$true] %s34
      %s36 = sshll.u32 [#allocation5], 4
      %s37 = int_to_ptr.vmem [resolvable:$true] %s36
      %42 = dma.hbm_to_vmem [thread:$0]  %s35, 3072, %s37, [#allocation6], 192, 192, 12
    $region9: #{block_forward.1} parent=1 // pred_fallthru
      _
    // Predicated region
    $region10: #{block_forward.1} parent=1 // pred_check
      _
    $region11: #{block_forward.1} parent=1 // pred_check_branch
      %44 = sbr.rel (0) target = $region13
    $region12: #{block_forward.1} parent=1 // pred_region
      %46 = vsyncadd [#allocation6], 0
      %s47 = sshll.u32 %s2, 4
      %s48 = int_to_ptr.hbm [resolvable:$true] %s47
      %s49 = sshll.u32 [#allocation7], 4
      %s50 = int_to_ptr.vmem [resolvable:$true] %s49
      %55 = dma.hbm_to_vmem [thread:$0]  %s48, 1024, %s50, [#allocation6], 64, 64, 4
    $region13: #{block_forward.1} parent=1 // pred_fallthru
      _
    // Predicated region
    $region14: #{block_forward.1} parent=1 // pred_check
      _
    $region15: #{block_forward.1} parent=1 // pred_check_branch
      %57 = sbr.rel (0) target = $region17
    $region16: #{block_forward.1} parent=1 // pred_region
      %59 = vsyncadd [#allocation9], 0
      %s60 = sshll.u32 %s3, 4
      %s61 = int_to_ptr.hbm [resolvable:$true] %s60
      %s62 = sshll.u32 [#allocation8], 4
      %s63 = int_to_ptr.vmem [resolvable:$true] %s62
      %68 = dma.hbm_to_vmem [thread:$0]  %s61, 4096, %s63, [#allocation9], 256, 256, 16
    $region17: #{block_forward.1} parent=1 // pred_fallthru
      _
    // Predicated region
    $region18: #{block_forward.1} parent=1 // pred_check
      _
    $region19: #{block_forward.1} parent=1 // pred_check_branch
      %70 = sbr.rel (0) target = $region21
    $region20: #{block_forward.1} parent=1 // pred_region
      %72 = vsyncadd [#allocation9], 0
      %s73 = sshll.u32 %s4, 4
      %s74 = int_to_ptr.hbm [resolvable:$true] %s73
      %s75 = sshll.u32 [#allocation10], 4
      %s76 = int_to_ptr.vmem [resolvable:$true] %s75
      %81 = dma.hbm_to_vmem [thread:$0]  %s74, 4096, %s76, [#allocation9], 64, 64, 4
    $region21: #{block_forward.1} parent=1 // pred_fallthru
      _
    // Predicated region
    $region22: #{block_forward.1} parent=1 // pred_check
      _
    $region23: #{block_forward.1} parent=1 // pred_check_branch
      %83 = sbr.rel (0) target = $region25
    $region24: #{block_forward.1} parent=1 // pred_region
      %85 = vsyncadd [#allocation12], 0
      %s87 = sshll.u32 %s5, 4
      %s88 = int_to_ptr.hbm [resolvable:$true] %s87
      %s89 = sshll.u32 [#allocation11], 4
      %s90 = int_to_ptr.vmem [resolvable:$true] %s89
      %92 = dma.hbm_to_vmem [thread:$0]  %s88, 128, %s90, [#allocation12]
    $region25: #{block_forward.1} parent=1 // pred_fallthru
      _
    // Predicated region
    $region26: #{block_forward.1} parent=1 // pred_check
      _
    $region27: #{block_forward.1} parent=1 // pred_check_branch
      %94 = sbr.rel (0) target = $region29
    $region28: #{block_forward.1} parent=1 // pred_region
      %96 = vsyncadd [#allocation12], 0
      %s98 = sshll.u32 %s6, 4
      %s99 = int_to_ptr.hbm [resolvable:$true] %s98
      %s100 = sshll.u32 [#allocation13], 4
      %s101 = int_to_ptr.vmem [resolvable:$true] %s100
      %103 = dma.hbm_to_vmem [thread:$0]  %s99, 64, %s101, [#allocation12]
    $region29: #{block_forward.1} parent=1 // pred_fallthru
      _
    // Predicated region
    $region30: #{block_forward.1} parent=1 // pred_check
      _
    $region31: #{block_forward.1} parent=1 // pred_check_branch
      %105 = sbr.rel (0) target = $region33
    $region32: #{block_forward.1} parent=1 // pred_region
      %107 = dma.done [#allocation3], 512
    $region33: #{block_forward.1} parent=1 // pred_fallthru
      _
    // Predicated region
    $region34: #{block_forward.1} parent=1 // pred_check
      _
    $region35: #{block_forward.1} parent=1 // pred_check_branch
      %109 = sbr.rel (0) target = $region37
    $region36: #{block_forward.1} parent=1 // pred_region
      %111 = dma.done [#allocation6], 3072
    $region37: #{block_forward.1} parent=1 // pred_fallthru
      _
    // Predicated region
    $region38: #{block_forward.1} parent=1 // pred_check
      _
    $region39: #{block_forward.1} parent=1 // pred_check_branch
      %113 = sbr.rel (0) target = $region41
    $region40: #{block_forward.1} parent=1 // pred_region
      %115 = dma.done [#allocation6], 1024
    $region41: #{block_forward.1} parent=1 // pred_fallthru
      _
    // Predicated region
    $region42: #{block_forward.1} parent=1 // pred_check
      _
    $region43: #{block_forward.1} parent=1 // pred_check_branch
      %117 = sbr.rel (0) target = $region45
    $region44: #{block_forward.1} parent=1 // pred_region
      %119 = dma.done [#allocation9], 4096
    $region45: #{block_forward.1} parent=1 // pred_fallthru
      _
    // Predicated region
    $region46: #{block_forward.1} parent=1 // pred_check
      _
    $region47: #{block_forward.1} parent=1 // pred_check_branch
      %121 = sbr.rel (0) target = $region49
    $region48: #{block_forward.1} parent=1 // pred_region
      %123 = dma.done [#allocation9], 4096
    $region49: #{block_forward.1} parent=1 // pred_fallthru
      _
    // Predicated region
    $region50: #{block_forward.1} parent=1 // pred_check
      _
    $region51: #{block_forward.1} parent=1 // pred_check_branch
      %125 = sbr.rel (0) target = $region53
    $region52: #{block_forward.1} parent=1 // pred_region
      %127 = dma.done [#allocation12], 128
    $region53: #{block_forward.1} parent=1 // pred_fallthru
      _
    // Predicated region
    $region54: #{block_forward.1} parent=1 // pred_check
      _
    $region55: #{block_forward.1} parent=1 // pred_check_branch
      %129 = sbr.rel (0) target = $region57
    $region56: #{block_forward.1} parent=1 // pred_region
      %131 = dma.done [#allocation12], 64
    $region57: #{block_forward.1} parent=1 // pred_fallthru
      _
    %v133 = vld [vmem:[#allocation2] sm:$0xff]
    %v134 = vld [vmem:[#allocation2 + $0x8] sm:$0xff]
    %v135 = vld [vmem:[#allocation2 + $0x10] sm:$0xff]
    %v136 = vld [vmem:[#allocation2 + $0x18] sm:$0xff]
    %v137 = vld [vmem:[#allocation11] sm:$0x1]
    %v138 = vld [vmem:[#allocation11 + $0x1] sm:$0x1]
    %v139 = vld [vmem:[#allocation11 + $0x2] sm:$0x1]
    %v140 = vld [vmem:[#allocation11 + $0x3] sm:$0x1]
    %v141 = vld [vmem:[#allocation11 + $0x4] sm:$0x1]
    %v142 = vld [vmem:[#allocation11 + $0x5] sm:$0x1]
    %143 = vadd.xlane.f32.xlu0 %v133
    %v144 = vpop.xlane.xlu0 %143
    %145 = vadd.xlane.f32.xlu0 %v134
    %v146 = vpop.xlane.xlu0 %145
    %147 = vadd.xlane.f32.xlu0 %v135
    %v148 = vpop.xlane.xlu0 %147
    %149 = vadd.xlane.f32.xlu0 %v136
    %v150 = vpop.xlane.xlu0 %149
    %v151 = vrcp.pop 128.0
    %v152 = vmul.f32 128.0, %v151
    %v153 = vsub.f32 1.0, %v152
    %v154 = vmul.f32 %v151, %v153
    %v155 = vadd.f32 %v151, %v154
    %vm156 = vweird.f32 %v151
    %v157 = vsel %vm156, %v151, %v155
    %v158 = vmul.f32 %v144, %v157
    %v159 = vmul.f32 %v146, %v157
    %v160 = vmul.f32 %v148, %v157
    %v161 = vmul.f32 %v150, %v157
    %v162 = vsub.f32 %v133, %v158
    %v163 = vsub.f32 %v134, %v159
    %v164 = vsub.f32 %v135, %v160
    %v165 = vsub.f32 %v136, %v161
    %v166 = vmul.f32 %v162, %v162
    %v167 = vmul.f32 %v163, %v163
    %v168 = vmul.f32 %v164, %v164
    %v169 = vmul.f32 %v165, %v165
    %170 = vadd.xlane.f32.xlu0 %v166
    %v171 = vpop.xlane.xlu0 %170
    %172 = vadd.xlane.f32.xlu0 %v167
    %v173 = vpop.xlane.xlu0 %172
    %174 = vadd.xlane.f32.xlu0 %v168
    %v175 = vpop.xlane.xlu0 %174
    %176 = vadd.xlane.f32.xlu0 %v169
    %v177 = vpop.xlane.xlu0 %176
    %v178 = vmul.f32 %v171, %v157
    %v179 = vmul.f32 %v173, %v157
    %v180 = vmul.f32 %v175, %v157
    %v181 = vmul.f32 %v177, %v157
    %v182 = vadd.f32 %v178, 1e-05
    %v183 = vadd.f32 %v179, 1e-05
    %v184 = vadd.f32 %v180, 1e-05
    %v185 = vadd.f32 %v181, 1e-05
    %v186 = vrsqrt.pop %v182
    %v187 = vmul.f32 %v186, %v182
    %v188 = vmul.f32 %v187, %v186
    %v189 = vmul.f32 0.5, %v188
    %v190 = vsub.f32 1.5, %v189
    %v191 = vmul.f32 %v186, %v190
    %vm192 = vweird.f32 %v182
    %vm193 = vweird.f32 %v186
    %vm194 = vmor %vm192, %vm193
    %v195 = vsel %vm194, %v186, %v191
    %v196 = vrsqrt.pop %v183
    %v197 = vmul.f32 %v196, %v183
    %v198 = vmul.f32 %v197, %v196
    %v199 = vmul.f32 0.5, %v198
    %v200 = vsub.f32 1.5, %v199
    %v201 = vmul.f32 %v196, %v200
    %vm202 = vweird.f32 %v183
    %vm203 = vweird.f32 %v196
    %vm204 = vmor %vm202, %vm203
    %v205 = vsel %vm204, %v196, %v201
    %v206 = vrsqrt.pop %v184
    %v207 = vmul.f32 %v206, %v184
    %v208 = vmul.f32 %v207, %v206
    %v209 = vmul.f32 0.5, %v208
    %v210 = vsub.f32 1.5, %v209
    %v211 = vmul.f32 %v206, %v210
    %vm212 = vweird.f32 %v184
    %vm213 = vweird.f32 %v206
    %vm214 = vmor %vm212, %vm213
    %v215 = vsel %vm214, %v206, %v211
    %v216 = vrsqrt.pop %v185
    %v217 = vmul.f32 %v216, %v185
    %v218 = vmul.f32 %v217, %v216
    %v219 = vmul.f32 0.5, %v218
    %v220 = vsub.f32 1.5, %v219
    %v221 = vmul.f32 %v216, %v220
    %vm222 = vweird.f32 %v185
    %vm223 = vweird.f32 %v216
    %vm224 = vmor %vm222, %vm223
    %v225 = vsel %vm224, %v216, %v221
    %v226 = vmul.f32 %v162, %v195
    %v227 = vmul.f32 %v163, %v205
    %v228 = vmul.f32 %v164, %v215
    %v229 = vmul.f32 %v165, %v225
    %v230 = vperm.slane %v137, 0
    %v231 = vmul.f32 %v226, %v230
    %v232 = vmul.f32 %v227, %v230
    %v233 = vmul.f32 %v228, %v230
    %v234 = vmul.f32 %v229, %v230
    %v235 = vperm.slane %v138, 0
    %v236 = vadd.f32 %v231, %v235
    %v237 = vadd.f32 %v232, %v235
    %v238 = vadd.f32 %v233, %v235
    %v239 = vadd.f32 %v234, %v235
    %v240 = vpack.c.bf16 %v237, %v236
    %v241 = vpack.c.bf16 %v239, %v238
    %v242 = vld [vmem:[#allocation5] sm:$0xff]
    %v243 = vld [vmem:[#allocation5 + $0x8] sm:$0xf]
    %v244 = vld [vmem:[#allocation5 + $0xc] sm:$0xff]
    %v245 = vld [vmem:[#allocation5 + $0x14] sm:$0xf]
    %v246 = vld [vmem:[#allocation5 + $0x18] sm:$0xff]
    %v247 = vld [vmem:[#allocation5 + $0x20] sm:$0xf]
    %v248 = vld [vmem:[#allocation5 + $0x24] sm:$0xff]
    %v249 = vld [vmem:[#allocation5 + $0x2c] sm:$0xf]
    %v250 = vld [vmem:[#allocation5 + $0x30] sm:$0xff]
    %v251 = vld [vmem:[#allocation5 + $0x38] sm:$0xf]
    %v252 = vld [vmem:[#allocation5 + $0x3c] sm:$0xff]
    %v253 = vld [vmem:[#allocation5 + $0x44] sm:$0xf]
    %v254 = vld [vmem:[#allocation5 + $0x48] sm:$0xff]
    %v255 = vld [vmem:[#allocation5 + $0x50] sm:$0xf]
    %v256 = vld [vmem:[#allocation5 + $0x54] sm:$0xff]
    %v257 = vld [vmem:[#allocation5 + $0x5c] sm:$0xf]
    %v258 = vld [vmem:[#allocation5 + $0x60] sm:$0xff]
    %v259 = vld [vmem:[#allocation5 + $0x68] sm:$0xf]
    %v260 = vld [vmem:[#allocation5 + $0x6c] sm:$0xff]
    %v261 = vld [vmem:[#allocation5 + $0x74] sm:$0xf]
    %v262 = vld [vmem:[#allocation5 + $0x78] sm:$0xff]
    %v263 = vld [vmem:[#allocation5 + $0x80] sm:$0xf]
    %v264 = vld [vmem:[#allocation5 + $0x84] sm:$0xff]
    %v265 = vld [vmem:[#allocation5 + $0x8c] sm:$0xf]
    %v266 = vld [vmem:[#allocation5 + $0x90] sm:$0xff]
    %v267 = vld [vmem:[#allocation5 + $0x98] sm:$0xf]
    %v268 = vld [vmem:[#allocation5 + $0x9c] sm:$0xff]
    %v269 = vld [vmem:[#allocation5 + $0xa4] sm:$0xf]
    %v270 = vld [vmem:[#allocation5 + $0xa8] sm:$0xff]
    %v271 = vld [vmem:[#allocation5 + $0xb0] sm:$0xf]
    %v272 = vld [vmem:[#allocation5 + $0xb4] sm:$0xff]
    %v273 = vld [vmem:[#allocation5 + $0xbc] sm:$0xf]
    %v306 = vunpack.c.l.b16 %v242
    %v307 = vunpack.c.h.b16 %v242
    %v308 = vunpack.c.l.b16 %v243
    %v309 = vunpack.c.l.b16 %v244
    %v310 = vunpack.c.h.b16 %v244
    %v311 = vunpack.c.l.b16 %v245
    %v312 = vunpack.c.l.b16 %v246
    %v313 = vunpack.c.h.b16 %v246
    %v314 = vunpack.c.l.b16 %v247
    %v315 = vunpack.c.l.b16 %v248
    %v316 = vunpack.c.h.b16 %v248
    %v317 = vunpack.c.l.b16 %v249
    %v318 = vunpack.c.l.b16 %v250
    %v319 = vunpack.c.h.b16 %v250
    %v320 = vunpack.c.l.b16 %v251
    %v321 = vunpack.c.l.b16 %v252
    %v322 = vunpack.c.h.b16 %v252
    %v323 = vunpack.c.l.b16 %v253
    %v324 = vunpack.c.l.b16 %v254
    %v325 = vunpack.c.h.b16 %v254
    %v326 = vunpack.c.l.b16 %v255
    %v327 = vunpack.c.l.b16 %v256
    %v328 = vunpack.c.h.b16 %v256
    %v329 = vunpack.c.l.b16 %v257
    %v330 = vunpack.c.l.b16 %v258
    %v331 = vunpack.c.h.b16 %v258
    %v332 = vunpack.c.l.b16 %v259
    %v333 = vunpack.c.l.b16 %v260
    %v334 = vunpack.c.h.b16 %v260
    %v335 = vunpack.c.l.b16 %v261
    %v336 = vunpack.c.l.b16 %v262
    %v337 = vunpack.c.h.b16 %v262
    %v338 = vunpack.c.l.b16 %v263
    %v339 = vunpack.c.l.b16 %v264
    %v340 = vunpack.c.h.b16 %v264
    %v341 = vunpack.c.l.b16 %v265
    %v342 = vunpack.c.l.b16 %v266
    %v343 = vunpack.c.h.b16 %v266
    %v344 = vunpack.c.l.b16 %v267
    %v345 = vunpack.c.l.b16 %v268
    %v346 = vunpack.c.h.b16 %v268
    %v347 = vunpack.c.l.b16 %v269
    %v348 = vunpack.c.l.b16 %v270
    %v349 = vunpack.c.h.b16 %v270
    %v350 = vunpack.c.l.b16 %v271
    %v351 = vunpack.c.l.b16 %v272
    %v352 = vunpack.c.h.b16 %v272
    %v353 = vunpack.c.l.b16 %v273
    %v354 = vpack.c.b16 %v309, %v306
    %v355 = vpack.c.b16 %v310, %v307
    %v356 = vpack.c.b16 %v311, %v308
    %v357 = vpack.c.b16 %v315, %v312
    %v358 = vpack.c.b16 %v316, %v313
    %v359 = vpack.c.b16 %v317, %v314
    %v360 = vpack.c.b16 %v321, %v318
    %v361 = vpack.c.b16 %v322, %v319
    %v362 = vpack.c.b16 %v323, %v320
    %v363 = vpack.c.b16 %v327, %v324
    %v364 = vpack.c.b16 %v328, %v325
    %v365 = vpack.c.b16 %v329, %v326
    %v366 = vpack.c.b16 %v333, %v330
    %v367 = vpack.c.b16 %v334, %v331
    %v368 = vpack.c.b16 %v335, %v332
    %v369 = vpack.c.b16 %v339, %v336
    %v370 = vpack.c.b16 %v340, %v337
    %v371 = vpack.c.b16 %v341, %v338
    %v372 = vpack.c.b16 %v345, %v342
    %v373 = vpack.c.b16 %v346, %v343
    %v374 = vpack.c.b16 %v347, %v344
    %v375 = vpack.c.b16 %v351, %v348
    %v376 = vpack.c.b16 %v352, %v349
    %v377 = vpack.c.b16 %v353, %v350
    %402 = vmatpush.bf16.msra.mxu0 %v375
    %403 = vmatpush.bf16.msra.mxu0 %v372
    %404 = vmatpush.bf16.msra.mxu0 %v369
    %405 = vmatpush.bf16.msra.mxu0 %v366
    %406 = vmatpush.bf16.msra.mxu0 %v363
    %407 = vmatpush.bf16.msra.mxu0 %v360
    %408 = vmatpush.bf16.msra.mxu0 %v357
    %409 = vmatpush.bf16.msra.mxu0 %v354
    %410 = vmatmul.bf16.gmra.mxu0 %v240
    %v411 = vpop.f32.mrf.mxu0
    %v412 = vadd.f32 0.0, %v411
    %v413 = vpop.f32.mrf.mxu0
    %v414 = vadd.f32 0.0, %v413
    %415 = vmatmul.bf16.gmra.mxu0 %v241
    %v416 = vpop.f32.mrf.mxu0
    %v417 = vadd.f32 0.0, %v416
    %v418 = vpop.f32.mrf.mxu0
    %v419 = vadd.f32 0.0, %v418
    %420 = vdwg.mxu0
    %421 = vmatpush.bf16.msra.mxu0 %v376
    %422 = vmatpush.bf16.msra.mxu0 %v373
    %423 = vmatpush.bf16.msra.mxu0 %v370
    %424 = vmatpush.bf16.msra.mxu0 %v367
    %425 = vmatpush.bf16.msra.mxu0 %v364
    %426 = vmatpush.bf16.msra.mxu0 %v361
    %427 = vmatpush.bf16.msra.mxu0 %v358
    %428 = vmatpush.bf16.msra.mxu0 %v355
    %429 = vmatmul.bf16.gmra.mxu0 %v240
    %v430 = vpop.f32.mrf.mxu0
    %v431 = vadd.f32 0.0, %v430
    %v432 = vpop.f32.mrf.mxu0
    %v433 = vadd.f32 0.0, %v432
    %434 = vmatmul.bf16.gmra.mxu0 %v241
    %v435 = vpop.f32.mrf.mxu0
    %v436 = vadd.f32 0.0, %v435
    %v437 = vpop.f32.mrf.mxu0
    %v438 = vadd.f32 0.0, %v437
    %439 = vdwg.mxu0
    %440 = vmatpush.bf16.msra.mxu0 %v377
    %441 = vmatpush.bf16.msra.mxu0 %v374
    %442 = vmatpush.bf16.msra.mxu0 %v371
    %443 = vmatpush.bf16.msra.mxu0 %v368
    %444 = vmatpush.bf16.msra.mxu0 %v365
    %445 = vmatpush.bf16.msra.mxu0 %v362
    %446 = vmatpush.bf16.msra.mxu0 %v359
    %447 = vmatpush.bf16.msra.mxu0 %v356
    %448 = vmatmul.bf16.gmra.mxu0 %v240
    %v449 = vpop.f32.mrf.mxu0
    %v450 = vadd.f32 0.0, %v449
    %v451 = vpop.f32.mrf.mxu0
    %v452 = vadd.f32 0.0, %v451
    %453 = vmatmul.bf16.gmra.mxu0 %v241
    %v454 = vpop.f32.mrf.mxu0
    %v455 = vadd.f32 0.0, %v454
    %v456 = vpop.f32.mrf.mxu0
    %v457 = vadd.f32 0.0, %v456
    %458 = vdwg.mxu0
    %v459 = vlaneseq
    %v460 = vshrl.u32 %v459, 7
    %v461 = vadd.s32 %v460, 8
    %v462 = vlaneseq
    %v463 = vand.u32 %v462, 127
    %vm464 = vcmp.le.s32.totalorder %v463, %v460
    %vm465 = vcmp.le.s32.totalorder %v463, %v461
    %468 = vrot.lane.b32.xlu0 %v412, 96
    %v469 = vpop.permute.xlu0 %468
    %470 = vrot.lane.b32.xlu0 %v414, 96
    %v471 = vpop.permute.xlu0 %470
    %474 = vrot.lane.b32.xlu0 %v412, 64
    %v475 = vpop.permute.xlu0 %474
    %476 = vrot.lane.b32.xlu0 %v414, 64
    %v477 = vpop.permute.xlu0 %476
    %480 = vrot.lane.b32.xlu0 %v412, 32
    %v481 = vpop.permute.xlu0 %480
    %482 = vrot.lane.b32.xlu0 %v414, 32
    %v483 = vpop.permute.xlu0 %482
    %v486 = vrot.slane %v475, 4
    %vm487 = vcmask 1047556
    %v488 = vsel %vm487, %v486, %v412
    %v489 = vrot.slane %v412, 4
    %v490 = vsel %vm487, %v475, %v489
    %v492 = vunpack.c.l.s4 1983009808
    %v493 = vunpack.c.0.s8 %v492
    %v494 = vperm.slane %v488, %v493
    %v496 = vunpack.c.l.s4 1983009808
    %v497 = vunpack.c.0.s8 %v496
    %v498 = vperm.slane %v490, %v497
    %v499 = vrot.slane %v481, 4
    %v500 = vsel %vm487, %v499, %v469
    %v501 = vrot.slane %v469, 4
    %v502 = vsel %vm487, %v481, %v501
    %v504 = vunpack.c.l.s4 1983009808
    %v505 = vunpack.c.0.s8 %v504
    %v506 = vperm.slane %v500, %v505
    %v508 = vunpack.c.l.s4 1983009808
    %v509 = vunpack.c.0.s8 %v508
    %v510 = vperm.slane %v502, %v509
    %v511 = vrot.slane %v506, 4
    %v512 = vsel %vm487, %v511, %v494
    %v513 = vrot.slane %v494, 4
    %v514 = vsel %vm487, %v506, %v513
    %v516 = vunpack.c.l.s4 1934713408
    %v517 = vunpack.c.0.s8 %v516
    %v518 = vperm.slane %v512, %v517
    %v520 = vunpack.c.l.s4 1934713408
    %v521 = vunpack.c.0.s8 %v520
    %v522 = vperm.slane %v514, %v521
    %v523 = vrot.slane %v510, 4
    %v524 = vsel %vm487, %v523, %v498
    %v525 = vrot.slane %v498, 4
    %v526 = vsel %vm487, %v510, %v525
    %v528 = vunpack.c.l.s4 1934713408
    %v529 = vunpack.c.0.s8 %v528
    %v530 = vperm.slane %v524, %v529
    %v532 = vunpack.c.l.s4 1934713408
    %v533 = vunpack.c.0.s8 %v532
    %v534 = vperm.slane %v526, %v533
    %v535 = vrot.slane %v518, 4
    %v536 = vsel %vm487, 0.0, %v535
    %v537 = vrot.slane %v522, 4
    %v538 = vsel %vm487, 0.0, %v537
    %v539 = vrot.slane %v530, 4
    %v540 = vsel %vm487, 0.0, %v539
    %v541 = vrot.slane %v534, 4
    %v542 = vsel %vm487, 0.0, %v541
    %v543 = vrot.slane %v477, 4
    %v544 = vsel %vm487, %v543, %v414
    %v545 = vrot.slane %v414, 4
    %v546 = vsel %vm487, %v477, %v545
    %v548 = vunpack.c.l.s4 1983009808
    %v549 = vunpack.c.0.s8 %v548
    %v550 = vperm.slane %v544, %v549
    %v552 = vunpack.c.l.s4 1983009808
    %v553 = vunpack.c.0.s8 %v552
    %v554 = vperm.slane %v546, %v553
    %v555 = vrot.slane %v483, 4
    %v556 = vsel %vm487, %v555, %v471
    %v557 = vrot.slane %v471, 4
    %v558 = vsel %vm487, %v483, %v557
    %v560 = vunpack.c.l.s4 1983009808
    %v561 = vunpack.c.0.s8 %v560
    %v562 = vperm.slane %v556, %v561
    %v564 = vunpack.c.l.s4 1983009808
    %v565 = vunpack.c.0.s8 %v564
    %v566 = vperm.slane %v558, %v565
    %v567 = vrot.slane %v562, 4
    %v568 = vsel %vm487, %v567, %v550
    %v569 = vrot.slane %v550, 4
    %v570 = vsel %vm487, %v562, %v569
    %v572 = vunpack.c.l.s4 1934713408
    %v573 = vunpack.c.0.s8 %v572
    %v574 = vperm.slane %v568, %v573
    %v576 = vunpack.c.l.s4 1934713408
    %v577 = vunpack.c.0.s8 %v576
    %v578 = vperm.slane %v570, %v577
    %v579 = vrot.slane %v566, 4
    %v580 = vsel %vm487, %v579, %v554
    %v581 = vrot.slane %v554, 4
    %v582 = vsel %vm487, %v566, %v581
    %v584 = vunpack.c.l.s4 1934713408
    %v585 = vunpack.c.0.s8 %v584
    %v586 = vperm.slane %v580, %v585
    %v588 = vunpack.c.l.s4 1934713408
    %v589 = vunpack.c.0.s8 %v588
    %v590 = vperm.slane %v582, %v589
    %v591 = vrot.slane %v574, 4
    %v592 = vsel %vm487, 0.0, %v591
    %v593 = vrot.slane %v578, 4
    %v594 = vsel %vm487, 0.0, %v593
    %v595 = vrot.slane %v586, 4
    %v596 = vsel %vm487, 0.0, %v595
    %v597 = vrot.slane %v590, 4
    %v598 = vsel %vm487, 0.0, %v597
    %v599 = vpack.c.bf16 %v518, %v518
    %v600 = vpack.c.bf16 %v536, %v536
    %v601 = vpack.c.bf16 %v522, %v522
    %v602 = vpack.c.bf16 %v538, %v538
    %v603 = vpack.c.bf16 %v530, %v530
    %v604 = vpack.c.bf16 %v540, %v540
    %v605 = vpack.c.bf16 %v534, %v534
    %v606 = vpack.c.bf16 %v542, %v542
    %v607 = vpack.c.bf16 %v574, %v574
    %v608 = vpack.c.bf16 %v592, %v592
    %v609 = vpack.c.bf16 %v578, %v578
    %v610 = vpack.c.bf16 %v594, %v594
    %v611 = vpack.c.bf16 %v586, %v586
    %v612 = vpack.c.bf16 %v596, %v596
    %v613 = vpack.c.bf16 %v590, %v590
    %v614 = vpack.c.bf16 %v598, %v598
    %v615 = vrot.slane %v603, 4
    %vm616 = vcmask 1047556
    %v617 = vsel %vm616, %v615, %v599
    %v619 = vunpack.c.l.s4 1983009808
    %v620 = vunpack.c.0.s8 %v619
    %v621 = vperm.slane %v617, %v620
    %v622 = vrot.slane %v605, 4
    %v623 = vsel %vm616, %v622, %v601
    %v625 = vunpack.c.l.s4 1983009808
    %v626 = vunpack.c.0.s8 %v625
    %v627 = vperm.slane %v623, %v626
    %v628 = vrot.slane %v627, 4
    %v629 = vsel %vm616, %v628, %v621
    %v631 = vunpack.c.l.s4 1934713408
    %v632 = vunpack.c.0.s8 %v631
    %v633 = vperm.slane %v629, %v632
    %v634 = vrot.slane %v633, 4
    %v635 = vsel %vm616, 0, %v634
    %v636 = vrot.slane %v604, 4
    %v637 = vsel %vm616, %v636, %v600
    %v639 = vunpack.c.l.s4 1983009808
    %v640 = vunpack.c.0.s8 %v639
    %v641 = vperm.slane %v637, %v640
    %v642 = vrot.slane %v606, 4
    %v643 = vsel %vm616, %v642, %v602
    %v645 = vunpack.c.l.s4 1983009808
    %v646 = vunpack.c.0.s8 %v645
    %v647 = vperm.slane %v643, %v646
    %v648 = vrot.slane %v647, 4
    %v649 = vsel %vm616, %v648, %v641
    %v651 = vunpack.c.l.s4 1934713408
    %v652 = vunpack.c.0.s8 %v651
    %v653 = vperm.slane %v649, %v652
    %v654 = vrot.slane %v653, 4
    %v655 = vsel %vm616, 0, %v654
    %v656 = vrot.slane %v611, 4
    %v657 = vsel %vm616, %v656, %v607
    %v659 = vunpack.c.l.s4 1983009808
    %v660 = vunpack.c.0.s8 %v659
    %v661 = vperm.slane %v657, %v660
    %v662 = vrot.slane %v613, 4
    %v663 = vsel %vm616, %v662, %v609
    %v665 = vunpack.c.l.s4 1983009808
    %v666 = vunpack.c.0.s8 %v665
    %v667 = vperm.slane %v663, %v666
    %v668 = vrot.slane %v667, 4
    %v669 = vsel %vm616, %v668, %v661
    %v671 = vunpack.c.l.s4 1934713408
    %v672 = vunpack.c.0.s8 %v671
    %v673 = vperm.slane %v669, %v672
    %v674 = vrot.slane %v673, 4
    %v675 = vsel %vm616, 0, %v674
    %v676 = vrot.slane %v612, 4
    %v677 = vsel %vm616, %v676, %v608
    %v679 = vunpack.c.l.s4 1983009808
    %v680 = vunpack.c.0.s8 %v679
    %v681 = vperm.slane %v677, %v680
    %v682 = vrot.slane %v614, 4
    %v683 = vsel %vm616, %v682, %v610
    %v685 = vunpack.c.l.s4 1983009808
    %v686 = vunpack.c.0.s8 %v685
    %v687 = vperm.slane %v683, %v686
    %v688 = vrot.slane %v687, 4
    %v689 = vsel %vm616, %v688, %v681
    %v691 = vunpack.c.l.s4 1934713408
    %v692 = vunpack.c.0.s8 %v691
    %v693 = vperm.slane %v689, %v692
    %v694 = vrot.slane %v693, 4
    %v695 = vsel %vm616, 0, %v694
    %v698 = vpack.i.b16 %v653, %v633
    %v699 = vshrl.u32 %v633, 16
    %v700 = vshrl.u32 %v653, 16
    %v701 = vpack.i.b16 %v700, %v699
    %v704 = vpack.i.b16 %v655, %v635
    %v705 = vshrl.u32 %v635, 16
    %v706 = vshrl.u32 %v655, 16
    %v707 = vpack.i.b16 %v706, %v705
    %v710 = vpack.i.b16 %v693, %v673
    %v711 = vshrl.u32 %v673, 16
    %v712 = vshrl.u32 %v693, 16
    %v713 = vpack.i.b16 %v712, %v711
    %v716 = vpack.i.b16 %v695, %v675
    %v717 = vshrl.u32 %v675, 16
    %v718 = vshrl.u32 %v695, 16
    %v719 = vpack.i.b16 %v718, %v717
    %722 = vrot.lane.b32.xlu0 %v431, 96
    %v723 = vpop.permute.xlu0 %722
    %724 = vrot.lane.b32.xlu0 %v433, 96
    %v725 = vpop.permute.xlu0 %724
    %728 = vrot.lane.b32.xlu0 %v431, 64
    %v729 = vpop.permute.xlu0 %728
    %730 = vrot.lane.b32.xlu0 %v433, 64
    %v731 = vpop.permute.xlu0 %730
    %734 = vrot.lane.b32.xlu0 %v431, 32
    %v735 = vpop.permute.xlu0 %734
    %736 = vrot.lane.b32.xlu0 %v433, 32
    %v737 = vpop.permute.xlu0 %736
    %v740 = vrot.slane %v729, 4
    %v741 = vsel %vm487, %v740, %v431
    %v742 = vrot.slane %v431, 4
    %v743 = vsel %vm487, %v729, %v742
    %v745 = vunpack.c.l.s4 1983009808
    %v746 = vunpack.c.0.s8 %v745
    %v747 = vperm.slane %v741, %v746
    %v749 = vunpack.c.l.s4 1983009808
    %v750 = vunpack.c.0.s8 %v749
    %v751 = vperm.slane %v743, %v750
    %v752 = vrot.slane %v735, 4
    %v753 = vsel %vm487, %v752, %v723
    %v754 = vrot.slane %v723, 4
    %v755 = vsel %vm487, %v735, %v754
    %v757 = vunpack.c.l.s4 1983009808
    %v758 = vunpack.c.0.s8 %v757
    %v759 = vperm.slane %v753, %v758
    %v761 = vunpack.c.l.s4 1983009808
    %v762 = vunpack.c.0.s8 %v761
    %v763 = vperm.slane %v755, %v762
    %v764 = vrot.slane %v759, 4
    %v765 = vsel %vm487, %v764, %v747
    %v766 = vrot.slane %v747, 4
    %v767 = vsel %vm487, %v759, %v766
    %v769 = vunpack.c.l.s4 1934713408
    %v770 = vunpack.c.0.s8 %v769
    %v771 = vperm.slane %v765, %v770
    %v773 = vunpack.c.l.s4 1934713408
    %v774 = vunpack.c.0.s8 %v773
    %v775 = vperm.slane %v767, %v774
    %v776 = vrot.slane %v763, 4
    %v777 = vsel %vm487, %v776, %v751
    %v778 = vrot.slane %v751, 4
    %v779 = vsel %vm487, %v763, %v778
    %v781 = vunpack.c.l.s4 1934713408
    %v782 = vunpack.c.0.s8 %v781
    %v783 = vperm.slane %v777, %v782
    %v785 = vunpack.c.l.s4 1934713408
    %v786 = vunpack.c.0.s8 %v785
    %v787 = vperm.slane %v779, %v786
    %v788 = vrot.slane %v771, 4
    %v789 = vsel %vm487, 0.0, %v788
    %v790 = vrot.slane %v775, 4
    %v791 = vsel %vm487, 0.0, %v790
    %v792 = vrot.slane %v783, 4
    %v793 = vsel %vm487, 0.0, %v792
    %v794 = vrot.slane %v787, 4
    %v795 = vsel %vm487, 0.0, %v794
    %v796 = vrot.slane %v731, 4
    %v797 = vsel %vm487, %v796, %v433
    %v798 = vrot.slane %v433, 4
    %v799 = vsel %vm487, %v731, %v798
    %v801 = vunpack.c.l.s4 1983009808
    %v802 = vunpack.c.0.s8 %v801
    %v803 = vperm.slane %v797, %v802
    %v805 = vunpack.c.l.s4 1983009808
    %v806 = vunpack.c.0.s8 %v805
    %v807 = vperm.slane %v799, %v806
    %v808 = vrot.slane %v737, 4
    %v809 = vsel %vm487, %v808, %v725
    %v810 = vrot.slane %v725, 4
    %v811 = vsel %vm487, %v737, %v810
    %v813 = vunpack.c.l.s4 1983009808
    %v814 = vunpack.c.0.s8 %v813
    %v815 = vperm.slane %v809, %v814
    %v817 = vunpack.c.l.s4 1983009808
    %v818 = vunpack.c.0.s8 %v817
    %v819 = vperm.slane %v811, %v818
    %v820 = vrot.slane %v815, 4
    %v821 = vsel %vm487, %v820, %v803
    %v822 = vrot.slane %v803, 4
    %v823 = vsel %vm487, %v815, %v822
    %v825 = vunpack.c.l.s4 1934713408
    %v826 = vunpack.c.0.s8 %v825
    %v827 = vperm.slane %v821, %v826
    %v829 = vunpack.c.l.s4 1934713408
    %v830 = vunpack.c.0.s8 %v829
    %v831 = vperm.slane %v823, %v830
    %v832 = vrot.slane %v819, 4
    %v833 = vsel %vm487, %v832, %v807
    %v834 = vrot.slane %v807, 4
    %v835 = vsel %vm487, %v819, %v834
    %v837 = vunpack.c.l.s4 1934713408
    %v838 = vunpack.c.0.s8 %v837
    %v839 = vperm.slane %v833, %v838
    %v841 = vunpack.c.l.s4 1934713408
    %v842 = vunpack.c.0.s8 %v841
    %v843 = vperm.slane %v835, %v842
    %v844 = vrot.slane %v827, 4
    %v845 = vsel %vm487, 0.0, %v844
    %v846 = vrot.slane %v831, 4
    %v847 = vsel %vm487, 0.0, %v846
    %v848 = vrot.slane %v839, 4
    %v849 = vsel %vm487, 0.0, %v848
    %v850 = vrot.slane %v843, 4
    %v851 = vsel %vm487, 0.0, %v850
    %v852 = vpack.c.bf16 %v771, %v771
    %v853 = vpack.c.bf16 %v789, %v789
    %v854 = vpack.c.bf16 %v775, %v775
    %v855 = vpack.c.bf16 %v791, %v791
    %v856 = vpack.c.bf16 %v783, %v783
    %v857 = vpack.c.bf16 %v793, %v793
    %v858 = vpack.c.bf16 %v787, %v787
    %v859 = vpack.c.bf16 %v795, %v795
    %v860 = vpack.c.bf16 %v827, %v827
    %v861 = vpack.c.bf16 %v845, %v845
    %v862 = vpack.c.bf16 %v831, %v831
    %v863 = vpack.c.bf16 %v847, %v847
    %v864 = vpack.c.bf16 %v839, %v839
    %v865 = vpack.c.bf16 %v849, %v849
    %v866 = vpack.c.bf16 %v843, %v843
    %v867 = vpack.c.bf16 %v851, %v851
    %v868 = vrot.slane %v856, 4
    %v869 = vsel %vm616, %v868, %v852
    %v871 = vunpack.c.l.s4 1983009808
    %v872 = vunpack.c.0.s8 %v871
    %v873 = vperm.slane %v869, %v872
    %v874 = vrot.slane %v858, 4
    %v875 = vsel %vm616, %v874, %v854
    %v877 = vunpack.c.l.s4 1983009808
    %v878 = vunpack.c.0.s8 %v877
    %v879 = vperm.slane %v875, %v878
    %v880 = vrot.slane %v879, 4
    %v881 = vsel %vm616, %v880, %v873
    %v883 = vunpack.c.l.s4 1934713408
    %v884 = vunpack.c.0.s8 %v883
    %v885 = vperm.slane %v881, %v884
    %v886 = vrot.slane %v885, 4
    %v887 = vsel %vm616, 0, %v886
    %v888 = vrot.slane %v857, 4
    %v889 = vsel %vm616, %v888, %v853
    %v891 = vunpack.c.l.s4 1983009808
    %v892 = vunpack.c.0.s8 %v891
    %v893 = vperm.slane %v889, %v892
    %v894 = vrot.slane %v859, 4
    %v895 = vsel %vm616, %v894, %v855
    %v897 = vunpack.c.l.s4 1983009808
    %v898 = vunpack.c.0.s8 %v897
    %v899 = vperm.slane %v895, %v898
    %v900 = vrot.slane %v899, 4
    %v901 = vsel %vm616, %v900, %v893
    %v903 = vunpack.c.l.s4 1934713408
    %v904 = vunpack.c.0.s8 %v903
    %v905 = vperm.slane %v901, %v904
    %v906 = vrot.slane %v905, 4
    %v907 = vsel %vm616, 0, %v906
    %v908 = vrot.slane %v864, 4
    %v909 = vsel %vm616, %v908, %v860
    %v911 = vunpack.c.l.s4 1983009808
    %v912 = vunpack.c.0.s8 %v911
    %v913 = vperm.slane %v909, %v912
    %v914 = vrot.slane %v866, 4
    %v915 = vsel %vm616, %v914, %v862
    %v917 = vunpack.c.l.s4 1983009808
    %v918 = vunpack.c.0.s8 %v917
    %v919 = vperm.slane %v915, %v918
    %v920 = vrot.slane %v919, 4
    %v921 = vsel %vm616, %v920, %v913
    %v923 = vunpack.c.l.s4 1934713408
    %v924 = vunpack.c.0.s8 %v923
    %v925 = vperm.slane %v921, %v924
    %v926 = vrot.slane %v925, 4
    %v927 = vsel %vm616, 0, %v926
    %v928 = vrot.slane %v865, 4
    %v929 = vsel %vm616, %v928, %v861
    %v931 = vunpack.c.l.s4 1983009808
    %v932 = vunpack.c.0.s8 %v931
    %v933 = vperm.slane %v929, %v932
    %v934 = vrot.slane %v867, 4
    %v935 = vsel %vm616, %v934, %v863
    %v937 = vunpack.c.l.s4 1983009808
    %v938 = vunpack.c.0.s8 %v937
    %v939 = vperm.slane %v935, %v938
    %v940 = vrot.slane %v939, 4
    %v941 = vsel %vm616, %v940, %v933
    %v943 = vunpack.c.l.s4 1934713408
    %v944 = vunpack.c.0.s8 %v943
    %v945 = vperm.slane %v941, %v944
    %v946 = vrot.slane %v945, 4
    %v947 = vsel %vm616, 0, %v946
    %v950 = vpack.i.b16 %v905, %v885
    %v951 = vshrl.u32 %v885, 16
    %v952 = vshrl.u32 %v905, 16
    %v953 = vpack.i.b16 %v952, %v951
    %v956 = vpack.i.b16 %v907, %v887
    %v957 = vshrl.u32 %v887, 16
    %v958 = vshrl.u32 %v907, 16
    %v959 = vpack.i.b16 %v958, %v957
    %v962 = vpack.i.b16 %v945, %v925
    %v963 = vshrl.u32 %v925, 16
    %v964 = vshrl.u32 %v945, 16
    %v965 = vpack.i.b16 %v964, %v963
    %v968 = vpack.i.b16 %v947, %v927
    %v969 = vshrl.u32 %v927, 16
    %v970 = vshrl.u32 %v947, 16
    %v971 = vpack.i.b16 %v970, %v969
    %974 = vrot.lane.b32.xlu0 %v450, 96
    %v975 = vpop.permute.xlu0 %974
    %976 = vrot.lane.b32.xlu0 %v452, 96
    %v977 = vpop.permute.xlu0 %976
    %980 = vrot.lane.b32.xlu0 %v450, 64
    %v981 = vpop.permute.xlu0 %980
    %982 = vrot.lane.b32.xlu0 %v452, 64
    %v983 = vpop.permute.xlu0 %982
    %986 = vrot.lane.b32.xlu0 %v450, 32
    %v987 = vpop.permute.xlu0 %986
    %988 = vrot.lane.b32.xlu0 %v452, 32
    %v989 = vpop.permute.xlu0 %988
    %v992 = vrot.slane %v981, 4
    %v993 = vsel %vm487, %v992, %v450
    %v994 = vrot.slane %v450, 4
    %v995 = vsel %vm487, %v981, %v994
    %v997 = vunpack.c.l.s4 1983009808
    %v998 = vunpack.c.0.s8 %v997
    %v999 = vperm.slane %v993, %v998
    %v1001 = vunpack.c.l.s4 1983009808
    %v1002 = vunpack.c.0.s8 %v1001
    %v1003 = vperm.slane %v995, %v1002
    %v1004 = vrot.slane %v987, 4
    %v1005 = vsel %vm487, %v1004, %v975
    %v1006 = vrot.slane %v975, 4
    %v1007 = vsel %vm487, %v987, %v1006
    %v1009 = vunpack.c.l.s4 1983009808
    %v1010 = vunpack.c.0.s8 %v1009
    %v1011 = vperm.slane %v1005, %v1010
    %v1013 = vunpack.c.l.s4 1983009808
    %v1014 = vunpack.c.0.s8 %v1013
    %v1015 = vperm.slane %v1007, %v1014
    %v1016 = vrot.slane %v1011, 4
    %v1017 = vsel %vm487, %v1016, %v999
    %v1018 = vrot.slane %v999, 4
    %v1019 = vsel %vm487, %v1011, %v1018
    %v1021 = vunpack.c.l.s4 1934713408
    %v1022 = vunpack.c.0.s8 %v1021
    %v1023 = vperm.slane %v1017, %v1022
    %v1025 = vunpack.c.l.s4 1934713408
    %v1026 = vunpack.c.0.s8 %v1025
    %v1027 = vperm.slane %v1019, %v1026
    %v1028 = vrot.slane %v1015, 4
    %v1029 = vsel %vm487, %v1028, %v1003
    %v1030 = vrot.slane %v1003, 4
    %v1031 = vsel %vm487, %v1015, %v1030
    %v1033 = vunpack.c.l.s4 1934713408
    %v1034 = vunpack.c.0.s8 %v1033
    %v1035 = vperm.slane %v1029, %v1034
    %v1037 = vunpack.c.l.s4 1934713408
    %v1038 = vunpack.c.0.s8 %v1037
    %v1039 = vperm.slane %v1031, %v1038
    %v1040 = vrot.slane %v1023, 4
    %v1041 = vsel %vm487, 0.0, %v1040
    %v1042 = vrot.slane %v1027, 4
    %v1043 = vsel %vm487, 0.0, %v1042
    %v1044 = vrot.slane %v1035, 4
    %v1045 = vsel %vm487, 0.0, %v1044
    %v1046 = vrot.slane %v1039, 4
    %v1047 = vsel %vm487, 0.0, %v1046
    %v1048 = vrot.slane %v983, 4
    %v1049 = vsel %vm487, %v1048, %v452
    %v1050 = vrot.slane %v452, 4
    %v1051 = vsel %vm487, %v983, %v1050
    %v1053 = vunpack.c.l.s4 1983009808
    %v1054 = vunpack.c.0.s8 %v1053
    %v1055 = vperm.slane %v1049, %v1054
    %v1057 = vunpack.c.l.s4 1983009808
    %v1058 = vunpack.c.0.s8 %v1057
    %v1059 = vperm.slane %v1051, %v1058
    %v1060 = vrot.slane %v989, 4
    %v1061 = vsel %vm487, %v1060, %v977
    %v1062 = vrot.slane %v977, 4
    %v1063 = vsel %vm487, %v989, %v1062
    %v1065 = vunpack.c.l.s4 1983009808
    %v1066 = vunpack.c.0.s8 %v1065
    %v1067 = vperm.slane %v1061, %v1066
    %v1069 = vunpack.c.l.s4 1983009808
    %v1070 = vunpack.c.0.s8 %v1069
    %v1071 = vperm.slane %v1063, %v1070
    %v1072 = vrot.slane %v1067, 4
    %v1073 = vsel %vm487, %v1072, %v1055
    %v1074 = vrot.slane %v1055, 4
    %v1075 = vsel %vm487, %v1067, %v1074
    %v1077 = vunpack.c.l.s4 1934713408
    %v1078 = vunpack.c.0.s8 %v1077
    %v1079 = vperm.slane %v1073, %v1078
    %v1081 = vunpack.c.l.s4 1934713408
    %v1082 = vunpack.c.0.s8 %v1081
    %v1083 = vperm.slane %v1075, %v1082
    %v1084 = vrot.slane %v1071, 4
    %v1085 = vsel %vm487, %v1084, %v1059
    %v1086 = vrot.slane %v1059, 4
    %v1087 = vsel %vm487, %v1071, %v1086
    %v1089 = vunpack.c.l.s4 1934713408
    %v1090 = vunpack.c.0.s8 %v1089
    %v1091 = vperm.slane %v1085, %v1090
    %v1093 = vunpack.c.l.s4 1934713408
    %v1094 = vunpack.c.0.s8 %v1093
    %v1095 = vperm.slane %v1087, %v1094
    %v1096 = vrot.slane %v1079, 4
    %v1097 = vsel %vm487, 0.0, %v1096
    %v1098 = vrot.slane %v1083, 4
    %v1099 = vsel %vm487, 0.0, %v1098
    %v1100 = vrot.slane %v1091, 4
    %v1101 = vsel %vm487, 0.0, %v1100
    %v1102 = vrot.slane %v1095, 4
    %v1103 = vsel %vm487, 0.0, %v1102
    %v1104 = vpack.c.bf16 %v1023, %v1023
    %v1105 = vpack.c.bf16 %v1041, %v1041
    %v1106 = vpack.c.bf16 %v1027, %v1027
    %v1107 = vpack.c.bf16 %v1043, %v1043
    %v1108 = vpack.c.bf16 %v1035, %v1035
    %v1109 = vpack.c.bf16 %v1045, %v1045
    %v1110 = vpack.c.bf16 %v1039, %v1039
    %v1111 = vpack.c.bf16 %v1047, %v1047
    %v1112 = vpack.c.bf16 %v1079, %v1079
    %v1113 = vpack.c.bf16 %v1097, %v1097
    %v1114 = vpack.c.bf16 %v1083, %v1083
    %v1115 = vpack.c.bf16 %v1099, %v1099
    %v1116 = vpack.c.bf16 %v1091, %v1091
    %v1117 = vpack.c.bf16 %v1101, %v1101
    %v1118 = vpack.c.bf16 %v1095, %v1095
    %v1119 = vpack.c.bf16 %v1103, %v1103
    %v1120 = vrot.slane %v1108, 4
    %v1121 = vsel %vm616, %v1120, %v1104
    %v1123 = vunpack.c.l.s4 1983009808
    %v1124 = vunpack.c.0.s8 %v1123
    %v1125 = vperm.slane %v1121, %v1124
    %v1126 = vrot.slane %v1110, 4
    %v1127 = vsel %vm616, %v1126, %v1106
    %v1129 = vunpack.c.l.s4 1983009808
    %v1130 = vunpack.c.0.s8 %v1129
    %v1131 = vperm.slane %v1127, %v1130
    %v1132 = vrot.slane %v1131, 4
    %v1133 = vsel %vm616, %v1132, %v1125
    %v1135 = vunpack.c.l.s4 1934713408
    %v1136 = vunpack.c.0.s8 %v1135
    %v1137 = vperm.slane %v1133, %v1136
    %v1138 = vrot.slane %v1137, 4
    %v1139 = vsel %vm616, 0, %v1138
    %v1140 = vrot.slane %v1109, 4
    %v1141 = vsel %vm616, %v1140, %v1105
    %v1143 = vunpack.c.l.s4 1983009808
    %v1144 = vunpack.c.0.s8 %v1143
    %v1145 = vperm.slane %v1141, %v1144
    %v1146 = vrot.slane %v1111, 4
    %v1147 = vsel %vm616, %v1146, %v1107
    %v1149 = vunpack.c.l.s4 1983009808
    %v1150 = vunpack.c.0.s8 %v1149
    %v1151 = vperm.slane %v1147, %v1150
    %v1152 = vrot.slane %v1151, 4
    %v1153 = vsel %vm616, %v1152, %v1145
    %v1155 = vunpack.c.l.s4 1934713408
    %v1156 = vunpack.c.0.s8 %v1155
    %v1157 = vperm.slane %v1153, %v1156
    %v1158 = vrot.slane %v1157, 4
    %v1159 = vsel %vm616, 0, %v1158
    %v1160 = vrot.slane %v1116, 4
    %v1161 = vsel %vm616, %v1160, %v1112
    %v1163 = vunpack.c.l.s4 1983009808
    %v1164 = vunpack.c.0.s8 %v1163
    %v1165 = vperm.slane %v1161, %v1164
    %v1166 = vrot.slane %v1118, 4
    %v1167 = vsel %vm616, %v1166, %v1114
    %v1169 = vunpack.c.l.s4 1983009808
    %v1170 = vunpack.c.0.s8 %v1169
    %v1171 = vperm.slane %v1167, %v1170
    %v1172 = vrot.slane %v1171, 4
    %v1173 = vsel %vm616, %v1172, %v1165
    %v1175 = vunpack.c.l.s4 1934713408
    %v1176 = vunpack.c.0.s8 %v1175
    %v1177 = vperm.slane %v1173, %v1176
    %v1178 = vrot.slane %v1177, 4
    %v1179 = vsel %vm616, 0, %v1178
    %v1180 = vrot.slane %v1117, 4
    %v1181 = vsel %vm616, %v1180, %v1113
    %v1183 = vunpack.c.l.s4 1983009808
    %v1184 = vunpack.c.0.s8 %v1183
    %v1185 = vperm.slane %v1181, %v1184
    %v1186 = vrot.slane %v1119, 4
    %v1187 = vsel %vm616, %v1186, %v1115
    %v1189 = vunpack.c.l.s4 1983009808
    %v1190 = vunpack.c.0.s8 %v1189
    %v1191 = vperm.slane %v1187, %v1190
    %v1192 = vrot.slane %v1191, 4
    %v1193 = vsel %vm616, %v1192, %v1185
    %v1195 = vunpack.c.l.s4 1934713408
    %v1196 = vunpack.c.0.s8 %v1195
    %v1197 = vperm.slane %v1193, %v1196
    %v1198 = vrot.slane %v1197, 4
    %v1199 = vsel %vm616, 0, %v1198
    %v1202 = vpack.i.b16 %v1157, %v1137
    %v1203 = vshrl.u32 %v1137, 16
    %v1204 = vshrl.u32 %v1157, 16
    %v1205 = vpack.i.b16 %v1204, %v1203
    %v1208 = vpack.i.b16 %v1159, %v1139
    %v1209 = vshrl.u32 %v1139, 16
    %v1210 = vshrl.u32 %v1159, 16
    %v1211 = vpack.i.b16 %v1210, %v1209
    %v1214 = vpack.i.b16 %v1197, %v1177
    %v1215 = vshrl.u32 %v1177, 16
    %v1216 = vshrl.u32 %v1197, 16
    %v1217 = vpack.i.b16 %v1216, %v1215
    %v1220 = vpack.i.b16 %v1199, %v1179
    %v1221 = vshrl.u32 %v1179, 16
    %v1222 = vshrl.u32 %v1199, 16
    %v1223 = vpack.i.b16 %v1222, %v1221
    %v1224 = vunpack.c.l.b16 %v698
    %v1225 = vunpack.c.l.b16 %v710
    %v1226 = vpack.c.b16 %v1225, %v1224
    %v1227 = vunpack.c.l.b16 %v950
    %v1228 = vunpack.c.l.b16 %v962
    %v1229 = vpack.c.b16 %v1228, %v1227
    %vm1230 = vcmask 261120
    %v1232 = vsel %vm1230, %v1226, 0
    %v1235 = vsel %vm1230, %v1229, 0
    %1237 = vmatpush.bf16.xpose.msra.mxu0 0
    %1238 = vmatpush.bf16.xpose.msra.mxu0 0
    %1239 = vmatpush.bf16.xpose.msra.mxu0 0
    %1240 = vmatpush.bf16.xpose.msra.mxu0 0
    %1241 = vmatpush.bf16.xpose.msra.mxu0 0
    %1242 = vmatpush.bf16.xpose.msra.mxu0 0
    %1243 = vmatpush.bf16.xpose.msra.mxu0 0
    %1244 = vmatpush.bf16.xpose.msra.mxu0 %v1235
    %1245 = vmatmul.bf16.gmra.mxu0 %v1232
    %v1246 = vpop.f32.mrf.mxu0
    %v1247 = vadd.f32 0.0, %v1246
    %v1248 = vpop.f32.mrf.mxu0
    %v1249 = vadd.f32 0.0, %v1248
    %1250 = vdwg.mxu0
    %v1251 = vunpack.c.l.b16 %v701
    %v1252 = vunpack.c.l.b16 %v713
    %v1253 = vpack.c.b16 %v1252, %v1251
    %v1254 = vunpack.c.l.b16 %v953
    %v1255 = vunpack.c.l.b16 %v965
    %v1256 = vpack.c.b16 %v1255, %v1254
    %v1258 = vsel %vm1230, %v1253, 0
    %v1261 = vsel %vm1230, %v1256, 0
    %1263 = vmatpush.bf16.xpose.msra.mxu0 0
    %1264 = vmatpush.bf16.xpose.msra.mxu0 0
    %1265 = vmatpush.bf16.xpose.msra.mxu0 0
    %1266 = vmatpush.bf16.xpose.msra.mxu0 0
    %1267 = vmatpush.bf16.xpose.msra.mxu0 0
    %1268 = vmatpush.bf16.xpose.msra.mxu0 0
    %1269 = vmatpush.bf16.xpose.msra.mxu0 0
    %1270 = vmatpush.bf16.xpose.msra.mxu0 %v1261
    %1271 = vmatmul.bf16.gmra.mxu0 %v1258
    %v1272 = vpop.f32.mrf.mxu0
    %v1273 = vadd.f32 0.0, %v1272
    %v1274 = vpop.f32.mrf.mxu0
    %v1275 = vadd.f32 0.0, %v1274
    %1276 = vdwg.mxu0
    %v1277 = vunpack.c.l.b16 %v704
    %v1278 = vunpack.c.l.b16 %v716
    %v1279 = vpack.c.b16 %v1278, %v1277
    %v1280 = vunpack.c.l.b16 %v956
    %v1281 = vunpack.c.l.b16 %v968
    %v1282 = vpack.c.b16 %v1281, %v1280
    %v1284 = vsel %vm1230, %v1279, 0
    %v1287 = vsel %vm1230, %v1282, 0
    %1289 = vmatpush.bf16.xpose.msra.mxu0 0
    %1290 = vmatpush.bf16.xpose.msra.mxu0 0
    %1291 = vmatpush.bf16.xpose.msra.mxu0 0
    %1292 = vmatpush.bf16.xpose.msra.mxu0 0
    %1293 = vmatpush.bf16.xpose.msra.mxu0 0
    %1294 = vmatpush.bf16.xpose.msra.mxu0 0
    %1295 = vmatpush.bf16.xpose.msra.mxu0 0
    %1296 = vmatpush.bf16.xpose.msra.mxu0 %v1287
    %1297 = vmatmul.bf16.gmra.mxu0 %v1284
    %v1298 = vpop.f32.mrf.mxu0
    %v1299 = vadd.f32 0.0, %v1298
    %v1300 = vpop.f32.mrf.mxu0
    %v1301 = vadd.f32 0.0, %v1300
    %1302 = vdwg.mxu0
    %v1303 = vunpack.c.l.b16 %v707
    %v1304 = vunpack.c.l.b16 %v719
    %v1305 = vpack.c.b16 %v1304, %v1303
    %v1306 = vunpack.c.l.b16 %v959
    %v1307 = vunpack.c.l.b16 %v971
    %v1308 = vpack.c.b16 %v1307, %v1306
    %v1310 = vsel %vm1230, %v1305, 0
    %v1313 = vsel %vm1230, %v1308, 0
    %1315 = vmatpush.bf16.xpose.msra.mxu0 0
    %1316 = vmatpush.bf16.xpose.msra.mxu0 0
    %1317 = vmatpush.bf16.xpose.msra.mxu0 0
    %1318 = vmatpush.bf16.xpose.msra.mxu0 0
    %1319 = vmatpush.bf16.xpose.msra.mxu0 0
    %1320 = vmatpush.bf16.xpose.msra.mxu0 0
    %1321 = vmatpush.bf16.xpose.msra.mxu0 0
    %1322 = vmatpush.bf16.xpose.msra.mxu0 %v1313
    %1323 = vmatmul.bf16.gmra.mxu0 %v1310
    %v1324 = vpop.f32.mrf.mxu0
    %v1325 = vadd.f32 0.0, %v1324
    %v1326 = vpop.f32.mrf.mxu0
    %v1327 = vadd.f32 0.0, %v1326
    %1328 = vdwg.mxu0
    %v1329 = vsel %vm464, 1, 0
    %v1330 = vsel %vm465, 1, 0
    %vm1331 = vcmp.eq.s32.totalorder %v1329, 1
    %vm1332 = vcmp.eq.s32.totalorder %v1330, 1
    %v1333 = vsel %vm1331, %v1247, -1e+30
    %v1334 = vsel %vm1332, %v1249, -1e+30
    %v1335 = vsel %vm1331, %v1273, -1e+30
    %v1336 = vsel %vm1332, %v1275, -1e+30
    %v1337 = vsel %vm1331, %v1299, -1e+30
    %v1338 = vsel %vm1332, %v1301, -1e+30
    %v1339 = vsel %vm1331, %v1325, -1e+30
    %v1340 = vsel %vm1332, %v1327, -1e+30
    %vm1341 = vcmask 130048
    %v1342 = vsel %vm1341, %v1333, -inf
    %1343 = vmax.xlane.f32.xlu0 %v1342
    %v1344 = vpop.xlane.xlu0 %1343
    %v1345 = vsel %vm1341, %v1334, -inf
    %1346 = vmax.xlane.f32.xlu0 %v1345
    %v1347 = vpop.xlane.xlu0 %1346
    %v1348 = vsel %vm1341, %v1335, -inf
    %1349 = vmax.xlane.f32.xlu0 %v1348
    %v1350 = vpop.xlane.xlu0 %1349
    %v1351 = vsel %vm1341, %v1336, -inf
    %1352 = vmax.xlane.f32.xlu0 %v1351
    %v1353 = vpop.xlane.xlu0 %1352
    %v1354 = vsel %vm1341, %v1337, -inf
    %1355 = vmax.xlane.f32.xlu0 %v1354
    %v1356 = vpop.xlane.xlu0 %1355
    %v1357 = vsel %vm1341, %v1338, -inf
    %1358 = vmax.xlane.f32.xlu0 %v1357
    %v1359 = vpop.xlane.xlu0 %1358
    %v1360 = vsel %vm1341, %v1339, -inf
    %1361 = vmax.xlane.f32.xlu0 %v1360
    %v1362 = vpop.xlane.xlu0 %1361
    %v1363 = vsel %vm1341, %v1340, -inf
    %1364 = vmax.xlane.f32.xlu0 %v1363
    %v1365 = vpop.xlane.xlu0 %1364
    %v1366 = vsub.f32 %v1333, %v1344
    %v1367 = vsub.f32 %v1334, %v1347
    %v1368 = vsub.f32 %v1335, %v1350
    %v1369 = vsub.f32 %v1336, %v1353
    %v1370 = vsub.f32 %v1337, %v1356
    %v1371 = vsub.f32 %v1338, %v1359
    %v1372 = vsub.f32 %v1339, %v1362
    %v1373 = vsub.f32 %v1340, %v1365
    %v1374 = vmul.f32 %v1366, 1.442695
    %v1375 = vpow.pop %v1374
    %v1376 = vmul.f32 %v1367, 1.442695
    %v1377 = vpow.pop %v1376
    %v1378 = vmul.f32 %v1368, 1.442695
    %v1379 = vpow.pop %v1378
    %v1380 = vmul.f32 %v1369, 1.442695
    %v1381 = vpow.pop %v1380
    %v1382 = vmul.f32 %v1370, 1.442695
    %v1383 = vpow.pop %v1382
    %v1384 = vmul.f32 %v1371, 1.442695
    %v1385 = vpow.pop %v1384
    %v1386 = vmul.f32 %v1372, 1.442695
    %v1387 = vpow.pop %v1386
    %v1388 = vmul.f32 %v1373, 1.442695
    %v1389 = vpow.pop %v1388
    %v1390 = vsel %vm1341, %v1375, 0.0
    %1391 = vadd.xlane.f32.xlu0 %v1390
    %v1392 = vpop.xlane.xlu0 %1391
    %v1393 = vsel %vm1341, %v1377, 0.0
    %1394 = vadd.xlane.f32.xlu0 %v1393
    %v1395 = vpop.xlane.xlu0 %1394
    %v1396 = vsel %vm1341, %v1379, 0.0
    %1397 = vadd.xlane.f32.xlu0 %v1396
    %v1398 = vpop.xlane.xlu0 %1397
    %v1399 = vsel %vm1341, %v1381, 0.0
    %1400 = vadd.xlane.f32.xlu0 %v1399
    %v1401 = vpop.xlane.xlu0 %1400
    %v1402 = vsel %vm1341, %v1383, 0.0
    %1403 = vadd.xlane.f32.xlu0 %v1402
    %v1404 = vpop.xlane.xlu0 %1403
    %v1405 = vsel %vm1341, %v1385, 0.0
    %1406 = vadd.xlane.f32.xlu0 %v1405
    %v1407 = vpop.xlane.xlu0 %1406
    %v1408 = vsel %vm1341, %v1387, 0.0
    %1409 = vadd.xlane.f32.xlu0 %v1408
    %v1410 = vpop.xlane.xlu0 %1409
    %v1411 = vsel %vm1341, %v1389, 0.0
    %1412 = vadd.xlane.f32.xlu0 %v1411
    %v1413 = vpop.xlane.xlu0 %1412
    %v1414 = vrcp.pop %v1392
    %v1415 = vrcp.pop %v1395
    %v1416 = vrcp.pop %v1398
    %v1417 = vrcp.pop %v1401
    %v1418 = vrcp.pop %v1404
    %v1419 = vrcp.pop %v1407
    %v1420 = vrcp.pop %v1410
    %v1421 = vrcp.pop %v1413
    %v1422 = vmul.f32 %v1375, %v1414
    %v1423 = vmul.f32 %v1377, %v1415
    %v1424 = vmul.f32 %v1379, %v1416
    %v1425 = vmul.f32 %v1381, %v1417
    %v1426 = vmul.f32 %v1383, %v1418
    %v1427 = vmul.f32 %v1385, %v1419
    %v1428 = vmul.f32 %v1387, %v1420
    %v1429 = vmul.f32 %v1389, %v1421
    %v1430 = vpack.c.bf16 %v1422, %v1422
    %v1431 = vpack.c.bf16 %v1423, %v1423
    %v1432 = vpack.c.bf16 %v1424, %v1424
    %v1433 = vpack.c.bf16 %v1425, %v1425
    %v1434 = vpack.c.bf16 %v1426, %v1426
    %v1435 = vpack.c.bf16 %v1427, %v1427
    %v1436 = vpack.c.bf16 %v1428, %v1428
    %v1437 = vpack.c.bf16 %v1429, %v1429
    %v1440 = vunpack.c.l.b16 %v1430
    %v1441 = vunpack.c.l.b16 %v1431
    %v1442 = vpack.c.b16 %v1441, %v1440
    %v1443 = vunpack.c.l.b16 %v1202
    %v1444 = vunpack.c.l.b16 %v1214
    %v1445 = vpack.c.b16 %v1444, %v1443
    %v1448 = vsel %vm1341, %v1442, 0
    %1450 = vmatpush.bf16.msra.mxu0 0
    %1451 = vmatpush.bf16.msra.mxu0 0
    %1452 = vmatpush.bf16.msra.mxu0 0
    %1453 = vmatpush.bf16.msra.mxu0 0
    %1454 = vmatpush.bf16.msra.mxu0 0
    %1455 = vmatpush.bf16.msra.mxu0 0
    %1456 = vmatpush.bf16.msra.mxu0 0
    %1457 = vmatpush.bf16.msra.mxu0 %v1445
    %1458 = vmatmul.bf16.gmra.mxu0 %v1448
    %v1459 = vpop.f32.mrf.mxu0
    %v1460 = vadd.f32 0.0, %v1459
    %v1461 = vpop.f32.mrf.mxu0
    %v1462 = vadd.f32 0.0, %v1461
    %1463 = vdwg.mxu0
    %v1466 = vunpack.c.l.b16 %v1432
    %v1467 = vunpack.c.l.b16 %v1433
    %v1468 = vpack.c.b16 %v1467, %v1466
    %v1469 = vunpack.c.l.b16 %v1205
    %v1470 = vunpack.c.l.b16 %v1217
    %v1471 = vpack.c.b16 %v1470, %v1469
    %v1474 = vsel %vm1341, %v1468, 0
    %1476 = vmatpush.bf16.msra.mxu0 0
    %1477 = vmatpush.bf16.msra.mxu0 0
    %1478 = vmatpush.bf16.msra.mxu0 0
    %1479 = vmatpush.bf16.msra.mxu0 0
    %1480 = vmatpush.bf16.msra.mxu0 0
    %1481 = vmatpush.bf16.msra.mxu0 0
    %1482 = vmatpush.bf16.msra.mxu0 0
    %1483 = vmatpush.bf16.msra.mxu0 %v1471
    %1484 = vmatmul.bf16.gmra.mxu0 %v1474
    %v1485 = vpop.f32.mrf.mxu0
    %v1486 = vadd.f32 0.0, %v1485
    %v1487 = vpop.f32.mrf.mxu0
    %v1488 = vadd.f32 0.0, %v1487
    %1489 = vdwg.mxu0
    %v1492 = vunpack.c.l.b16 %v1434
    %v1493 = vunpack.c.l.b16 %v1435
    %v1494 = vpack.c.b16 %v1493, %v1492
    %v1495 = vunpack.c.l.b16 %v1208
    %v1496 = vunpack.c.l.b16 %v1220
    %v1497 = vpack.c.b16 %v1496, %v1495
    %v1500 = vsel %vm1341, %v1494, 0
    %1502 = vmatpush.bf16.msra.mxu0 0
    %1503 = vmatpush.bf16.msra.mxu0 0
    %1504 = vmatpush.bf16.msra.mxu0 0
    %1505 = vmatpush.bf16.msra.mxu0 0
    %1506 = vmatpush.bf16.msra.mxu0 0
    %1507 = vmatpush.bf16.msra.mxu0 0
    %1508 = vmatpush.bf16.msra.mxu0 0
    %1509 = vmatpush.bf16.msra.mxu0 %v1497
    %1510 = vmatmul.bf16.gmra.mxu0 %v1500
    %v1511 = vpop.f32.mrf.mxu0
    %v1512 = vadd.f32 0.0, %v1511
    %v1513 = vpop.f32.mrf.mxu0
    %v1514 = vadd.f32 0.0, %v1513
    %1515 = vdwg.mxu0
    %v1518 = vunpack.c.l.b16 %v1436
    %v1519 = vunpack.c.l.b16 %v1437
    %v1520 = vpack.c.b16 %v1519, %v1518
    %v1521 = vunpack.c.l.b16 %v1211
    %v1522 = vunpack.c.l.b16 %v1223
    %v1523 = vpack.c.b16 %v1522, %v1521
    %v1526 = vsel %vm1341, %v1520, 0
    %1528 = vmatpush.bf16.msra.mxu0 0
    %1529 = vmatpush.bf16.msra.mxu0 0
    %1530 = vmatpush.bf16.msra.mxu0 0
    %1531 = vmatpush.bf16.msra.mxu0 0
    %1532 = vmatpush.bf16.msra.mxu0 0
    %1533 = vmatpush.bf16.msra.mxu0 0
    %1534 = vmatpush.bf16.msra.mxu0 0
    %1535 = vmatpush.bf16.msra.mxu0 %v1523
    %1536 = vmatmul.bf16.gmra.mxu0 %v1526
    %v1537 = vpop.f32.mrf.mxu0
    %v1538 = vadd.f32 0.0, %v1537
    %v1539 = vpop.f32.mrf.mxu0
    %v1540 = vadd.f32 0.0, %v1539
    %1541 = vdwg.mxu0
    %v1542 = vrot.slane %v1512, 4
    %v1543 = vsel %vm487, %v1542, %v1460
    %v1544 = vrot.slane %v1460, 4
    %v1545 = vsel %vm487, %v1512, %v1544
    %v1547 = vunpack.c.l.s4 1983009808
    %v1548 = vunpack.c.0.s8 %v1547
    %v1549 = vperm.slane %v1543, %v1548
    %v1551 = vunpack.c.l.s4 1983009808
    %v1552 = vunpack.c.0.s8 %v1551
    %v1553 = vperm.slane %v1545, %v1552
    %v1554 = vrot.slane %v1538, 4
    %v1555 = vsel %vm487, %v1554, %v1486
    %v1556 = vrot.slane %v1486, 4
    %v1557 = vsel %vm487, %v1538, %v1556
    %v1559 = vunpack.c.l.s4 1983009808
    %v1560 = vunpack.c.0.s8 %v1559
    %v1561 = vperm.slane %v1555, %v1560
    %v1563 = vunpack.c.l.s4 1983009808
    %v1564 = vunpack.c.0.s8 %v1563
    %v1565 = vperm.slane %v1557, %v1564
    %v1566 = vrot.slane %v1561, 4
    %v1567 = vsel %vm487, %v1566, %v1549
    %v1568 = vrot.slane %v1549, 4
    %v1569 = vsel %vm487, %v1561, %v1568
    %v1571 = vunpack.c.l.s4 1934713408
    %v1572 = vunpack.c.0.s8 %v1571
    %v1573 = vperm.slane %v1567, %v1572
    %v1575 = vunpack.c.l.s4 1934713408
    %v1576 = vunpack.c.0.s8 %v1575
    %v1577 = vperm.slane %v1569, %v1576
    %v1578 = vrot.slane %v1565, 4
    %v1579 = vsel %vm487, %v1578, %v1553
    %v1580 = vrot.slane %v1553, 4
    %v1581 = vsel %vm487, %v1565, %v1580
    %v1583 = vunpack.c.l.s4 1934713408
    %v1584 = vunpack.c.0.s8 %v1583
    %v1585 = vperm.slane %v1579, %v1584
    %v1587 = vunpack.c.l.s4 1934713408
    %v1588 = vunpack.c.0.s8 %v1587
    %v1589 = vperm.slane %v1581, %v1588
    %v1590 = vrot.slane %v1573, 4
    %v1591 = vsel %vm487, 0.0, %v1590
    %v1592 = vrot.slane %v1577, 4
    %v1593 = vsel %vm487, 0.0, %v1592
    %v1594 = vrot.slane %v1585, 4
    %v1595 = vsel %vm487, 0.0, %v1594
    %v1596 = vrot.slane %v1589, 4
    %v1597 = vsel %vm487, 0.0, %v1596
    %v1598 = vrot.slane %v1514, 4
    %v1599 = vsel %vm487, %v1598, %v1462
    %v1600 = vrot.slane %v1462, 4
    %v1601 = vsel %vm487, %v1514, %v1600
    %v1603 = vunpack.c.l.s4 1983009808
    %v1604 = vunpack.c.0.s8 %v1603
    %v1605 = vperm.slane %v1599, %v1604
    %v1607 = vunpack.c.l.s4 1983009808
    %v1608 = vunpack.c.0.s8 %v1607
    %v1609 = vperm.slane %v1601, %v1608
    %v1610 = vrot.slane %v1540, 4
    %v1611 = vsel %vm487, %v1610, %v1488
    %v1612 = vrot.slane %v1488, 4
    %v1613 = vsel %vm487, %v1540, %v1612
    %v1615 = vunpack.c.l.s4 1983009808
    %v1616 = vunpack.c.0.s8 %v1615
    %v1617 = vperm.slane %v1611, %v1616
    %v1619 = vunpack.c.l.s4 1983009808
    %v1620 = vunpack.c.0.s8 %v1619
    %v1621 = vperm.slane %v1613, %v1620
    %v1622 = vrot.slane %v1617, 4
    %v1623 = vsel %vm487, %v1622, %v1605
    %v1624 = vrot.slane %v1605, 4
    %v1625 = vsel %vm487, %v1617, %v1624
    %v1627 = vunpack.c.l.s4 1934713408
    %v1628 = vunpack.c.0.s8 %v1627
    %v1629 = vperm.slane %v1623, %v1628
    %v1631 = vunpack.c.l.s4 1934713408
    %v1632 = vunpack.c.0.s8 %v1631
    %v1633 = vperm.slane %v1625, %v1632
    %v1634 = vrot.slane %v1621, 4
    %v1635 = vsel %vm487, %v1634, %v1609
    %v1636 = vrot.slane %v1609, 4
    %v1637 = vsel %vm487, %v1621, %v1636
    %v1639 = vunpack.c.l.s4 1934713408
    %v1640 = vunpack.c.0.s8 %v1639
    %v1641 = vperm.slane %v1635, %v1640
    %v1643 = vunpack.c.l.s4 1934713408
    %v1644 = vunpack.c.0.s8 %v1643
    %v1645 = vperm.slane %v1637, %v1644
    %v1646 = vrot.slane %v1629, 4
    %v1647 = vsel %vm487, 0.0, %v1646
    %v1648 = vrot.slane %v1633, 4
    %v1649 = vsel %vm487, 0.0, %v1648
    %v1650 = vrot.slane %v1641, 4
    %v1651 = vsel %vm487, 0.0, %v1650
    %v1652 = vrot.slane %v1645, 4
    %v1653 = vsel %vm487, 0.0, %v1652
    %v1654 = vsel %vm487, %v1592, %v1573
    %v1656 = vunpack.c.l.s4 1983009808
    %v1657 = vunpack.c.0.s8 %v1656
    %v1658 = vperm.slane %v1654, %v1657
    %v1659 = vrot.slane %v1593, 4
    %v1660 = vsel %vm487, %v1659, %v1591
    %v1662 = vunpack.c.l.s4 1983009808
    %v1663 = vunpack.c.0.s8 %v1662
    %v1664 = vperm.slane %v1660, %v1663
    %v1665 = vsel %vm487, %v1596, %v1585
    %v1667 = vunpack.c.l.s4 1983009808
    %v1668 = vunpack.c.0.s8 %v1667
    %v1669 = vperm.slane %v1665, %v1668
    %v1670 = vrot.slane %v1597, 4
    %v1671 = vsel %vm487, %v1670, %v1595
    %v1673 = vunpack.c.l.s4 1983009808
    %v1674 = vunpack.c.0.s8 %v1673
    %v1675 = vperm.slane %v1671, %v1674
    %v1676 = vrot.slane %v1664, 4
    %v1677 = vsel %vm487, %v1676, %v1658
    %v1678 = vrot.slane %v1658, 4
    %v1679 = vsel %vm487, %v1664, %v1678
    %v1681 = vunpack.c.l.s4 1934713408
    %v1682 = vunpack.c.0.s8 %v1681
    %v1683 = vperm.slane %v1677, %v1682
    %v1685 = vunpack.c.l.s4 1934713408
    %v1686 = vunpack.c.0.s8 %v1685
    %v1687 = vperm.slane %v1679, %v1686
    %v1688 = vrot.slane %v1675, 4
    %v1689 = vsel %vm487, %v1688, %v1669
    %v1690 = vrot.slane %v1669, 4
    %v1691 = vsel %vm487, %v1675, %v1690
    %v1693 = vunpack.c.l.s4 1934713408
    %v1694 = vunpack.c.0.s8 %v1693
    %v1695 = vperm.slane %v1689, %v1694
    %v1697 = vunpack.c.l.s4 1934713408
    %v1698 = vunpack.c.0.s8 %v1697
    %v1699 = vperm.slane %v1691, %v1698
    %v1700 = vrot.slane %v1695, 4
    %v1701 = vsel %vm487, %v1700, %v1683
    %v1702 = vrot.slane %v1683, 4
    %v1703 = vsel %vm487, %v1695, %v1702
    %v1704 = vrot.slane %v1699, 4
    %v1705 = vsel %vm487, %v1704, %v1687
    %v1706 = vrot.slane %v1687, 4
    %v1707 = vsel %vm487, %v1699, %v1706
    %v1708 = vsel %vm487, %v1648, %v1629
    %v1710 = vunpack.c.l.s4 1983009808
    %v1711 = vunpack.c.0.s8 %v1710
    %v1712 = vperm.slane %v1708, %v1711
    %v1713 = vrot.slane %v1649, 4
    %v1714 = vsel %vm487, %v1713, %v1647
    %v1716 = vunpack.c.l.s4 1983009808
    %v1717 = vunpack.c.0.s8 %v1716
    %v1718 = vperm.slane %v1714, %v1717
    %v1719 = vsel %vm487, %v1652, %v1641
    %v1721 = vunpack.c.l.s4 1983009808
    %v1722 = vunpack.c.0.s8 %v1721
    %v1723 = vperm.slane %v1719, %v1722
    %v1724 = vrot.slane %v1653, 4
    %v1725 = vsel %vm487, %v1724, %v1651
    %v1727 = vunpack.c.l.s4 1983009808
    %v1728 = vunpack.c.0.s8 %v1727
    %v1729 = vperm.slane %v1725, %v1728
    %v1730 = vrot.slane %v1718, 4
    %v1731 = vsel %vm487, %v1730, %v1712
    %v1732 = vrot.slane %v1712, 4
    %v1733 = vsel %vm487, %v1718, %v1732
    %v1735 = vunpack.c.l.s4 1934713408
    %v1736 = vunpack.c.0.s8 %v1735
    %v1737 = vperm.slane %v1731, %v1736
    %v1739 = vunpack.c.l.s4 1934713408
    %v1740 = vunpack.c.0.s8 %v1739
    %v1741 = vperm.slane %v1733, %v1740
    %v1742 = vrot.slane %v1729, 4
    %v1743 = vsel %vm487, %v1742, %v1723
    %v1744 = vrot.slane %v1723, 4
    %v1745 = vsel %vm487, %v1729, %v1744
    %v1747 = vunpack.c.l.s4 1934713408
    %v1748 = vunpack.c.0.s8 %v1747
    %v1749 = vperm.slane %v1743, %v1748
    %v1751 = vunpack.c.l.s4 1934713408
    %v1752 = vunpack.c.0.s8 %v1751
    %v1753 = vperm.slane %v1745, %v1752
    %v1754 = vrot.slane %v1749, 4
    %v1755 = vsel %vm487, %v1754, %v1737
    %v1756 = vrot.slane %v1737, 4
    %v1757 = vsel %vm487, %v1749, %v1756
    %v1758 = vrot.slane %v1753, 4
    %v1759 = vsel %vm487, %v1758, %v1741
    %v1760 = vrot.slane %v1741, 4
    %v1761 = vsel %vm487, %v1753, %v1760
    %1764 = vrot.lane.b32.xlu0 %v1703, 32
    %v1765 = vpop.permute.xlu0 %1764
    %1766 = vrot.lane.b32.xlu0 %v1757, 32
    %v1767 = vpop.permute.xlu0 %1766
    %1772 = vrot.lane.b32.xlu0 %v1705, 64
    %v1773 = vpop.permute.xlu0 %1772
    %1774 = vrot.lane.b32.xlu0 %v1759, 64
    %v1775 = vpop.permute.xlu0 %1774
    %1780 = vrot.lane.b32.xlu0 %v1707, 96
    %v1781 = vpop.permute.xlu0 %1780
    %1782 = vrot.lane.b32.xlu0 %v1761, 96
    %v1783 = vpop.permute.xlu0 %1782
    %v1786 = vsel %vm1230, %v1701, %v1765
    %v1787 = vsel %vm1230, %v1755, %v1767
    %vm1788 = vcmask 523264
    %v1789 = vsel %vm1788, %v1786, %v1773
    %v1790 = vsel %vm1788, %v1787, %v1775
    %vm1791 = vcmask 785408
    %v1792 = vsel %vm1791, %v1789, %v1781
    %v1793 = vsel %vm1791, %v1790, %v1783
    %1796 = vrot.lane.b32.xlu0 %v417, 96
    %v1797 = vpop.permute.xlu0 %1796
    %1798 = vrot.lane.b32.xlu0 %v419, 96
    %v1799 = vpop.permute.xlu0 %1798
    %1802 = vrot.lane.b32.xlu0 %v417, 64
    %v1803 = vpop.permute.xlu0 %1802
    %1804 = vrot.lane.b32.xlu0 %v419, 64
    %v1805 = vpop.permute.xlu0 %1804
    %1808 = vrot.lane.b32.xlu0 %v417, 32
    %v1809 = vpop.permute.xlu0 %1808
    %1810 = vrot.lane.b32.xlu0 %v419, 32
    %v1811 = vpop.permute.xlu0 %1810
    %v1814 = vrot.slane %v1803, 4
    %v1815 = vsel %vm487, %v1814, %v417
    %v1816 = vrot.slane %v417, 4
    %v1817 = vsel %vm487, %v1803, %v1816
    %v1819 = vunpack.c.l.s4 1983009808
    %v1820 = vunpack.c.0.s8 %v1819
    %v1821 = vperm.slane %v1815, %v1820
    %v1823 = vunpack.c.l.s4 1983009808
    %v1824 = vunpack.c.0.s8 %v1823
    %v1825 = vperm.slane %v1817, %v1824
    %v1826 = vrot.slane %v1809, 4
    %v1827 = vsel %vm487, %v1826, %v1797
    %v1828 = vrot.slane %v1797, 4
    %v1829 = vsel %vm487, %v1809, %v1828
    %v1831 = vunpack.c.l.s4 1983009808
    %v1832 = vunpack.c.0.s8 %v1831
    %v1833 = vperm.slane %v1827, %v1832
    %v1835 = vunpack.c.l.s4 1983009808
    %v1836 = vunpack.c.0.s8 %v1835
    %v1837 = vperm.slane %v1829, %v1836
    %v1838 = vrot.slane %v1833, 4
    %v1839 = vsel %vm487, %v1838, %v1821
    %v1840 = vrot.slane %v1821, 4
    %v1841 = vsel %vm487, %v1833, %v1840
    %v1843 = vunpack.c.l.s4 1934713408
    %v1844 = vunpack.c.0.s8 %v1843
    %v1845 = vperm.slane %v1839, %v1844
    %v1847 = vunpack.c.l.s4 1934713408
    %v1848 = vunpack.c.0.s8 %v1847
    %v1849 = vperm.slane %v1841, %v1848
    %v1850 = vrot.slane %v1837, 4
    %v1851 = vsel %vm487, %v1850, %v1825
    %v1852 = vrot.slane %v1825, 4
    %v1853 = vsel %vm487, %v1837, %v1852
    %v1855 = vunpack.c.l.s4 1934713408
    %v1856 = vunpack.c.0.s8 %v1855
    %v1857 = vperm.slane %v1851, %v1856
    %v1859 = vunpack.c.l.s4 1934713408
    %v1860 = vunpack.c.0.s8 %v1859
    %v1861 = vperm.slane %v1853, %v1860
    %v1862 = vrot.slane %v1845, 4
    %v1863 = vsel %vm487, 0.0, %v1862
    %v1864 = vrot.slane %v1849, 4
    %v1865 = vsel %vm487, 0.0, %v1864
    %v1866 = vrot.slane %v1857, 4
    %v1867 = vsel %vm487, 0.0, %v1866
    %v1868 = vrot.slane %v1861, 4
    %v1869 = vsel %vm487, 0.0, %v1868
    %v1870 = vrot.slane %v1805, 4
    %v1871 = vsel %vm487, %v1870, %v419
    %v1872 = vrot.slane %v419, 4
    %v1873 = vsel %vm487, %v1805, %v1872
    %v1875 = vunpack.c.l.s4 1983009808
    %v1876 = vunpack.c.0.s8 %v1875
    %v1877 = vperm.slane %v1871, %v1876
    %v1879 = vunpack.c.l.s4 1983009808
    %v1880 = vunpack.c.0.s8 %v1879
    %v1881 = vperm.slane %v1873, %v1880
    %v1882 = vrot.slane %v1811, 4
    %v1883 = vsel %vm487, %v1882, %v1799
    %v1884 = vrot.slane %v1799, 4
    %v1885 = vsel %vm487, %v1811, %v1884
    %v1887 = vunpack.c.l.s4 1983009808
    %v1888 = vunpack.c.0.s8 %v1887
    %v1889 = vperm.slane %v1883, %v1888
    %v1891 = vunpack.c.l.s4 1983009808
    %v1892 = vunpack.c.0.s8 %v1891
    %v1893 = vperm.slane %v1885, %v1892
    %v1894 = vrot.slane %v1889, 4
    %v1895 = vsel %vm487, %v1894, %v1877
    %v1896 = vrot.slane %v1877, 4
    %v1897 = vsel %vm487, %v1889, %v1896
    %v1899 = vunpack.c.l.s4 1934713408
    %v1900 = vunpack.c.0.s8 %v1899
    %v1901 = vperm.slane %v1895, %v1900
    %v1903 = vunpack.c.l.s4 1934713408
    %v1904 = vunpack.c.0.s8 %v1903
    %v1905 = vperm.slane %v1897, %v1904
    %v1906 = vrot.slane %v1893, 4
    %v1907 = vsel %vm487, %v1906, %v1881
    %v1908 = vrot.slane %v1881, 4
    %v1909 = vsel %vm487, %v1893, %v1908
    %v1911 = vunpack.c.l.s4 1934713408
    %v1912 = vunpack.c.0.s8 %v1911
    %v1913 = vperm.slane %v1907, %v1912
    %v1915 = vunpack.c.l.s4 1934713408
    %v1916 = vunpack.c.0.s8 %v1915
    %v1917 = vperm.slane %v1909, %v1916
    %v1918 = vrot.slane %v1901, 4
    %v1919 = vsel %vm487, 0.0, %v1918
    %v1920 = vrot.slane %v1905, 4
    %v1921 = vsel %vm487, 0.0, %v1920
    %v1922 = vrot.slane %v1913, 4
    %v1923 = vsel %vm487, 0.0, %v1922
    %v1924 = vrot.slane %v1917, 4
    %v1925 = vsel %vm487, 0.0, %v1924
    %v1926 = vpack.c.bf16 %v1845, %v1845
    %v1927 = vpack.c.bf16 %v1863, %v1863
    %v1928 = vpack.c.bf16 %v1849, %v1849
    %v1929 = vpack.c.bf16 %v1865, %v1865
    %v1930 = vpack.c.bf16 %v1857, %v1857
    %v1931 = vpack.c.bf16 %v1867, %v1867
    %v1932 = vpack.c.bf16 %v1861, %v1861
    %v1933 = vpack.c.bf16 %v1869, %v1869
    %v1934 = vpack.c.bf16 %v1901, %v1901
    %v1935 = vpack.c.bf16 %v1919, %v1919
    %v1936 = vpack.c.bf16 %v1905, %v1905
    %v1937 = vpack.c.bf16 %v1921, %v1921
    %v1938 = vpack.c.bf16 %v1913, %v1913
    %v1939 = vpack.c.bf16 %v1923, %v1923
    %v1940 = vpack.c.bf16 %v1917, %v1917
    %v1941 = vpack.c.bf16 %v1925, %v1925
    %v1942 = vrot.slane %v1930, 4
    %v1943 = vsel %vm616, %v1942, %v1926
    %v1945 = vunpack.c.l.s4 1983009808
    %v1946 = vunpack.c.0.s8 %v1945
    %v1947 = vperm.slane %v1943, %v1946
    %v1948 = vrot.slane %v1932, 4
    %v1949 = vsel %vm616, %v1948, %v1928
    %v1951 = vunpack.c.l.s4 1983009808
    %v1952 = vunpack.c.0.s8 %v1951
    %v1953 = vperm.slane %v1949, %v1952
    %v1954 = vrot.slane %v1953, 4
    %v1955 = vsel %vm616, %v1954, %v1947
    %v1957 = vunpack.c.l.s4 1934713408
    %v1958 = vunpack.c.0.s8 %v1957
    %v1959 = vperm.slane %v1955, %v1958
    %v1960 = vrot.slane %v1959, 4
    %v1961 = vsel %vm616, 0, %v1960
    %v1962 = vrot.slane %v1931, 4
    %v1963 = vsel %vm616, %v1962, %v1927
    %v1965 = vunpack.c.l.s4 1983009808
    %v1966 = vunpack.c.0.s8 %v1965
    %v1967 = vperm.slane %v1963, %v1966
    %v1968 = vrot.slane %v1933, 4
    %v1969 = vsel %vm616, %v1968, %v1929
    %v1971 = vunpack.c.l.s4 1983009808
    %v1972 = vunpack.c.0.s8 %v1971
    %v1973 = vperm.slane %v1969, %v1972
    %v1974 = vrot.slane %v1973, 4
    %v1975 = vsel %vm616, %v1974, %v1967
    %v1977 = vunpack.c.l.s4 1934713408
    %v1978 = vunpack.c.0.s8 %v1977
    %v1979 = vperm.slane %v1975, %v1978
    %v1980 = vrot.slane %v1979, 4
    %v1981 = vsel %vm616, 0, %v1980
    %v1982 = vrot.slane %v1938, 4
    %v1983 = vsel %vm616, %v1982, %v1934
    %v1985 = vunpack.c.l.s4 1983009808
    %v1986 = vunpack.c.0.s8 %v1985
    %v1987 = vperm.slane %v1983, %v1986
    %v1988 = vrot.slane %v1940, 4
    %v1989 = vsel %vm616, %v1988, %v1936
    %v1991 = vunpack.c.l.s4 1983009808
    %v1992 = vunpack.c.0.s8 %v1991
    %v1993 = vperm.slane %v1989, %v1992
    %v1994 = vrot.slane %v1993, 4
    %v1995 = vsel %vm616, %v1994, %v1987
    %v1997 = vunpack.c.l.s4 1934713408
    %v1998 = vunpack.c.0.s8 %v1997
    %v1999 = vperm.slane %v1995, %v1998
    %v2000 = vrot.slane %v1999, 4
    %v2001 = vsel %vm616, 0, %v2000
    %v2002 = vrot.slane %v1939, 4
    %v2003 = vsel %vm616, %v2002, %v1935
    %v2005 = vunpack.c.l.s4 1983009808
    %v2006 = vunpack.c.0.s8 %v2005
    %v2007 = vperm.slane %v2003, %v2006
    %v2008 = vrot.slane %v1941, 4
    %v2009 = vsel %vm616, %v2008, %v1937
    %v2011 = vunpack.c.l.s4 1983009808
    %v2012 = vunpack.c.0.s8 %v2011
    %v2013 = vperm.slane %v2009, %v2012
    %v2014 = vrot.slane %v2013, 4
    %v2015 = vsel %vm616, %v2014, %v2007
    %v2017 = vunpack.c.l.s4 1934713408
    %v2018 = vunpack.c.0.s8 %v2017
    %v2019 = vperm.slane %v2015, %v2018
    %v2020 = vrot.slane %v2019, 4
    %v2021 = vsel %vm616, 0, %v2020
    %v2024 = vpack.i.b16 %v1979, %v1959
    %v2025 = vshrl.u32 %v1959, 16
    %v2026 = vshrl.u32 %v1979, 16
    %v2027 = vpack.i.b16 %v2026, %v2025
    %v2030 = vpack.i.b16 %v1981, %v1961
    %v2031 = vshrl.u32 %v1961, 16
    %v2032 = vshrl.u32 %v1981, 16
    %v2033 = vpack.i.b16 %v2032, %v2031
    %v2036 = vpack.i.b16 %v2019, %v1999
    %v2037 = vshrl.u32 %v1999, 16
    %v2038 = vshrl.u32 %v2019, 16
    %v2039 = vpack.i.b16 %v2038, %v2037
    %v2042 = vpack.i.b16 %v2021, %v2001
    %v2043 = vshrl.u32 %v2001, 16
    %v2044 = vshrl.u32 %v2021, 16
    %v2045 = vpack.i.b16 %v2044, %v2043
    %2048 = vrot.lane.b32.xlu0 %v436, 96
    %v2049 = vpop.permute.xlu0 %2048
    %2050 = vrot.lane.b32.xlu0 %v438, 96
    %v2051 = vpop.permute.xlu0 %2050
    %2054 = vrot.lane.b32.xlu0 %v436, 64
    %v2055 = vpop.permute.xlu0 %2054
    %2056 = vrot.lane.b32.xlu0 %v438, 64
    %v2057 = vpop.permute.xlu0 %2056
    %2060 = vrot.lane.b32.xlu0 %v436, 32
    %v2061 = vpop.permute.xlu0 %2060
    %2062 = vrot.lane.b32.xlu0 %v438, 32
    %v2063 = vpop.permute.xlu0 %2062
    %v2066 = vrot.slane %v2055, 4
    %v2067 = vsel %vm487, %v2066, %v436
    %v2068 = vrot.slane %v436, 4
    %v2069 = vsel %vm487, %v2055, %v2068
    %v2071 = vunpack.c.l.s4 1983009808
    %v2072 = vunpack.c.0.s8 %v2071
    %v2073 = vperm.slane %v2067, %v2072
    %v2075 = vunpack.c.l.s4 1983009808
    %v2076 = vunpack.c.0.s8 %v2075
    %v2077 = vperm.slane %v2069, %v2076
    %v2078 = vrot.slane %v2061, 4
    %v2079 = vsel %vm487, %v2078, %v2049
    %v2080 = vrot.slane %v2049, 4
    %v2081 = vsel %vm487, %v2061, %v2080
    %v2083 = vunpack.c.l.s4 1983009808
    %v2084 = vunpack.c.0.s8 %v2083
    %v2085 = vperm.slane %v2079, %v2084
    %v2087 = vunpack.c.l.s4 1983009808
    %v2088 = vunpack.c.0.s8 %v2087
    %v2089 = vperm.slane %v2081, %v2088
    %v2090 = vrot.slane %v2085, 4
    %v2091 = vsel %vm487, %v2090, %v2073
    %v2092 = vrot.slane %v2073, 4
    %v2093 = vsel %vm487, %v2085, %v2092
    %v2095 = vunpack.c.l.s4 1934713408
    %v2096 = vunpack.c.0.s8 %v2095
    %v2097 = vperm.slane %v2091, %v2096
    %v2099 = vunpack.c.l.s4 1934713408
    %v2100 = vunpack.c.0.s8 %v2099
    %v2101 = vperm.slane %v2093, %v2100
    %v2102 = vrot.slane %v2089, 4
    %v2103 = vsel %vm487, %v2102, %v2077
    %v2104 = vrot.slane %v2077, 4
    %v2105 = vsel %vm487, %v2089, %v2104
    %v2107 = vunpack.c.l.s4 1934713408
    %v2108 = vunpack.c.0.s8 %v2107
    %v2109 = vperm.slane %v2103, %v2108
    %v2111 = vunpack.c.l.s4 1934713408
    %v2112 = vunpack.c.0.s8 %v2111
    %v2113 = vperm.slane %v2105, %v2112
    %v2114 = vrot.slane %v2097, 4
    %v2115 = vsel %vm487, 0.0, %v2114
    %v2116 = vrot.slane %v2101, 4
    %v2117 = vsel %vm487, 0.0, %v2116
    %v2118 = vrot.slane %v2109, 4
    %v2119 = vsel %vm487, 0.0, %v2118
    %v2120 = vrot.slane %v2113, 4
    %v2121 = vsel %vm487, 0.0, %v2120
    %v2122 = vrot.slane %v2057, 4
    %v2123 = vsel %vm487, %v2122, %v438
    %v2124 = vrot.slane %v438, 4
    %v2125 = vsel %vm487, %v2057, %v2124
    %v2127 = vunpack.c.l.s4 1983009808
    %v2128 = vunpack.c.0.s8 %v2127
    %v2129 = vperm.slane %v2123, %v2128
    %v2131 = vunpack.c.l.s4 1983009808
    %v2132 = vunpack.c.0.s8 %v2131
    %v2133 = vperm.slane %v2125, %v2132
    %v2134 = vrot.slane %v2063, 4
    %v2135 = vsel %vm487, %v2134, %v2051
    %v2136 = vrot.slane %v2051, 4
    %v2137 = vsel %vm487, %v2063, %v2136
    %v2139 = vunpack.c.l.s4 1983009808
    %v2140 = vunpack.c.0.s8 %v2139
    %v2141 = vperm.slane %v2135, %v2140
    %v2143 = vunpack.c.l.s4 1983009808
    %v2144 = vunpack.c.0.s8 %v2143
    %v2145 = vperm.slane %v2137, %v2144
    %v2146 = vrot.slane %v2141, 4
    %v2147 = vsel %vm487, %v2146, %v2129
    %v2148 = vrot.slane %v2129, 4
    %v2149 = vsel %vm487, %v2141, %v2148
    %v2151 = vunpack.c.l.s4 1934713408
    %v2152 = vunpack.c.0.s8 %v2151
    %v2153 = vperm.slane %v2147, %v2152
    %v2155 = vunpack.c.l.s4 1934713408
    %v2156 = vunpack.c.0.s8 %v2155
    %v2157 = vperm.slane %v2149, %v2156
    %v2158 = vrot.slane %v2145, 4
    %v2159 = vsel %vm487, %v2158, %v2133
    %v2160 = vrot.slane %v2133, 4
    %v2161 = vsel %vm487, %v2145, %v2160
    %v2163 = vunpack.c.l.s4 1934713408
    %v2164 = vunpack.c.0.s8 %v2163
    %v2165 = vperm.slane %v2159, %v2164
    %v2167 = vunpack.c.l.s4 1934713408
    %v2168 = vunpack.c.0.s8 %v2167
    %v2169 = vperm.slane %v2161, %v2168
    %v2170 = vrot.slane %v2153, 4
    %v2171 = vsel %vm487, 0.0, %v2170
    %v2172 = vrot.slane %v2157, 4
    %v2173 = vsel %vm487, 0.0, %v2172
    %v2174 = vrot.slane %v2165, 4
    %v2175 = vsel %vm487, 0.0, %v2174
    %v2176 = vrot.slane %v2169, 4
    %v2177 = vsel %vm487, 0.0, %v2176
    %v2178 = vpack.c.bf16 %v2097, %v2097
    %v2179 = vpack.c.bf16 %v2115, %v2115
    %v2180 = vpack.c.bf16 %v2101, %v2101
    %v2181 = vpack.c.bf16 %v2117, %v2117
    %v2182 = vpack.c.bf16 %v2109, %v2109
    %v2183 = vpack.c.bf16 %v2119, %v2119
    %v2184 = vpack.c.bf16 %v2113, %v2113
    %v2185 = vpack.c.bf16 %v2121, %v2121
    %v2186 = vpack.c.bf16 %v2153, %v2153
    %v2187 = vpack.c.bf16 %v2171, %v2171
    %v2188 = vpack.c.bf16 %v2157, %v2157
    %v2189 = vpack.c.bf16 %v2173, %v2173
    %v2190 = vpack.c.bf16 %v2165, %v2165
    %v2191 = vpack.c.bf16 %v2175, %v2175
    %v2192 = vpack.c.bf16 %v2169, %v2169
    %v2193 = vpack.c.bf16 %v2177, %v2177
    %v2194 = vrot.slane %v2182, 4
    %v2195 = vsel %vm616, %v2194, %v2178
    %v2197 = vunpack.c.l.s4 1983009808
    %v2198 = vunpack.c.0.s8 %v2197
    %v2199 = vperm.slane %v2195, %v2198
    %v2200 = vrot.slane %v2184, 4
    %v2201 = vsel %vm616, %v2200, %v2180
    %v2203 = vunpack.c.l.s4 1983009808
    %v2204 = vunpack.c.0.s8 %v2203
    %v2205 = vperm.slane %v2201, %v2204
    %v2206 = vrot.slane %v2205, 4
    %v2207 = vsel %vm616, %v2206, %v2199
    %v2209 = vunpack.c.l.s4 1934713408
    %v2210 = vunpack.c.0.s8 %v2209
    %v2211 = vperm.slane %v2207, %v2210
    %v2212 = vrot.slane %v2211, 4
    %v2213 = vsel %vm616, 0, %v2212
    %v2214 = vrot.slane %v2183, 4
    %v2215 = vsel %vm616, %v2214, %v2179
    %v2217 = vunpack.c.l.s4 1983009808
    %v2218 = vunpack.c.0.s8 %v2217
    %v2219 = vperm.slane %v2215, %v2218
    %v2220 = vrot.slane %v2185, 4
    %v2221 = vsel %vm616, %v2220, %v2181
    %v2223 = vunpack.c.l.s4 1983009808
    %v2224 = vunpack.c.0.s8 %v2223
    %v2225 = vperm.slane %v2221, %v2224
    %v2226 = vrot.slane %v2225, 4
    %v2227 = vsel %vm616, %v2226, %v2219
    %v2229 = vunpack.c.l.s4 1934713408
    %v2230 = vunpack.c.0.s8 %v2229
    %v2231 = vperm.slane %v2227, %v2230
    %v2232 = vrot.slane %v2231, 4
    %v2233 = vsel %vm616, 0, %v2232
    %v2234 = vrot.slane %v2190, 4
    %v2235 = vsel %vm616, %v2234, %v2186
    %v2237 = vunpack.c.l.s4 1983009808
    %v2238 = vunpack.c.0.s8 %v2237
    %v2239 = vperm.slane %v2235, %v2238
    %v2240 = vrot.slane %v2192, 4
    %v2241 = vsel %vm616, %v2240, %v2188
    %v2243 = vunpack.c.l.s4 1983009808
    %v2244 = vunpack.c.0.s8 %v2243
    %v2245 = vperm.slane %v2241, %v2244
    %v2246 = vrot.slane %v2245, 4
    %v2247 = vsel %vm616, %v2246, %v2239
    %v2249 = vunpack.c.l.s4 1934713408
    %v2250 = vunpack.c.0.s8 %v2249
    %v2251 = vperm.slane %v2247, %v2250
    %v2252 = vrot.slane %v2251, 4
    %v2253 = vsel %vm616, 0, %v2252
    %v2254 = vrot.slane %v2191, 4
    %v2255 = vsel %vm616, %v2254, %v2187
    %v2257 = vunpack.c.l.s4 1983009808
    %v2258 = vunpack.c.0.s8 %v2257
    %v2259 = vperm.slane %v2255, %v2258
    %v2260 = vrot.slane %v2193, 4
    %v2261 = vsel %vm616, %v2260, %v2189
    %v2263 = vunpack.c.l.s4 1983009808
    %v2264 = vunpack.c.0.s8 %v2263
    %v2265 = vperm.slane %v2261, %v2264
    %v2266 = vrot.slane %v2265, 4
    %v2267 = vsel %vm616, %v2266, %v2259
    %v2269 = vunpack.c.l.s4 1934713408
    %v2270 = vunpack.c.0.s8 %v2269
    %v2271 = vperm.slane %v2267, %v2270
    %v2272 = vrot.slane %v2271, 4
    %v2273 = vsel %vm616, 0, %v2272
    %v2276 = vpack.i.b16 %v2231, %v2211
    %v2277 = vshrl.u32 %v2211, 16
    %v2278 = vshrl.u32 %v2231, 16
    %v2279 = vpack.i.b16 %v2278, %v2277
    %v2282 = vpack.i.b16 %v2233, %v2213
    %v2283 = vshrl.u32 %v2213, 16
    %v2284 = vshrl.u32 %v2233, 16
    %v2285 = vpack.i.b16 %v2284, %v2283
    %v2288 = vpack.i.b16 %v2271, %v2251
    %v2289 = vshrl.u32 %v2251, 16
    %v2290 = vshrl.u32 %v2271, 16
    %v2291 = vpack.i.b16 %v2290, %v2289
    %v2294 = vpack.i.b16 %v2273, %v2253
    %v2295 = vshrl.u32 %v2253, 16
    %v2296 = vshrl.u32 %v2273, 16
    %v2297 = vpack.i.b16 %v2296, %v2295
    %2300 = vrot.lane.b32.xlu0 %v455, 96
    %v2301 = vpop.permute.xlu0 %2300
    %2302 = vrot.lane.b32.xlu0 %v457, 96
    %v2303 = vpop.permute.xlu0 %2302
    %2306 = vrot.lane.b32.xlu0 %v455, 64
    %v2307 = vpop.permute.xlu0 %2306
    %2308 = vrot.lane.b32.xlu0 %v457, 64
    %v2309 = vpop.permute.xlu0 %2308
    %2312 = vrot.lane.b32.xlu0 %v455, 32
    %v2313 = vpop.permute.xlu0 %2312
    %2314 = vrot.lane.b32.xlu0 %v457, 32
    %v2315 = vpop.permute.xlu0 %2314
    %v2318 = vrot.slane %v2307, 4
    %v2319 = vsel %vm487, %v2318, %v455
    %v2320 = vrot.slane %v455, 4
    %v2321 = vsel %vm487, %v2307, %v2320
    %v2323 = vunpack.c.l.s4 1983009808
    %v2324 = vunpack.c.0.s8 %v2323
    %v2325 = vperm.slane %v2319, %v2324
    %v2327 = vunpack.c.l.s4 1983009808
    %v2328 = vunpack.c.0.s8 %v2327
    %v2329 = vperm.slane %v2321, %v2328
    %v2330 = vrot.slane %v2313, 4
    %v2331 = vsel %vm487, %v2330, %v2301
    %v2332 = vrot.slane %v2301, 4
    %v2333 = vsel %vm487, %v2313, %v2332
    %v2335 = vunpack.c.l.s4 1983009808
    %v2336 = vunpack.c.0.s8 %v2335
    %v2337 = vperm.slane %v2331, %v2336
    %v2339 = vunpack.c.l.s4 1983009808
    %v2340 = vunpack.c.0.s8 %v2339
    %v2341 = vperm.slane %v2333, %v2340
    %v2342 = vrot.slane %v2337, 4
    %v2343 = vsel %vm487, %v2342, %v2325
    %v2344 = vrot.slane %v2325, 4
    %v2345 = vsel %vm487, %v2337, %v2344
    %v2347 = vunpack.c.l.s4 1934713408
    %v2348 = vunpack.c.0.s8 %v2347
    %v2349 = vperm.slane %v2343, %v2348
    %v2351 = vunpack.c.l.s4 1934713408
    %v2352 = vunpack.c.0.s8 %v2351
    %v2353 = vperm.slane %v2345, %v2352
    %v2354 = vrot.slane %v2341, 4
    %v2355 = vsel %vm487, %v2354, %v2329
    %v2356 = vrot.slane %v2329, 4
    %v2357 = vsel %vm487, %v2341, %v2356
    %v2359 = vunpack.c.l.s4 1934713408
    %v2360 = vunpack.c.0.s8 %v2359
    %v2361 = vperm.slane %v2355, %v2360
    %v2363 = vunpack.c.l.s4 1934713408
    %v2364 = vunpack.c.0.s8 %v2363
    %v2365 = vperm.slane %v2357, %v2364
    %v2366 = vrot.slane %v2349, 4
    %v2367 = vsel %vm487, 0.0, %v2366
    %v2368 = vrot.slane %v2353, 4
    %v2369 = vsel %vm487, 0.0, %v2368
    %v2370 = vrot.slane %v2361, 4
    %v2371 = vsel %vm487, 0.0, %v2370
    %v2372 = vrot.slane %v2365, 4
    %v2373 = vsel %vm487, 0.0, %v2372
    %v2374 = vrot.slane %v2309, 4
    %v2375 = vsel %vm487, %v2374, %v457
    %v2376 = vrot.slane %v457, 4
    %v2377 = vsel %vm487, %v2309, %v2376
    %v2379 = vunpack.c.l.s4 1983009808
    %v2380 = vunpack.c.0.s8 %v2379
    %v2381 = vperm.slane %v2375, %v2380
    %v2383 = vunpack.c.l.s4 1983009808
    %v2384 = vunpack.c.0.s8 %v2383
    %v2385 = vperm.slane %v2377, %v2384
    %v2386 = vrot.slane %v2315, 4
    %v2387 = vsel %vm487, %v2386, %v2303
    %v2388 = vrot.slane %v2303, 4
    %v2389 = vsel %vm487, %v2315, %v2388
    %v2391 = vunpack.c.l.s4 1983009808
    %v2392 = vunpack.c.0.s8 %v2391
    %v2393 = vperm.slane %v2387, %v2392
    %v2395 = vunpack.c.l.s4 1983009808
    %v2396 = vunpack.c.0.s8 %v2395
    %v2397 = vperm.slane %v2389, %v2396
    %v2398 = vrot.slane %v2393, 4
    %v2399 = vsel %vm487, %v2398, %v2381
    %v2400 = vrot.slane %v2381, 4
    %v2401 = vsel %vm487, %v2393, %v2400
    %v2403 = vunpack.c.l.s4 1934713408
    %v2404 = vunpack.c.0.s8 %v2403
    %v2405 = vperm.slane %v2399, %v2404
    %v2407 = vunpack.c.l.s4 1934713408
    %v2408 = vunpack.c.0.s8 %v2407
    %v2409 = vperm.slane %v2401, %v2408
    %v2410 = vrot.slane %v2397, 4
    %v2411 = vsel %vm487, %v2410, %v2385
    %v2412 = vrot.slane %v2385, 4
    %v2413 = vsel %vm487, %v2397, %v2412
    %v2415 = vunpack.c.l.s4 1934713408
    %v2416 = vunpack.c.0.s8 %v2415
    %v2417 = vperm.slane %v2411, %v2416
    %v2419 = vunpack.c.l.s4 1934713408
    %v2420 = vunpack.c.0.s8 %v2419
    %v2421 = vperm.slane %v2413, %v2420
    %v2422 = vrot.slane %v2405, 4
    %v2423 = vsel %vm487, 0.0, %v2422
    %v2424 = vrot.slane %v2409, 4
    %v2425 = vsel %vm487, 0.0, %v2424
    %v2426 = vrot.slane %v2417, 4
    %v2427 = vsel %vm487, 0.0, %v2426
    %v2428 = vrot.slane %v2421, 4
    %v2429 = vsel %vm487, 0.0, %v2428
    %v2430 = vpack.c.bf16 %v2349, %v2349
    %v2431 = vpack.c.bf16 %v2367, %v2367
    %v2432 = vpack.c.bf16 %v2353, %v2353
    %v2433 = vpack.c.bf16 %v2369, %v2369
    %v2434 = vpack.c.bf16 %v2361, %v2361
    %v2435 = vpack.c.bf16 %v2371, %v2371
    %v2436 = vpack.c.bf16 %v2365, %v2365
    %v2437 = vpack.c.bf16 %v2373, %v2373
    %v2438 = vpack.c.bf16 %v2405, %v2405
    %v2439 = vpack.c.bf16 %v2423, %v2423
    %v2440 = vpack.c.bf16 %v2409, %v2409
    %v2441 = vpack.c.bf16 %v2425, %v2425
    %v2442 = vpack.c.bf16 %v2417, %v2417
    %v2443 = vpack.c.bf16 %v2427, %v2427
    %v2444 = vpack.c.bf16 %v2421, %v2421
    %v2445 = vpack.c.bf16 %v2429, %v2429
    %v2446 = vrot.slane %v2434, 4
    %v2447 = vsel %vm616, %v2446, %v2430
    %v2449 = vunpack.c.l.s4 1983009808
    %v2450 = vunpack.c.0.s8 %v2449
    %v2451 = vperm.slane %v2447, %v2450
    %v2452 = vrot.slane %v2436, 4
    %v2453 = vsel %vm616, %v2452, %v2432
    %v2455 = vunpack.c.l.s4 1983009808
    %v2456 = vunpack.c.0.s8 %v2455
    %v2457 = vperm.slane %v2453, %v2456
    %v2458 = vrot.slane %v2457, 4
    %v2459 = vsel %vm616, %v2458, %v2451
    %v2461 = vunpack.c.l.s4 1934713408
    %v2462 = vunpack.c.0.s8 %v2461
    %v2463 = vperm.slane %v2459, %v2462
    %v2464 = vrot.slane %v2463, 4
    %v2465 = vsel %vm616, 0, %v2464
    %v2466 = vrot.slane %v2435, 4
    %v2467 = vsel %vm616, %v2466, %v2431
    %v2469 = vunpack.c.l.s4 1983009808
    %v2470 = vunpack.c.0.s8 %v2469
    %v2471 = vperm.slane %v2467, %v2470
    %v2472 = vrot.slane %v2437, 4
    %v2473 = vsel %vm616, %v2472, %v2433
    %v2475 = vunpack.c.l.s4 1983009808
    %v2476 = vunpack.c.0.s8 %v2475
    %v2477 = vperm.slane %v2473, %v2476
    %v2478 = vrot.slane %v2477, 4
    %v2479 = vsel %vm616, %v2478, %v2471
    %v2481 = vunpack.c.l.s4 1934713408
    %v2482 = vunpack.c.0.s8 %v2481
    %v2483 = vperm.slane %v2479, %v2482
    %v2484 = vrot.slane %v2483, 4
    %v2485 = vsel %vm616, 0, %v2484
    %v2486 = vrot.slane %v2442, 4
    %v2487 = vsel %vm616, %v2486, %v2438
    %v2489 = vunpack.c.l.s4 1983009808
    %v2490 = vunpack.c.0.s8 %v2489
    %v2491 = vperm.slane %v2487, %v2490
    %v2492 = vrot.slane %v2444, 4
    %v2493 = vsel %vm616, %v2492, %v2440
    %v2495 = vunpack.c.l.s4 1983009808
    %v2496 = vunpack.c.0.s8 %v2495
    %v2497 = vperm.slane %v2493, %v2496
    %v2498 = vrot.slane %v2497, 4
    %v2499 = vsel %vm616, %v2498, %v2491
    %v2501 = vunpack.c.l.s4 1934713408
    %v2502 = vunpack.c.0.s8 %v2501
    %v2503 = vperm.slane %v2499, %v2502
    %v2504 = vrot.slane %v2503, 4
    %v2505 = vsel %vm616, 0, %v2504
    %v2506 = vrot.slane %v2443, 4
    %v2507 = vsel %vm616, %v2506, %v2439
    %v2509 = vunpack.c.l.s4 1983009808
    %v2510 = vunpack.c.0.s8 %v2509
    %v2511 = vperm.slane %v2507, %v2510
    %v2512 = vrot.slane %v2445, 4
    %v2513 = vsel %vm616, %v2512, %v2441
    %v2515 = vunpack.c.l.s4 1983009808
    %v2516 = vunpack.c.0.s8 %v2515
    %v2517 = vperm.slane %v2513, %v2516
    %v2518 = vrot.slane %v2517, 4
    %v2519 = vsel %vm616, %v2518, %v2511
    %v2521 = vunpack.c.l.s4 1934713408
    %v2522 = vunpack.c.0.s8 %v2521
    %v2523 = vperm.slane %v2519, %v2522
    %v2524 = vrot.slane %v2523, 4
    %v2525 = vsel %vm616, 0, %v2524
    %v2528 = vpack.i.b16 %v2483, %v2463
    %v2529 = vshrl.u32 %v2463, 16
    %v2530 = vshrl.u32 %v2483, 16
    %v2531 = vpack.i.b16 %v2530, %v2529
    %v2534 = vpack.i.b16 %v2485, %v2465
    %v2535 = vshrl.u32 %v2465, 16
    %v2536 = vshrl.u32 %v2485, 16
    %v2537 = vpack.i.b16 %v2536, %v2535
    %v2540 = vpack.i.b16 %v2523, %v2503
    %v2541 = vshrl.u32 %v2503, 16
    %v2542 = vshrl.u32 %v2523, 16
    %v2543 = vpack.i.b16 %v2542, %v2541
    %v2546 = vpack.i.b16 %v2525, %v2505
    %v2547 = vshrl.u32 %v2505, 16
    %v2548 = vshrl.u32 %v2525, 16
    %v2549 = vpack.i.b16 %v2548, %v2547
    %v2550 = vunpack.c.l.b16 %v2024
    %v2551 = vunpack.c.l.b16 %v2036
    %v2552 = vpack.c.b16 %v2551, %v2550
    %v2553 = vunpack.c.l.b16 %v2276
    %v2554 = vunpack.c.l.b16 %v2288
    %v2555 = vpack.c.b16 %v2554, %v2553
    %v2557 = vsel %vm1230, %v2552, 0
    %v2560 = vsel %vm1230, %v2555, 0
    %2562 = vmatpush.bf16.xpose.msra.mxu0 0
    %2563 = vmatpush.bf16.xpose.msra.mxu0 0
    %2564 = vmatpush.bf16.xpose.msra.mxu0 0
    %2565 = vmatpush.bf16.xpose.msra.mxu0 0
    %2566 = vmatpush.bf16.xpose.msra.mxu0 0
    %2567 = vmatpush.bf16.xpose.msra.mxu0 0
    %2568 = vmatpush.bf16.xpose.msra.mxu0 0
    %2569 = vmatpush.bf16.xpose.msra.mxu0 %v2560
    %2570 = vmatmul.bf16.gmra.mxu0 %v2557
    %v2571 = vpop.f32.mrf.mxu0
    %v2572 = vadd.f32 0.0, %v2571
    %v2573 = vpop.f32.mrf.mxu0
    %v2574 = vadd.f32 0.0, %v2573
    %2575 = vdwg.mxu0
    %v2576 = vunpack.c.l.b16 %v2027
    %v2577 = vunpack.c.l.b16 %v2039
    %v2578 = vpack.c.b16 %v2577, %v2576
    %v2579 = vunpack.c.l.b16 %v2279
    %v2580 = vunpack.c.l.b16 %v2291
    %v2581 = vpack.c.b16 %v2580, %v2579
    %v2583 = vsel %vm1230, %v2578, 0
    %v2586 = vsel %vm1230, %v2581, 0
    %2588 = vmatpush.bf16.xpose.msra.mxu0 0
    %2589 = vmatpush.bf16.xpose.msra.mxu0 0
    %2590 = vmatpush.bf16.xpose.msra.mxu0 0
    %2591 = vmatpush.bf16.xpose.msra.mxu0 0
    %2592 = vmatpush.bf16.xpose.msra.mxu0 0
    %2593 = vmatpush.bf16.xpose.msra.mxu0 0
    %2594 = vmatpush.bf16.xpose.msra.mxu0 0
    %2595 = vmatpush.bf16.xpose.msra.mxu0 %v2586
    %2596 = vmatmul.bf16.gmra.mxu0 %v2583
    %v2597 = vpop.f32.mrf.mxu0
    %v2598 = vadd.f32 0.0, %v2597
    %v2599 = vpop.f32.mrf.mxu0
    %v2600 = vadd.f32 0.0, %v2599
    %2601 = vdwg.mxu0
    %v2602 = vunpack.c.l.b16 %v2030
    %v2603 = vunpack.c.l.b16 %v2042
    %v2604 = vpack.c.b16 %v2603, %v2602
    %v2605 = vunpack.c.l.b16 %v2282
    %v2606 = vunpack.c.l.b16 %v2294
    %v2607 = vpack.c.b16 %v2606, %v2605
    %v2609 = vsel %vm1230, %v2604, 0
    %v2612 = vsel %vm1230, %v2607, 0
    %2614 = vmatpush.bf16.xpose.msra.mxu0 0
    %2615 = vmatpush.bf16.xpose.msra.mxu0 0
    %2616 = vmatpush.bf16.xpose.msra.mxu0 0
    %2617 = vmatpush.bf16.xpose.msra.mxu0 0
    %2618 = vmatpush.bf16.xpose.msra.mxu0 0
    %2619 = vmatpush.bf16.xpose.msra.mxu0 0
    %2620 = vmatpush.bf16.xpose.msra.mxu0 0
    %2621 = vmatpush.bf16.xpose.msra.mxu0 %v2612
    %2622 = vmatmul.bf16.gmra.mxu0 %v2609
    %v2623 = vpop.f32.mrf.mxu0
    %v2624 = vadd.f32 0.0, %v2623
    %v2625 = vpop.f32.mrf.mxu0
    %v2626 = vadd.f32 0.0, %v2625
    %2627 = vdwg.mxu0
    %v2628 = vunpack.c.l.b16 %v2033
    %v2629 = vunpack.c.l.b16 %v2045
    %v2630 = vpack.c.b16 %v2629, %v2628
    %v2631 = vunpack.c.l.b16 %v2285
    %v2632 = vunpack.c.l.b16 %v2297
    %v2633 = vpack.c.b16 %v2632, %v2631
    %v2635 = vsel %vm1230, %v2630, 0
    %v2638 = vsel %vm1230, %v2633, 0
    %2640 = vmatpush.bf16.xpose.msra.mxu0 0
    %2641 = vmatpush.bf16.xpose.msra.mxu0 0
    %2642 = vmatpush.bf16.xpose.msra.mxu0 0
    %2643 = vmatpush.bf16.xpose.msra.mxu0 0
    %2644 = vmatpush.bf16.xpose.msra.mxu0 0
    %2645 = vmatpush.bf16.xpose.msra.mxu0 0
    %2646 = vmatpush.bf16.xpose.msra.mxu0 0
    %2647 = vmatpush.bf16.xpose.msra.mxu0 %v2638
    %2648 = vmatmul.bf16.gmra.mxu0 %v2635
    %v2649 = vpop.f32.mrf.mxu0
    %v2650 = vadd.f32 0.0, %v2649
    %v2651 = vpop.f32.mrf.mxu0
    %v2652 = vadd.f32 0.0, %v2651
    %2653 = vdwg.mxu0
    %v2654 = vsel %vm1331, %v2572, -1e+30
    %v2655 = vsel %vm1332, %v2574, -1e+30
    %v2656 = vsel %vm1331, %v2598, -1e+30
    %v2657 = vsel %vm1332, %v2600, -1e+30
    %v2658 = vsel %vm1331, %v2624, -1e+30
    %v2659 = vsel %vm1332, %v2626, -1e+30
    %v2660 = vsel %vm1331, %v2650, -1e+30
    %v2661 = vsel %vm1332, %v2652, -1e+30
    %v2662 = vsel %vm1341, %v2654, -inf
    %2663 = vmax.xlane.f32.xlu0 %v2662
    %v2664 = vpop.xlane.xlu0 %2663
    %v2665 = vsel %vm1341, %v2655, -inf
    %2666 = vmax.xlane.f32.xlu0 %v2665
    %v2667 = vpop.xlane.xlu0 %2666
    %v2668 = vsel %vm1341, %v2656, -inf
    %2669 = vmax.xlane.f32.xlu0 %v2668
    %v2670 = vpop.xlane.xlu0 %2669
    %v2671 = vsel %vm1341, %v2657, -inf
    %2672 = vmax.xlane.f32.xlu0 %v2671
    %v2673 = vpop.xlane.xlu0 %2672
    %v2674 = vsel %vm1341, %v2658, -inf
    %2675 = vmax.xlane.f32.xlu0 %v2674
    %v2676 = vpop.xlane.xlu0 %2675
    %v2677 = vsel %vm1341, %v2659, -inf
    %2678 = vmax.xlane.f32.xlu0 %v2677
    %v2679 = vpop.xlane.xlu0 %2678
    %v2680 = vsel %vm1341, %v2660, -inf
    %2681 = vmax.xlane.f32.xlu0 %v2680
    %v2682 = vpop.xlane.xlu0 %2681
    %v2683 = vsel %vm1341, %v2661, -inf
    %2684 = vmax.xlane.f32.xlu0 %v2683
    %v2685 = vpop.xlane.xlu0 %2684
    %v2686 = vsub.f32 %v2654, %v2664
    %v2687 = vsub.f32 %v2655, %v2667
    %v2688 = vsub.f32 %v2656, %v2670
    %v2689 = vsub.f32 %v2657, %v2673
    %v2690 = vsub.f32 %v2658, %v2676
    %v2691 = vsub.f32 %v2659, %v2679
    %v2692 = vsub.f32 %v2660, %v2682
    %v2693 = vsub.f32 %v2661, %v2685
    %v2694 = vmul.f32 %v2686, 1.442695
    %v2695 = vpow.pop %v2694
    %v2696 = vmul.f32 %v2687, 1.442695
    %v2697 = vpow.pop %v2696
    %v2698 = vmul.f32 %v2688, 1.442695
    %v2699 = vpow.pop %v2698
    %v2700 = vmul.f32 %v2689, 1.442695
    %v2701 = vpow.pop %v2700
    %v2702 = vmul.f32 %v2690, 1.442695
    %v2703 = vpow.pop %v2702
    %v2704 = vmul.f32 %v2691, 1.442695
    %v2705 = vpow.pop %v2704
    %v2706 = vmul.f32 %v2692, 1.442695
    %v2707 = vpow.pop %v2706
    %v2708 = vmul.f32 %v2693, 1.442695
    %v2709 = vpow.pop %v2708
    %v2710 = vsel %vm1341, %v2695, 0.0
    %2711 = vadd.xlane.f32.xlu0 %v2710
    %v2712 = vpop.xlane.xlu0 %2711
    %v2713 = vsel %vm1341, %v2697, 0.0
    %2714 = vadd.xlane.f32.xlu0 %v2713
    %v2715 = vpop.xlane.xlu0 %2714
    %v2716 = vsel %vm1341, %v2699, 0.0
    %2717 = vadd.xlane.f32.xlu0 %v2716
    %v2718 = vpop.xlane.xlu0 %2717
    %v2719 = vsel %vm1341, %v2701, 0.0
    %2720 = vadd.xlane.f32.xlu0 %v2719
    %v2721 = vpop.xlane.xlu0 %2720
    %v2722 = vsel %vm1341, %v2703, 0.0
    %2723 = vadd.xlane.f32.xlu0 %v2722
    %v2724 = vpop.xlane.xlu0 %2723
    %v2725 = vsel %vm1341, %v2705, 0.0
    %2726 = vadd.xlane.f32.xlu0 %v2725
    %v2727 = vpop.xlane.xlu0 %2726
    %v2728 = vsel %vm1341, %v2707, 0.0
    %2729 = vadd.xlane.f32.xlu0 %v2728
    %v2730 = vpop.xlane.xlu0 %2729
    %v2731 = vsel %vm1341, %v2709, 0.0
    %2732 = vadd.xlane.f32.xlu0 %v2731
    %v2733 = vpop.xlane.xlu0 %2732
    %v2734 = vrcp.pop %v2712
    %v2735 = vrcp.pop %v2715
    %v2736 = vrcp.pop %v2718
    %v2737 = vrcp.pop %v2721
    %v2738 = vrcp.pop %v2724
    %v2739 = vrcp.pop %v2727
    %v2740 = vrcp.pop %v2730
    %v2741 = vrcp.pop %v2733
    %v2742 = vmul.f32 %v2695, %v2734
    %v2743 = vmul.f32 %v2697, %v2735
    %v2744 = vmul.f32 %v2699, %v2736
    %v2745 = vmul.f32 %v2701, %v2737
    %v2746 = vmul.f32 %v2703, %v2738
    %v2747 = vmul.f32 %v2705, %v2739
    %v2748 = vmul.f32 %v2707, %v2740
    %v2749 = vmul.f32 %v2709, %v2741
    %v2750 = vpack.c.bf16 %v2742, %v2742
    %v2751 = vpack.c.bf16 %v2743, %v2743
    %v2752 = vpack.c.bf16 %v2744, %v2744
    %v2753 = vpack.c.bf16 %v2745, %v2745
    %v2754 = vpack.c.bf16 %v2746, %v2746
    %v2755 = vpack.c.bf16 %v2747, %v2747
    %v2756 = vpack.c.bf16 %v2748, %v2748
    %v2757 = vpack.c.bf16 %v2749, %v2749
    %v2760 = vunpack.c.l.b16 %v2750
    %v2761 = vunpack.c.l.b16 %v2751
    %v2762 = vpack.c.b16 %v2761, %v2760
    %v2763 = vunpack.c.l.b16 %v2528
    %v2764 = vunpack.c.l.b16 %v2540
    %v2765 = vpack.c.b16 %v2764, %v2763
    %v2768 = vsel %vm1341, %v2762, 0
    %2770 = vmatpush.bf16.msra.mxu0 0
    %2771 = vmatpush.bf16.msra.mxu0 0
    %2772 = vmatpush.bf16.msra.mxu0 0
    %2773 = vmatpush.bf16.msra.mxu0 0
    %2774 = vmatpush.bf16.msra.mxu0 0
    %2775 = vmatpush.bf16.msra.mxu0 0
    %2776 = vmatpush.bf16.msra.mxu0 0
    %2777 = vmatpush.bf16.msra.mxu0 %v2765
    %2778 = vmatmul.bf16.gmra.mxu0 %v2768
    %v2779 = vpop.f32.mrf.mxu0
    %v2780 = vadd.f32 0.0, %v2779
    %v2781 = vpop.f32.mrf.mxu0
    %v2782 = vadd.f32 0.0, %v2781
    %2783 = vdwg.mxu0
    %v2786 = vunpack.c.l.b16 %v2752
    %v2787 = vunpack.c.l.b16 %v2753
    %v2788 = vpack.c.b16 %v2787, %v2786
    %v2789 = vunpack.c.l.b16 %v2531
    %v2790 = vunpack.c.l.b16 %v2543
    %v2791 = vpack.c.b16 %v2790, %v2789
    %v2794 = vsel %vm1341, %v2788, 0
    %2796 = vmatpush.bf16.msra.mxu0 0
    %2797 = vmatpush.bf16.msra.mxu0 0
    %2798 = vmatpush.bf16.msra.mxu0 0
    %2799 = vmatpush.bf16.msra.mxu0 0
    %2800 = vmatpush.bf16.msra.mxu0 0
    %2801 = vmatpush.bf16.msra.mxu0 0
    %2802 = vmatpush.bf16.msra.mxu0 0
    %2803 = vmatpush.bf16.msra.mxu0 %v2791
    %2804 = vmatmul.bf16.gmra.mxu0 %v2794
    %v2805 = vpop.f32.mrf.mxu0
    %v2806 = vadd.f32 0.0, %v2805
    %v2807 = vpop.f32.mrf.mxu0
    %v2808 = vadd.f32 0.0, %v2807
    %2809 = vdwg.mxu0
    %v2812 = vunpack.c.l.b16 %v2754
    %v2813 = vunpack.c.l.b16 %v2755
    %v2814 = vpack.c.b16 %v2813, %v2812
    %v2815 = vunpack.c.l.b16 %v2534
    %v2816 = vunpack.c.l.b16 %v2546
    %v2817 = vpack.c.b16 %v2816, %v2815
    %v2820 = vsel %vm1341, %v2814, 0
    %2822 = vmatpush.bf16.msra.mxu0 0
    %2823 = vmatpush.bf16.msra.mxu0 0
    %2824 = vmatpush.bf16.msra.mxu0 0
    %2825 = vmatpush.bf16.msra.mxu0 0
    %2826 = vmatpush.bf16.msra.mxu0 0
    %2827 = vmatpush.bf16.msra.mxu0 0
    %2828 = vmatpush.bf16.msra.mxu0 0
    %2829 = vmatpush.bf16.msra.mxu0 %v2817
    %2830 = vmatmul.bf16.gmra.mxu0 %v2820
    %v2831 = vpop.f32.mrf.mxu0
    %v2832 = vadd.f32 0.0, %v2831
    %v2833 = vpop.f32.mrf.mxu0
    %v2834 = vadd.f32 0.0, %v2833
    %2835 = vdwg.mxu0
    %v2838 = vunpack.c.l.b16 %v2756
    %v2839 = vunpack.c.l.b16 %v2757
    %v2840 = vpack.c.b16 %v2839, %v2838
    %v2841 = vunpack.c.l.b16 %v2537
    %v2842 = vunpack.c.l.b16 %v2549
    %v2843 = vpack.c.b16 %v2842, %v2841
    %v2846 = vsel %vm1341, %v2840, 0
    %2848 = vmatpush.bf16.msra.mxu0 0
    %2849 = vmatpush.bf16.msra.mxu0 0
    %2850 = vmatpush.bf16.msra.mxu0 0
    %2851 = vmatpush.bf16.msra.mxu0 0
    %2852 = vmatpush.bf16.msra.mxu0 0
    %2853 = vmatpush.bf16.msra.mxu0 0
    %2854 = vmatpush.bf16.msra.mxu0 0
    %2855 = vmatpush.bf16.msra.mxu0 %v2843
    %2856 = vmatmul.bf16.gmra.mxu0 %v2846
    %v2857 = vpop.f32.mrf.mxu0
    %v2858 = vadd.f32 0.0, %v2857
    %v2859 = vpop.f32.mrf.mxu0
    %v2860 = vadd.f32 0.0, %v2859
    %2861 = vdwg.mxu0
    %v2862 = vrot.slane %v2832, 4
    %v2863 = vsel %vm487, %v2862, %v2780
    %v2864 = vrot.slane %v2780, 4
    %v2865 = vsel %vm487, %v2832, %v2864
    %v2867 = vunpack.c.l.s4 1983009808
    %v2868 = vunpack.c.0.s8 %v2867
    %v2869 = vperm.slane %v2863, %v2868
    %v2871 = vunpack.c.l.s4 1983009808
    %v2872 = vunpack.c.0.s8 %v2871
    %v2873 = vperm.slane %v2865, %v2872
    %v2874 = vrot.slane %v2858, 4
    %v2875 = vsel %vm487, %v2874, %v2806
    %v2876 = vrot.slane %v2806, 4
    %v2877 = vsel %vm487, %v2858, %v2876
    %v2879 = vunpack.c.l.s4 1983009808
    %v2880 = vunpack.c.0.s8 %v2879
    %v2881 = vperm.slane %v2875, %v2880
    %v2883 = vunpack.c.l.s4 1983009808
    %v2884 = vunpack.c.0.s8 %v2883
    %v2885 = vperm.slane %v2877, %v2884
    %v2886 = vrot.slane %v2881, 4
    %v2887 = vsel %vm487, %v2886, %v2869
    %v2888 = vrot.slane %v2869, 4
    %v2889 = vsel %vm487, %v2881, %v2888
    %v2891 = vunpack.c.l.s4 1934713408
    %v2892 = vunpack.c.0.s8 %v2891
    %v2893 = vperm.slane %v2887, %v2892
    %v2895 = vunpack.c.l.s4 1934713408
    %v2896 = vunpack.c.0.s8 %v2895
    %v2897 = vperm.slane %v2889, %v2896
    %v2898 = vrot.slane %v2885, 4
    %v2899 = vsel %vm487, %v2898, %v2873
    %v2900 = vrot.slane %v2873, 4
    %v2901 = vsel %vm487, %v2885, %v2900
    %v2903 = vunpack.c.l.s4 1934713408
    %v2904 = vunpack.c.0.s8 %v2903
    %v2905 = vperm.slane %v2899, %v2904
    %v2907 = vunpack.c.l.s4 1934713408
    %v2908 = vunpack.c.0.s8 %v2907
    %v2909 = vperm.slane %v2901, %v2908
    %v2910 = vrot.slane %v2893, 4
    %v2911 = vsel %vm487, 0.0, %v2910
    %v2912 = vrot.slane %v2897, 4
    %v2913 = vsel %vm487, 0.0, %v2912
    %v2914 = vrot.slane %v2905, 4
    %v2915 = vsel %vm487, 0.0, %v2914
    %v2916 = vrot.slane %v2909, 4
    %v2917 = vsel %vm487, 0.0, %v2916
    %v2918 = vrot.slane %v2834, 4
    %v2919 = vsel %vm487, %v2918, %v2782
    %v2920 = vrot.slane %v2782, 4
    %v2921 = vsel %vm487, %v2834, %v2920
    %v2923 = vunpack.c.l.s4 1983009808
    %v2924 = vunpack.c.0.s8 %v2923
    %v2925 = vperm.slane %v2919, %v2924
    %v2927 = vunpack.c.l.s4 1983009808
    %v2928 = vunpack.c.0.s8 %v2927
    %v2929 = vperm.slane %v2921, %v2928
    %v2930 = vrot.slane %v2860, 4
    %v2931 = vsel %vm487, %v2930, %v2808
    %v2932 = vrot.slane %v2808, 4
    %v2933 = vsel %vm487, %v2860, %v2932
    %v2935 = vunpack.c.l.s4 1983009808
    %v2936 = vunpack.c.0.s8 %v2935
    %v2937 = vperm.slane %v2931, %v2936
    %v2939 = vunpack.c.l.s4 1983009808
    %v2940 = vunpack.c.0.s8 %v2939
    %v2941 = vperm.slane %v2933, %v2940
    %v2942 = vrot.slane %v2937, 4
    %v2943 = vsel %vm487, %v2942, %v2925
    %v2944 = vrot.slane %v2925, 4
    %v2945 = vsel %vm487, %v2937, %v2944
    %v2947 = vunpack.c.l.s4 1934713408
    %v2948 = vunpack.c.0.s8 %v2947
    %v2949 = vperm.slane %v2943, %v2948
    %v2951 = vunpack.c.l.s4 1934713408
    %v2952 = vunpack.c.0.s8 %v2951
    %v2953 = vperm.slane %v2945, %v2952
    %v2954 = vrot.slane %v2941, 4
    %v2955 = vsel %vm487, %v2954, %v2929
    %v2956 = vrot.slane %v2929, 4
    %v2957 = vsel %vm487, %v2941, %v2956
    %v2959 = vunpack.c.l.s4 1934713408
    %v2960 = vunpack.c.0.s8 %v2959
    %v2961 = vperm.slane %v2955, %v2960
    %v2963 = vunpack.c.l.s4 1934713408
    %v2964 = vunpack.c.0.s8 %v2963
    %v2965 = vperm.slane %v2957, %v2964
    %v2966 = vrot.slane %v2949, 4
    %v2967 = vsel %vm487, 0.0, %v2966
    %v2968 = vrot.slane %v2953, 4
    %v2969 = vsel %vm487, 0.0, %v2968
    %v2970 = vrot.slane %v2961, 4
    %v2971 = vsel %vm487, 0.0, %v2970
    %v2972 = vrot.slane %v2965, 4
    %v2973 = vsel %vm487, 0.0, %v2972
    %v2974 = vsel %vm487, %v2912, %v2893
    %v2976 = vunpack.c.l.s4 1983009808
    %v2977 = vunpack.c.0.s8 %v2976
    %v2978 = vperm.slane %v2974, %v2977
    %v2979 = vrot.slane %v2913, 4
    %v2980 = vsel %vm487, %v2979, %v2911
    %v2982 = vunpack.c.l.s4 1983009808
    %v2983 = vunpack.c.0.s8 %v2982
    %v2984 = vperm.slane %v2980, %v2983
    %v2985 = vsel %vm487, %v2916, %v2905
    %v2987 = vunpack.c.l.s4 1983009808
    %v2988 = vunpack.c.0.s8 %v2987
    %v2989 = vperm.slane %v2985, %v2988
    %v2990 = vrot.slane %v2917, 4
    %v2991 = vsel %vm487, %v2990, %v2915
    %v2993 = vunpack.c.l.s4 1983009808
    %v2994 = vunpack.c.0.s8 %v2993
    %v2995 = vperm.slane %v2991, %v2994
    %v2996 = vrot.slane %v2984, 4
    %v2997 = vsel %vm487, %v2996, %v2978
    %v2998 = vrot.slane %v2978, 4
    %v2999 = vsel %vm487, %v2984, %v2998
    %v3001 = vunpack.c.l.s4 1934713408
    %v3002 = vunpack.c.0.s8 %v3001
    %v3003 = vperm.slane %v2997, %v3002
    %v3005 = vunpack.c.l.s4 1934713408
    %v3006 = vunpack.c.0.s8 %v3005
    %v3007 = vperm.slane %v2999, %v3006
    %v3008 = vrot.slane %v2995, 4
    %v3009 = vsel %vm487, %v3008, %v2989
    %v3010 = vrot.slane %v2989, 4
    %v3011 = vsel %vm487, %v2995, %v3010
    %v3013 = vunpack.c.l.s4 1934713408
    %v3014 = vunpack.c.0.s8 %v3013
    %v3015 = vperm.slane %v3009, %v3014
    %v3017 = vunpack.c.l.s4 1934713408
    %v3018 = vunpack.c.0.s8 %v3017
    %v3019 = vperm.slane %v3011, %v3018
    %v3020 = vrot.slane %v3015, 4
    %v3021 = vsel %vm487, %v3020, %v3003
    %v3022 = vrot.slane %v3003, 4
    %v3023 = vsel %vm487, %v3015, %v3022
    %v3024 = vrot.slane %v3019, 4
    %v3025 = vsel %vm487, %v3024, %v3007
    %v3026 = vrot.slane %v3007, 4
    %v3027 = vsel %vm487, %v3019, %v3026
    %v3028 = vsel %vm487, %v2968, %v2949
    %v3030 = vunpack.c.l.s4 1983009808
    %v3031 = vunpack.c.0.s8 %v3030
    %v3032 = vperm.slane %v3028, %v3031
    %v3033 = vrot.slane %v2969, 4
    %v3034 = vsel %vm487, %v3033, %v2967
    %v3036 = vunpack.c.l.s4 1983009808
    %v3037 = vunpack.c.0.s8 %v3036
    %v3038 = vperm.slane %v3034, %v3037
    %v3039 = vsel %vm487, %v2972, %v2961
    %v3041 = vunpack.c.l.s4 1983009808
    %v3042 = vunpack.c.0.s8 %v3041
    %v3043 = vperm.slane %v3039, %v3042
    %v3044 = vrot.slane %v2973, 4
    %v3045 = vsel %vm487, %v3044, %v2971
    %v3047 = vunpack.c.l.s4 1983009808
    %v3048 = vunpack.c.0.s8 %v3047
    %v3049 = vperm.slane %v3045, %v3048
    %v3050 = vrot.slane %v3038, 4
    %v3051 = vsel %vm487, %v3050, %v3032
    %v3052 = vrot.slane %v3032, 4
    %v3053 = vsel %vm487, %v3038, %v3052
    %v3055 = vunpack.c.l.s4 1934713408
    %v3056 = vunpack.c.0.s8 %v3055
    %v3057 = vperm.slane %v3051, %v3056
    %v3059 = vunpack.c.l.s4 1934713408
    %v3060 = vunpack.c.0.s8 %v3059
    %v3061 = vperm.slane %v3053, %v3060
    %v3062 = vrot.slane %v3049, 4
    %v3063 = vsel %vm487, %v3062, %v3043
    %v3064 = vrot.slane %v3043, 4
    %v3065 = vsel %vm487, %v3049, %v3064
    %v3067 = vunpack.c.l.s4 1934713408
    %v3068 = vunpack.c.0.s8 %v3067
    %v3069 = vperm.slane %v3063, %v3068
    %v3071 = vunpack.c.l.s4 1934713408
    %v3072 = vunpack.c.0.s8 %v3071
    %v3073 = vperm.slane %v3065, %v3072
    %v3074 = vrot.slane %v3069, 4
    %v3075 = vsel %vm487, %v3074, %v3057
    %v3076 = vrot.slane %v3057, 4
    %v3077 = vsel %vm487, %v3069, %v3076
    %v3078 = vrot.slane %v3073, 4
    %v3079 = vsel %vm487, %v3078, %v3061
    %v3080 = vrot.slane %v3061, 4
    %v3081 = vsel %vm487, %v3073, %v3080
    %3084 = vrot.lane.b32.xlu0 %v3023, 32
    %v3085 = vpop.permute.xlu0 %3084
    %3086 = vrot.lane.b32.xlu0 %v3077, 32
    %v3087 = vpop.permute.xlu0 %3086
    %3092 = vrot.lane.b32.xlu0 %v3025, 64
    %v3093 = vpop.permute.xlu0 %3092
    %3094 = vrot.lane.b32.xlu0 %v3079, 64
    %v3095 = vpop.permute.xlu0 %3094
    %3100 = vrot.lane.b32.xlu0 %v3027, 96
    %v3101 = vpop.permute.xlu0 %3100
    %3102 = vrot.lane.b32.xlu0 %v3081, 96
    %v3103 = vpop.permute.xlu0 %3102
    %v3106 = vsel %vm1230, %v3021, %v3085
    %v3107 = vsel %vm1230, %v3075, %v3087
    %v3108 = vsel %vm1788, %v3106, %v3093
    %v3109 = vsel %vm1788, %v3107, %v3095
    %v3110 = vsel %vm1791, %v3108, %v3101
    %v3111 = vsel %vm1791, %v3109, %v3103
    %v3112 = vpack.c.bf16 %v1793, %v1792
    %v3113 = vpack.c.bf16 %v3111, %v3110
    %v3114 = vld [vmem:[#allocation7] sm:$0xf]
    %v3115 = vld [vmem:[#allocation7 + $0x4] sm:$0xf]
    %v3116 = vld [vmem:[#allocation7 + $0x8] sm:$0xf]
    %v3117 = vld [vmem:[#allocation7 + $0xc] sm:$0xf]
    %v3118 = vld [vmem:[#allocation7 + $0x10] sm:$0xf]
    %v3119 = vld [vmem:[#allocation7 + $0x14] sm:$0xf]
    %v3120 = vld [vmem:[#allocation7 + $0x18] sm:$0xf]
    %v3121 = vld [vmem:[#allocation7 + $0x1c] sm:$0xf]
    %v3122 = vld [vmem:[#allocation7 + $0x20] sm:$0xf]
    %v3123 = vld [vmem:[#allocation7 + $0x24] sm:$0xf]
    %v3124 = vld [vmem:[#allocation7 + $0x28] sm:$0xf]
    %v3125 = vld [vmem:[#allocation7 + $0x2c] sm:$0xf]
    %v3126 = vld [vmem:[#allocation7 + $0x30] sm:$0xf]
    %v3127 = vld [vmem:[#allocation7 + $0x34] sm:$0xf]
    %v3128 = vld [vmem:[#allocation7 + $0x38] sm:$0xf]
    %v3129 = vld [vmem:[#allocation7 + $0x3c] sm:$0xf]
    %v3130 = vperm.slane %v141, 0
    %v3147 = vunpack.c.l.b16 %v3114
    %v3148 = vunpack.c.l.b16 %v3115
    %v3149 = vunpack.c.l.b16 %v3116
    %v3150 = vunpack.c.l.b16 %v3117
    %v3151 = vunpack.c.l.b16 %v3118
    %v3152 = vunpack.c.l.b16 %v3119
    %v3153 = vunpack.c.l.b16 %v3120
    %v3154 = vunpack.c.l.b16 %v3121
    %v3155 = vunpack.c.l.b16 %v3122
    %v3156 = vunpack.c.l.b16 %v3123
    %v3157 = vunpack.c.l.b16 %v3124
    %v3158 = vunpack.c.l.b16 %v3125
    %v3159 = vunpack.c.l.b16 %v3126
    %v3160 = vunpack.c.l.b16 %v3127
    %v3161 = vunpack.c.l.b16 %v3128
    %v3162 = vunpack.c.l.b16 %v3129
    %v3163 = vpack.c.b16 %v3148, %v3147
    %v3164 = vpack.c.b16 %v3150, %v3149
    %v3165 = vpack.c.b16 %v3152, %v3151
    %v3166 = vpack.c.b16 %v3154, %v3153
    %v3167 = vpack.c.b16 %v3156, %v3155
    %v3168 = vpack.c.b16 %v3158, %v3157
    %v3169 = vpack.c.b16 %v3160, %v3159
    %v3170 = vpack.c.b16 %v3162, %v3161
    %3179 = vmatpush.bf16.msra.mxu0 %v3170
    %3180 = vmatpush.bf16.msra.mxu0 %v3169
    %3181 = vmatpush.bf16.msra.mxu0 %v3168
    %3182 = vmatpush.bf16.msra.mxu0 %v3167
    %3183 = vmatpush.bf16.msra.mxu0 %v3166
    %3184 = vmatpush.bf16.msra.mxu0 %v3165
    %3185 = vmatpush.bf16.msra.mxu0 %v3164
    %3186 = vmatpush.bf16.msra.mxu0 %v3163
    %3187 = vmatmul.bf16.gmra.mxu0 %v3112
    %v3188 = vpop.f32.mrf.mxu0
    %v3189 = vadd.f32 %v3130, %v3188
    %v3190 = vpop.f32.mrf.mxu0
    %v3191 = vadd.f32 %v3130, %v3190
    %3192 = vmatmul.bf16.gmra.mxu0 %v3113
    %v3193 = vpop.f32.mrf.mxu0
    %v3194 = vadd.f32 %v3130, %v3193
    %v3195 = vpop.f32.mrf.mxu0
    %v3196 = vadd.f32 %v3130, %v3195
    %3197 = vdwg.mxu0
    %v3198 = vadd.f32 %v133, %v3189
    %v3199 = vadd.f32 %v134, %v3191
    %v3200 = vadd.f32 %v135, %v3194
    %v3201 = vadd.f32 %v136, %v3196
    %3202 = vadd.xlane.f32.xlu0 %v3198
    %v3203 = vpop.xlane.xlu0 %3202
    %3204 = vadd.xlane.f32.xlu0 %v3199
    %v3205 = vpop.xlane.xlu0 %3204
    %3206 = vadd.xlane.f32.xlu0 %v3200
    %v3207 = vpop.xlane.xlu0 %3206
    %3208 = vadd.xlane.f32.xlu0 %v3201
    %v3209 = vpop.xlane.xlu0 %3208
    %v3210 = vmul.f32 %v3203, %v157
    %v3211 = vmul.f32 %v3205, %v157
    %v3212 = vmul.f32 %v3207, %v157
    %v3213 = vmul.f32 %v3209, %v157
    %v3214 = vsub.f32 %v3198, %v3210
    %v3215 = vsub.f32 %v3199, %v3211
    %v3216 = vsub.f32 %v3200, %v3212
    %v3217 = vsub.f32 %v3201, %v3213
    %v3218 = vmul.f32 %v3214, %v3214
    %v3219 = vmul.f32 %v3215, %v3215
    %v3220 = vmul.f32 %v3216, %v3216
    %v3221 = vmul.f32 %v3217, %v3217
    %3222 = vadd.xlane.f32.xlu0 %v3218
    %v3223 = vpop.xlane.xlu0 %3222
    %3224 = vadd.xlane.f32.xlu0 %v3219
    %v3225 = vpop.xlane.xlu0 %3224
    %3226 = vadd.xlane.f32.xlu0 %v3220
    %v3227 = vpop.xlane.xlu0 %3226
    %3228 = vadd.xlane.f32.xlu0 %v3221
    %v3229 = vpop.xlane.xlu0 %3228
    %v3230 = vmul.f32 %v3223, %v157
    %v3231 = vmul.f32 %v3225, %v157
    %v3232 = vmul.f32 %v3227, %v157
    %v3233 = vmul.f32 %v3229, %v157
    %v3234 = vadd.f32 %v3230, 1e-05
    %v3235 = vadd.f32 %v3231, 1e-05
    %v3236 = vadd.f32 %v3232, 1e-05
    %v3237 = vadd.f32 %v3233, 1e-05
    %v3238 = vrsqrt.pop %v3234
    %v3239 = vmul.f32 %v3238, %v3234
    %v3240 = vmul.f32 %v3239, %v3238
    %v3241 = vmul.f32 0.5, %v3240
    %v3242 = vsub.f32 1.5, %v3241
    %v3243 = vmul.f32 %v3238, %v3242
    %vm3244 = vweird.f32 %v3234
    %vm3245 = vweird.f32 %v3238
    %vm3246 = vmor %vm3244, %vm3245
    %v3247 = vsel %vm3246, %v3238, %v3243
    %v3248 = vrsqrt.pop %v3235
    %v3249 = vmul.f32 %v3248, %v3235
    %v3250 = vmul.f32 %v3249, %v3248
    %v3251 = vmul.f32 0.5, %v3250
    %v3252 = vsub.f32 1.5, %v3251
    %v3253 = vmul.f32 %v3248, %v3252
    %vm3254 = vweird.f32 %v3235
    %vm3255 = vweird.f32 %v3248
    %vm3256 = vmor %vm3254, %vm3255
    %v3257 = vsel %vm3256, %v3248, %v3253
    %v3258 = vrsqrt.pop %v3236
    %v3259 = vmul.f32 %v3258, %v3236
    %v3260 = vmul.f32 %v3259, %v3258
    %v3261 = vmul.f32 0.5, %v3260
    %v3262 = vsub.f32 1.5, %v3261
    %v3263 = vmul.f32 %v3258, %v3262
    %vm3264 = vweird.f32 %v3236
    %vm3265 = vweird.f32 %v3258
    %vm3266 = vmor %vm3264, %vm3265
    %v3267 = vsel %vm3266, %v3258, %v3263
    %v3268 = vrsqrt.pop %v3237
    %v3269 = vmul.f32 %v3268, %v3237
    %v3270 = vmul.f32 %v3269, %v3268
    %v3271 = vmul.f32 0.5, %v3270
    %v3272 = vsub.f32 1.5, %v3271
    %v3273 = vmul.f32 %v3268, %v3272
    %vm3274 = vweird.f32 %v3237
    %vm3275 = vweird.f32 %v3268
    %vm3276 = vmor %vm3274, %vm3275
    %v3277 = vsel %vm3276, %v3268, %v3273
    %v3278 = vmul.f32 %v3214, %v3247
    %v3279 = vmul.f32 %v3215, %v3257
    %v3280 = vmul.f32 %v3216, %v3267
    %v3281 = vmul.f32 %v3217, %v3277
    %v3282 = vperm.slane %v139, 0
    %v3283 = vmul.f32 %v3278, %v3282
    %v3284 = vmul.f32 %v3279, %v3282
    %v3285 = vmul.f32 %v3280, %v3282
    %v3286 = vmul.f32 %v3281, %v3282
    %v3287 = vperm.slane %v140, 0
    %v3288 = vadd.f32 %v3283, %v3287
    %v3289 = vadd.f32 %v3284, %v3287
    %v3290 = vadd.f32 %v3285, %v3287
    %v3291 = vadd.f32 %v3286, %v3287
    %v3292 = vpack.c.bf16 %v3289, %v3288
    %v3293 = vpack.c.bf16 %v3291, %v3290
    %v3294 = vld [vmem:[#allocation8] sm:$0xff]
    %v3295 = vld [vmem:[#allocation8 + $0x8] sm:$0xff]
    %v3296 = vld [vmem:[#allocation8 + $0x10] sm:$0xff]
    %v3297 = vld [vmem:[#allocation8 + $0x18] sm:$0xff]
    %v3298 = vld [vmem:[#allocation8 + $0x20] sm:$0xff]
    %v3299 = vld [vmem:[#allocation8 + $0x28] sm:$0xff]
    %v3300 = vld [vmem:[#allocation8 + $0x30] sm:$0xff]
    %v3301 = vld [vmem:[#allocation8 + $0x38] sm:$0xff]
    %v3302 = vld [vmem:[#allocation8 + $0x40] sm:$0xff]
    %v3303 = vld [vmem:[#allocation8 + $0x48] sm:$0xff]
    %v3304 = vld [vmem:[#allocation8 + $0x50] sm:$0xff]
    %v3305 = vld [vmem:[#allocation8 + $0x58] sm:$0xff]
    %v3306 = vld [vmem:[#allocation8 + $0x60] sm:$0xff]
    %v3307 = vld [vmem:[#allocation8 + $0x68] sm:$0xff]
    %v3308 = vld [vmem:[#allocation8 + $0x70] sm:$0xff]
    %v3309 = vld [vmem:[#allocation8 + $0x78] sm:$0xff]
    %v3310 = vld [vmem:[#allocation8 + $0x80] sm:$0xff]
    %v3311 = vld [vmem:[#allocation8 + $0x88] sm:$0xff]
    %v3312 = vld [vmem:[#allocation8 + $0x90] sm:$0xff]
    %v3313 = vld [vmem:[#allocation8 + $0x98] sm:$0xff]
    %v3314 = vld [vmem:[#allocation8 + $0xa0] sm:$0xff]
    %v3315 = vld [vmem:[#allocation8 + $0xa8] sm:$0xff]
    %v3316 = vld [vmem:[#allocation8 + $0xb0] sm:$0xff]
    %v3317 = vld [vmem:[#allocation8 + $0xb8] sm:$0xff]
    %v3318 = vld [vmem:[#allocation8 + $0xc0] sm:$0xff]
    %v3319 = vld [vmem:[#allocation8 + $0xc8] sm:$0xff]
    %v3320 = vld [vmem:[#allocation8 + $0xd0] sm:$0xff]
    %v3321 = vld [vmem:[#allocation8 + $0xd8] sm:$0xff]
    %v3322 = vld [vmem:[#allocation8 + $0xe0] sm:$0xff]
    %v3323 = vld [vmem:[#allocation8 + $0xe8] sm:$0xff]
    %v3324 = vld [vmem:[#allocation8 + $0xf0] sm:$0xff]
    %v3325 = vld [vmem:[#allocation8 + $0xf8] sm:$0xff]
    %v3326 = vld [vmem:[#allocation13] sm:$0xf]
    %v3328 = vperm.slane %v3326, 0
    %v3329 = vperm.slane %v3326, 1
    %v3330 = vperm.slane %v3326, 2
    %v3331 = vperm.slane %v3326, 3
    %v3368 = vunpack.c.l.b16 %v3294
    %v3369 = vunpack.c.h.b16 %v3294
    %v3370 = vunpack.c.l.b16 %v3295
    %v3371 = vunpack.c.h.b16 %v3295
    %v3372 = vunpack.c.l.b16 %v3296
    %v3373 = vunpack.c.h.b16 %v3296
    %v3374 = vunpack.c.l.b16 %v3297
    %v3375 = vunpack.c.h.b16 %v3297
    %v3376 = vunpack.c.l.b16 %v3298
    %v3377 = vunpack.c.h.b16 %v3298
    %v3378 = vunpack.c.l.b16 %v3299
    %v3379 = vunpack.c.h.b16 %v3299
    %v3380 = vunpack.c.l.b16 %v3300
    %v3381 = vunpack.c.h.b16 %v3300
    %v3382 = vunpack.c.l.b16 %v3301
    %v3383 = vunpack.c.h.b16 %v3301
    %v3384 = vunpack.c.l.b16 %v3302
    %v3385 = vunpack.c.h.b16 %v3302
    %v3386 = vunpack.c.l.b16 %v3303
    %v3387 = vunpack.c.h.b16 %v3303
    %v3388 = vunpack.c.l.b16 %v3304
    %v3389 = vunpack.c.h.b16 %v3304
    %v3390 = vunpack.c.l.b16 %v3305
    %v3391 = vunpack.c.h.b16 %v3305
    %v3392 = vunpack.c.l.b16 %v3306
    %v3393 = vunpack.c.h.b16 %v3306
    %v3394 = vunpack.c.l.b16 %v3307
    %v3395 = vunpack.c.h.b16 %v3307
    %v3396 = vunpack.c.l.b16 %v3308
    %v3397 = vunpack.c.h.b16 %v3308
    %v3398 = vunpack.c.l.b16 %v3309
    %v3399 = vunpack.c.h.b16 %v3309
    %v3400 = vunpack.c.l.b16 %v3310
    %v3401 = vunpack.c.h.b16 %v3310
    %v3402 = vunpack.c.l.b16 %v3311
    %v3403 = vunpack.c.h.b16 %v3311
    %v3404 = vunpack.c.l.b16 %v3312
    %v3405 = vunpack.c.h.b16 %v3312
    %v3406 = vunpack.c.l.b16 %v3313
    %v3407 = vunpack.c.h.b16 %v3313
    %v3408 = vunpack.c.l.b16 %v3314
    %v3409 = vunpack.c.h.b16 %v3314
    %v3410 = vunpack.c.l.b16 %v3315
    %v3411 = vunpack.c.h.b16 %v3315
    %v3412 = vunpack.c.l.b16 %v3316
    %v3413 = vunpack.c.h.b16 %v3316
    %v3414 = vunpack.c.l.b16 %v3317
    %v3415 = vunpack.c.h.b16 %v3317
    %v3416 = vunpack.c.l.b16 %v3318
    %v3417 = vunpack.c.h.b16 %v3318
    %v3418 = vunpack.c.l.b16 %v3319
    %v3419 = vunpack.c.h.b16 %v3319
    %v3420 = vunpack.c.l.b16 %v3320
    %v3421 = vunpack.c.h.b16 %v3320
    %v3422 = vunpack.c.l.b16 %v3321
    %v3423 = vunpack.c.h.b16 %v3321
    %v3424 = vunpack.c.l.b16 %v3322
    %v3425 = vunpack.c.h.b16 %v3322
    %v3426 = vunpack.c.l.b16 %v3323
    %v3427 = vunpack.c.h.b16 %v3323
    %v3428 = vunpack.c.l.b16 %v3324
    %v3429 = vunpack.c.h.b16 %v3324
    %v3430 = vunpack.c.l.b16 %v3325
    %v3431 = vunpack.c.h.b16 %v3325
    %v3432 = vpack.c.b16 %v3372, %v3368
    %v3433 = vpack.c.b16 %v3373, %v3369
    %v3434 = vpack.c.b16 %v3374, %v3370
    %v3435 = vpack.c.b16 %v3375, %v3371
    %v3436 = vpack.c.b16 %v3380, %v3376
    %v3437 = vpack.c.b16 %v3381, %v3377
    %v3438 = vpack.c.b16 %v3382, %v3378
    %v3439 = vpack.c.b16 %v3383, %v3379
    %v3440 = vpack.c.b16 %v3388, %v3384
    %v3441 = vpack.c.b16 %v3389, %v3385
    %v3442 = vpack.c.b16 %v3390, %v3386
    %v3443 = vpack.c.b16 %v3391, %v3387
    %v3444 = vpack.c.b16 %v3396, %v3392
    %v3445 = vpack.c.b16 %v3397, %v3393
    %v3446 = vpack.c.b16 %v3398, %v3394
    %v3447 = vpack.c.b16 %v3399, %v3395
    %v3448 = vpack.c.b16 %v3404, %v3400
    %v3449 = vpack.c.b16 %v3405, %v3401
    %v3450 = vpack.c.b16 %v3406, %v3402
    %v3451 = vpack.c.b16 %v3407, %v3403
    %v3452 = vpack.c.b16 %v3412, %v3408
    %v3453 = vpack.c.b16 %v3413, %v3409
    %v3454 = vpack.c.b16 %v3414, %v3410
    %v3455 = vpack.c.b16 %v3415, %v3411
    %v3456 = vpack.c.b16 %v3420, %v3416
    %v3457 = vpack.c.b16 %v3421, %v3417
    %v3458 = vpack.c.b16 %v3422, %v3418
    %v3459 = vpack.c.b16 %v3423, %v3419
    %v3460 = vpack.c.b16 %v3428, %v3424
    %v3461 = vpack.c.b16 %v3429, %v3425
    %v3462 = vpack.c.b16 %v3430, %v3426
    %v3463 = vpack.c.b16 %v3431, %v3427
    %3496 = vmatpush.bf16.msra.mxu0 %v3460
    %3497 = vmatpush.bf16.msra.mxu0 %v3456
    %3498 = vmatpush.bf16.msra.mxu0 %v3452
    %3499 = vmatpush.bf16.msra.mxu0 %v3448
    %3500 = vmatpush.bf16.msra.mxu0 %v3444
    %3501 = vmatpush.bf16.msra.mxu0 %v3440
    %3502 = vmatpush.bf16.msra.mxu0 %v3436
    %3503 = vmatpush.bf16.msra.mxu0 %v3432
    %3504 = vmatmul.bf16.gmra.mxu0 %v3292
    %v3505 = vpop.f32.mrf.mxu0
    %v3506 = vadd.f32 %v3328, %v3505
    %v3507 = vpop.f32.mrf.mxu0
    %v3508 = vadd.f32 %v3328, %v3507
    %3509 = vmatmul.bf16.gmra.mxu0 %v3293
    %v3510 = vpop.f32.mrf.mxu0
    %v3511 = vadd.f32 %v3328, %v3510
    %v3512 = vpop.f32.mrf.mxu0
    %v3513 = vadd.f32 %v3328, %v3512
    %3514 = vdwg.mxu0
    %3515 = vmatpush.bf16.msra.mxu0 %v3461
    %3516 = vmatpush.bf16.msra.mxu0 %v3457
    %3517 = vmatpush.bf16.msra.mxu0 %v3453
    %3518 = vmatpush.bf16.msra.mxu0 %v3449
    %3519 = vmatpush.bf16.msra.mxu0 %v3445
    %3520 = vmatpush.bf16.msra.mxu0 %v3441
    %3521 = vmatpush.bf16.msra.mxu0 %v3437
    %3522 = vmatpush.bf16.msra.mxu0 %v3433
    %3523 = vmatmul.bf16.gmra.mxu0 %v3292
    %v3524 = vpop.f32.mrf.mxu0
    %v3525 = vadd.f32 %v3329, %v3524
    %v3526 = vpop.f32.mrf.mxu0
    %v3527 = vadd.f32 %v3329, %v3526
    %3528 = vmatmul.bf16.gmra.mxu0 %v3293
    %v3529 = vpop.f32.mrf.mxu0
    %v3530 = vadd.f32 %v3329, %v3529
    %v3531 = vpop.f32.mrf.mxu0
    %v3532 = vadd.f32 %v3329, %v3531
    %3533 = vdwg.mxu0
    %3534 = vmatpush.bf16.msra.mxu0 %v3462
    %3535 = vmatpush.bf16.msra.mxu0 %v3458
    %3536 = vmatpush.bf16.msra.mxu0 %v3454
    %3537 = vmatpush.bf16.msra.mxu0 %v3450
    %3538 = vmatpush.bf16.msra.mxu0 %v3446
    %3539 = vmatpush.bf16.msra.mxu0 %v3442
    %3540 = vmatpush.bf16.msra.mxu0 %v3438
    %3541 = vmatpush.bf16.msra.mxu0 %v3434
    %3542 = vmatmul.bf16.gmra.mxu0 %v3292
    %v3543 = vpop.f32.mrf.mxu0
    %v3544 = vadd.f32 %v3330, %v3543
    %v3545 = vpop.f32.mrf.mxu0
    %v3546 = vadd.f32 %v3330, %v3545
    %3547 = vmatmul.bf16.gmra.mxu0 %v3293
    %v3548 = vpop.f32.mrf.mxu0
    %v3549 = vadd.f32 %v3330, %v3548
    %v3550 = vpop.f32.mrf.mxu0
    %v3551 = vadd.f32 %v3330, %v3550
    %3552 = vdwg.mxu0
    %3553 = vmatpush.bf16.msra.mxu0 %v3463
    %3554 = vmatpush.bf16.msra.mxu0 %v3459
    %3555 = vmatpush.bf16.msra.mxu0 %v3455
    %3556 = vmatpush.bf16.msra.mxu0 %v3451
    %3557 = vmatpush.bf16.msra.mxu0 %v3447
    %3558 = vmatpush.bf16.msra.mxu0 %v3443
    %3559 = vmatpush.bf16.msra.mxu0 %v3439
    %3560 = vmatpush.bf16.msra.mxu0 %v3435
    %3561 = vmatmul.bf16.gmra.mxu0 %v3292
    %v3562 = vpop.f32.mrf.mxu0
    %v3563 = vadd.f32 %v3331, %v3562
    %v3564 = vpop.f32.mrf.mxu0
    %v3565 = vadd.f32 %v3331, %v3564
    %3566 = vmatmul.bf16.gmra.mxu0 %v3293
    %v3567 = vpop.f32.mrf.mxu0
    %v3568 = vadd.f32 %v3331, %v3567
    %v3569 = vpop.f32.mrf.mxu0
    %v3570 = vadd.f32 %v3331, %v3569
    %3571 = vdwg.mxu0
    %v3572 = vmax.f32 %v3506, 0.0
    %v3573 = vmax.f32 %v3525, 0.0
    %v3574 = vmax.f32 %v3544, 0.0
    %v3575 = vmax.f32 %v3563, 0.0
    %v3576 = vmax.f32 %v3508, 0.0
    %v3577 = vmax.f32 %v3527, 0.0
    %v3578 = vmax.f32 %v3546, 0.0
    %v3579 = vmax.f32 %v3565, 0.0
    %v3580 = vmax.f32 %v3511, 0.0
    %v3581 = vmax.f32 %v3530, 0.0
    %v3582 = vmax.f32 %v3549, 0.0
    %v3583 = vmax.f32 %v3568, 0.0
    %v3584 = vmax.f32 %v3513, 0.0
    %v3585 = vmax.f32 %v3532, 0.0
    %v3586 = vmax.f32 %v3551, 0.0
    %v3587 = vmax.f32 %v3570, 0.0
    %v3588 = vpack.c.bf16 %v3576, %v3572
    %v3589 = vpack.c.bf16 %v3577, %v3573
    %v3590 = vpack.c.bf16 %v3578, %v3574
    %v3591 = vpack.c.bf16 %v3579, %v3575
    %v3592 = vpack.c.bf16 %v3584, %v3580
    %v3593 = vpack.c.bf16 %v3585, %v3581
    %v3594 = vpack.c.bf16 %v3586, %v3582
    %v3595 = vpack.c.bf16 %v3587, %v3583
    %v3596 = vld [vmem:[#allocation10] sm:$0xf]
    %v3597 = vld [vmem:[#allocation10 + $0x4] sm:$0xf]
    %v3598 = vld [vmem:[#allocation10 + $0x8] sm:$0xf]
    %v3599 = vld [vmem:[#allocation10 + $0xc] sm:$0xf]
    %v3600 = vld [vmem:[#allocation10 + $0x10] sm:$0xf]
    %v3601 = vld [vmem:[#allocation10 + $0x14] sm:$0xf]
    %v3602 = vld [vmem:[#allocation10 + $0x18] sm:$0xf]
    %v3603 = vld [vmem:[#allocation10 + $0x1c] sm:$0xf]
    %v3604 = vld [vmem:[#allocation10 + $0x20] sm:$0xf]
    %v3605 = vld [vmem:[#allocation10 + $0x24] sm:$0xf]
    %v3606 = vld [vmem:[#allocation10 + $0x28] sm:$0xf]
    %v3607 = vld [vmem:[#allocation10 + $0x2c] sm:$0xf]
    %v3608 = vld [vmem:[#allocation10 + $0x30] sm:$0xf]
    %v3609 = vld [vmem:[#allocation10 + $0x34] sm:$0xf]
    %v3610 = vld [vmem:[#allocation10 + $0x38] sm:$0xf]
    %v3611 = vld [vmem:[#allocation10 + $0x3c] sm:$0xf]
    %v3612 = vld [vmem:[#allocation10 + $0x40] sm:$0xf]
    %v3613 = vld [vmem:[#allocation10 + $0x44] sm:$0xf]
    %v3614 = vld [vmem:[#allocation10 + $0x48] sm:$0xf]
    %v3615 = vld [vmem:[#allocation10 + $0x4c] sm:$0xf]
    %v3616 = vld [vmem:[#allocation10 + $0x50] sm:$0xf]
    %v3617 = vld [vmem:[#allocation10 + $0x54] sm:$0xf]
    %v3618 = vld [vmem:[#allocation10 + $0x58] sm:$0xf]
    %v3619 = vld [vmem:[#allocation10 + $0x5c] sm:$0xf]
    %v3620 = vld [vmem:[#allocation10 + $0x60] sm:$0xf]
    %v3621 = vld [vmem:[#allocation10 + $0x64] sm:$0xf]
    %v3622 = vld [vmem:[#allocation10 + $0x68] sm:$0xf]
    %v3623 = vld [vmem:[#allocation10 + $0x6c] sm:$0xf]
    %v3624 = vld [vmem:[#allocation10 + $0x70] sm:$0xf]
    %v3625 = vld [vmem:[#allocation10 + $0x74] sm:$0xf]
    %v3626 = vld [vmem:[#allocation10 + $0x78] sm:$0xf]
    %v3627 = vld [vmem:[#allocation10 + $0x7c] sm:$0xf]
    %v3628 = vld [vmem:[#allocation10 + $0x80] sm:$0xf]
    %v3629 = vld [vmem:[#allocation10 + $0x84] sm:$0xf]
    %v3630 = vld [vmem:[#allocation10 + $0x88] sm:$0xf]
    %v3631 = vld [vmem:[#allocation10 + $0x8c] sm:$0xf]
    %v3632 = vld [vmem:[#allocation10 + $0x90] sm:$0xf]
    %v3633 = vld [vmem:[#allocation10 + $0x94] sm:$0xf]
    %v3634 = vld [vmem:[#allocation10 + $0x98] sm:$0xf]
    %v3635 = vld [vmem:[#allocation10 + $0x9c] sm:$0xf]
    %v3636 = vld [vmem:[#allocation10 + $0xa0] sm:$0xf]
    %v3637 = vld [vmem:[#allocation10 + $0xa4] sm:$0xf]
    %v3638 = vld [vmem:[#allocation10 + $0xa8] sm:$0xf]
    %v3639 = vld [vmem:[#allocation10 + $0xac] sm:$0xf]
    %v3640 = vld [vmem:[#allocation10 + $0xb0] sm:$0xf]
    %v3641 = vld [vmem:[#allocation10 + $0xb4] sm:$0xf]
    %v3642 = vld [vmem:[#allocation10 + $0xb8] sm:$0xf]
    %v3643 = vld [vmem:[#allocation10 + $0xbc] sm:$0xf]
    %v3644 = vld [vmem:[#allocation10 + $0xc0] sm:$0xf]
    %v3645 = vld [vmem:[#allocation10 + $0xc4] sm:$0xf]
    %v3646 = vld [vmem:[#allocation10 + $0xc8] sm:$0xf]
    %v3647 = vld [vmem:[#allocation10 + $0xcc] sm:$0xf]
    %v3648 = vld [vmem:[#allocation10 + $0xd0] sm:$0xf]
    %v3649 = vld [vmem:[#allocation10 + $0xd4] sm:$0xf]
    %v3650 = vld [vmem:[#allocation10 + $0xd8] sm:$0xf]
    %v3651 = vld [vmem:[#allocation10 + $0xdc] sm:$0xf]
    %v3652 = vld [vmem:[#allocation10 + $0xe0] sm:$0xf]
    %v3653 = vld [vmem:[#allocation10 + $0xe4] sm:$0xf]
    %v3654 = vld [vmem:[#allocation10 + $0xe8] sm:$0xf]
    %v3655 = vld [vmem:[#allocation10 + $0xec] sm:$0xf]
    %v3656 = vld [vmem:[#allocation10 + $0xf0] sm:$0xf]
    %v3657 = vld [vmem:[#allocation10 + $0xf4] sm:$0xf]
    %v3658 = vld [vmem:[#allocation10 + $0xf8] sm:$0xf]
    %v3659 = vld [vmem:[#allocation10 + $0xfc] sm:$0xf]
    %v3660 = vperm.slane %v142, 0
    %v3725 = vunpack.c.l.b16 %v3596
    %v3726 = vunpack.c.l.b16 %v3597
    %v3727 = vunpack.c.l.b16 %v3598
    %v3728 = vunpack.c.l.b16 %v3599
    %v3729 = vunpack.c.l.b16 %v3600
    %v3730 = vunpack.c.l.b16 %v3601
    %v3731 = vunpack.c.l.b16 %v3602
    %v3732 = vunpack.c.l.b16 %v3603
    %v3733 = vunpack.c.l.b16 %v3604
    %v3734 = vunpack.c.l.b16 %v3605
    %v3735 = vunpack.c.l.b16 %v3606
    %v3736 = vunpack.c.l.b16 %v3607
    %v3737 = vunpack.c.l.b16 %v3608
    %v3738 = vunpack.c.l.b16 %v3609
    %v3739 = vunpack.c.l.b16 %v3610
    %v3740 = vunpack.c.l.b16 %v3611
    %v3741 = vunpack.c.l.b16 %v3612
    %v3742 = vunpack.c.l.b16 %v3613
    %v3743 = vunpack.c.l.b16 %v3614
    %v3744 = vunpack.c.l.b16 %v3615
    %v3745 = vunpack.c.l.b16 %v3616
    %v3746 = vunpack.c.l.b16 %v3617
    %v3747 = vunpack.c.l.b16 %v3618
    %v3748 = vunpack.c.l.b16 %v3619
    %v3749 = vunpack.c.l.b16 %v3620
    %v3750 = vunpack.c.l.b16 %v3621
    %v3751 = vunpack.c.l.b16 %v3622
    %v3752 = vunpack.c.l.b16 %v3623
    %v3753 = vunpack.c.l.b16 %v3624
    %v3754 = vunpack.c.l.b16 %v3625
    %v3755 = vunpack.c.l.b16 %v3626
    %v3756 = vunpack.c.l.b16 %v3627
    %v3757 = vunpack.c.l.b16 %v3628
    %v3758 = vunpack.c.l.b16 %v3629
    %v3759 = vunpack.c.l.b16 %v3630
    %v3760 = vunpack.c.l.b16 %v3631
    %v3761 = vunpack.c.l.b16 %v3632
    %v3762 = vunpack.c.l.b16 %v3633
    %v3763 = vunpack.c.l.b16 %v3634
    %v3764 = vunpack.c.l.b16 %v3635
    %v3765 = vunpack.c.l.b16 %v3636
    %v3766 = vunpack.c.l.b16 %v3637
    %v3767 = vunpack.c.l.b16 %v3638
    %v3768 = vunpack.c.l.b16 %v3639
    %v3769 = vunpack.c.l.b16 %v3640
    %v3770 = vunpack.c.l.b16 %v3641
    %v3771 = vunpack.c.l.b16 %v3642
    %v3772 = vunpack.c.l.b16 %v3643
    %v3773 = vunpack.c.l.b16 %v3644
    %v3774 = vunpack.c.l.b16 %v3645
    %v3775 = vunpack.c.l.b16 %v3646
    %v3776 = vunpack.c.l.b16 %v3647
    %v3777 = vunpack.c.l.b16 %v3648
    %v3778 = vunpack.c.l.b16 %v3649
    %v3779 = vunpack.c.l.b16 %v3650
    %v3780 = vunpack.c.l.b16 %v3651
    %v3781 = vunpack.c.l.b16 %v3652
    %v3782 = vunpack.c.l.b16 %v3653
    %v3783 = vunpack.c.l.b16 %v3654
    %v3784 = vunpack.c.l.b16 %v3655
    %v3785 = vunpack.c.l.b16 %v3656
    %v3786 = vunpack.c.l.b16 %v3657
    %v3787 = vunpack.c.l.b16 %v3658
    %v3788 = vunpack.c.l.b16 %v3659
    %v3789 = vpack.c.b16 %v3726, %v3725
    %v3790 = vpack.c.b16 %v3728, %v3727
    %v3791 = vpack.c.b16 %v3730, %v3729
    %v3792 = vpack.c.b16 %v3732, %v3731
    %v3793 = vpack.c.b16 %v3734, %v3733
    %v3794 = vpack.c.b16 %v3736, %v3735
    %v3795 = vpack.c.b16 %v3738, %v3737
    %v3796 = vpack.c.b16 %v3740, %v3739
    %v3797 = vpack.c.b16 %v3742, %v3741
    %v3798 = vpack.c.b16 %v3744, %v3743
    %v3799 = vpack.c.b16 %v3746, %v3745
    %v3800 = vpack.c.b16 %v3748, %v3747
    %v3801 = vpack.c.b16 %v3750, %v3749
    %v3802 = vpack.c.b16 %v3752, %v3751
    %v3803 = vpack.c.b16 %v3754, %v3753
    %v3804 = vpack.c.b16 %v3756, %v3755
    %v3805 = vpack.c.b16 %v3758, %v3757
    %v3806 = vpack.c.b16 %v3760, %v3759
    %v3807 = vpack.c.b16 %v3762, %v3761
    %v3808 = vpack.c.b16 %v3764, %v3763
    %v3809 = vpack.c.b16 %v3766, %v3765
    %v3810 = vpack.c.b16 %v3768, %v3767
    %v3811 = vpack.c.b16 %v3770, %v3769
    %v3812 = vpack.c.b16 %v3772, %v3771
    %v3813 = vpack.c.b16 %v3774, %v3773
    %v3814 = vpack.c.b16 %v3776, %v3775
    %v3815 = vpack.c.b16 %v3778, %v3777
    %v3816 = vpack.c.b16 %v3780, %v3779
    %v3817 = vpack.c.b16 %v3782, %v3781
    %v3818 = vpack.c.b16 %v3784, %v3783
    %v3819 = vpack.c.b16 %v3786, %v3785
    %v3820 = vpack.c.b16 %v3788, %v3787
    %3853 = vmatpush.bf16.msra.mxu0 %v3796
    %3854 = vmatpush.bf16.msra.mxu0 %v3795
    %3855 = vmatpush.bf16.msra.mxu0 %v3794
    %3856 = vmatpush.bf16.msra.mxu0 %v3793
    %3857 = vmatpush.bf16.msra.mxu0 %v3792
    %3858 = vmatpush.bf16.msra.mxu0 %v3791
    %3859 = vmatpush.bf16.msra.mxu0 %v3790
    %3860 = vmatpush.bf16.msra.mxu0 %v3789
    %3861 = vmatmul.bf16.gmra.mxu0 %v3588
    %v3862 = vpop.f32.mrf.mxu0
    %v3863 = vadd.f32 %v3660, %v3862
    %v3864 = vpop.f32.mrf.mxu0
    %v3865 = vadd.f32 %v3660, %v3864
    %3866 = vmatmul.bf16.gmra.mxu0 %v3592
    %v3867 = vpop.f32.mrf.mxu0
    %v3868 = vadd.f32 %v3660, %v3867
    %v3869 = vpop.f32.mrf.mxu0
    %v3870 = vadd.f32 %v3660, %v3869
    %3871 = vdwg.mxu0
    %3872 = vmatpush.bf16.msra.mxu0 %v3804
    %3873 = vmatpush.bf16.msra.mxu0 %v3803
    %3874 = vmatpush.bf16.msra.mxu0 %v3802
    %3875 = vmatpush.bf16.msra.mxu0 %v3801
    %3876 = vmatpush.bf16.msra.mxu0 %v3800
    %3877 = vmatpush.bf16.msra.mxu0 %v3799
    %3878 = vmatpush.bf16.msra.mxu0 %v3798
    %3879 = vmatpush.bf16.msra.mxu0 %v3797
    %3880 = vmatmul.bf16.gmra.mxu0 %v3589
    %v3881 = vpop.f32.mrf.mxu0
    %v3882 = vadd.f32 %v3863, %v3881
    %v3883 = vpop.f32.mrf.mxu0
    %v3884 = vadd.f32 %v3865, %v3883
    %3885 = vmatmul.bf16.gmra.mxu0 %v3593
    %v3886 = vpop.f32.mrf.mxu0
    %v3887 = vadd.f32 %v3868, %v3886
    %v3888 = vpop.f32.mrf.mxu0
    %v3889 = vadd.f32 %v3870, %v3888
    %3890 = vdwg.mxu0
    %3891 = vmatpush.bf16.msra.mxu0 %v3812
    %3892 = vmatpush.bf16.msra.mxu0 %v3811
    %3893 = vmatpush.bf16.msra.mxu0 %v3810
    %3894 = vmatpush.bf16.msra.mxu0 %v3809
    %3895 = vmatpush.bf16.msra.mxu0 %v3808
    %3896 = vmatpush.bf16.msra.mxu0 %v3807
    %3897 = vmatpush.bf16.msra.mxu0 %v3806
    %3898 = vmatpush.bf16.msra.mxu0 %v3805
    %3899 = vmatmul.bf16.gmra.mxu0 %v3590
    %v3900 = vpop.f32.mrf.mxu0
    %v3901 = vadd.f32 %v3882, %v3900
    %v3902 = vpop.f32.mrf.mxu0
    %v3903 = vadd.f32 %v3884, %v3902
    %3904 = vmatmul.bf16.gmra.mxu0 %v3594
    %v3905 = vpop.f32.mrf.mxu0
    %v3906 = vadd.f32 %v3887, %v3905
    %v3907 = vpop.f32.mrf.mxu0
    %v3908 = vadd.f32 %v3889, %v3907
    %3909 = vdwg.mxu0
    %3910 = vmatpush.bf16.msra.mxu0 %v3820
    %3911 = vmatpush.bf16.msra.mxu0 %v3819
    %3912 = vmatpush.bf16.msra.mxu0 %v3818
    %3913 = vmatpush.bf16.msra.mxu0 %v3817
    %3914 = vmatpush.bf16.msra.mxu0 %v3816
    %3915 = vmatpush.bf16.msra.mxu0 %v3815
    %3916 = vmatpush.bf16.msra.mxu0 %v3814
    %3917 = vmatpush.bf16.msra.mxu0 %v3813
    %3918 = vmatmul.bf16.gmra.mxu0 %v3591
    %v3919 = vpop.f32.mrf.mxu0
    %v3920 = vadd.f32 %v3901, %v3919
    %v3921 = vpop.f32.mrf.mxu0
    %v3922 = vadd.f32 %v3903, %v3921
    %3923 = vmatmul.bf16.gmra.mxu0 %v3595
    %v3924 = vpop.f32.mrf.mxu0
    %v3925 = vadd.f32 %v3906, %v3924
    %v3926 = vpop.f32.mrf.mxu0
    %v3927 = vadd.f32 %v3908, %v3926
    %3928 = vdwg.mxu0
    %v3929 = vadd.f32 %v3198, %v3920
    %v3930 = vadd.f32 %v3199, %v3922
    %v3931 = vadd.f32 %v3200, %v3925
    %v3932 = vadd.f32 %v3201, %v3927
    %3933 = vst [vmem:[#allocation14] sm:$0xff] %v3929
    %3934 = vst [vmem:[#allocation14 + $0x8] sm:$0xff] %v3930
    %3935 = vst [vmem:[#allocation14 + $0x10] sm:$0xff] %v3931
    %3936 = vst [vmem:[#allocation14 + $0x18] sm:$0xff] %v3932
    // Predicated region
    $region58: #{block_forward.1} parent=1 // pred_check
      _
    $region59: #{block_forward.1} parent=1 // pred_check_branch
      %3938 = sbr.rel (0) target = $region61
    $region60: #{block_forward.1} parent=1 // pred_region
      %3940 = vsyncadd [#allocation4], 0
      %s3941 = sshll.u32 [#allocation14], 4
      %s3942 = int_to_ptr.vmem [resolvable:$true] %s3941
      %s3943 = sshll.u32 %s7, 4
      %s3944 = int_to_ptr.hbm [resolvable:$true] %s3943
      %3949 = dma.vmem_to_hbm [thread:$0]  %s3942, 512, %s3944, [#allocation4], 128, 128, 8
    $region61: #{block_forward.1} parent=1 // pred_fallthru
      _
    // Predicated region
    $region62: #{block_forward.1} parent=1 // pred_check
      _
    $region63: #{block_forward.1} parent=1 // pred_check_branch
      %3951 = sbr.rel (0) target = $region65
    $region64: #{block_forward.1} parent=1 // pred_region
      %3953 = dma.done [#allocation4], 512
    $region65: #{block_forward.1} parent=1 // pred_fallthru
      _
    %3954 = vsyncpa [#allocation3], 1
    %3955 = vsyncpa [#allocation6], 1
    %3956 = vsyncpa [#allocation9], 1
    %3957 = vsyncpa [#allocation12], 1
    %3958 = vsyncpa [#allocation4], 1

</llo_original>
